<compile_context>
chip_gen: v7x
topology: tpu7x:2x2x1
jax: 0.10.0
libtpu: 0.0.40
codegen_flags: <defaults>
</compile_context>

<pallas_src>
import jax
import jax.numpy as jnp
from jax.experimental import pallas as pl
from jax.experimental.pallas import tpu as pltpu

# ---- small GPT-2 config ------------------------------------------------------
VOCAB = 512
SEQ = 6
TPAD = 8                      # per-example sequence padded to a full sublane tile
D = 64
HEADS = 4
HEAD_DIM = D // HEADS
MLP = 4 * D
LAYERS = 2
EPS = 1e-5
NEG = -1e9
SCALE = 1.0 / (HEAD_DIM ** 0.5)

PER_LAYER_KEYS = ("wqkv", "bqkv", "wo", "vecs", "wfc", "bfc", "wmp")
# rows of the packed per-layer [6, D] "vecs" array
LN1_G, LN1_B, LN2_G, LN2_B, ATTN_B, MLP_B = range(6)


# ---- math shared by the Pallas kernel and the pure-JAX reference --------------
def _layernorm(x, g, b):
    mu = jnp.mean(x, axis=-1, keepdims=True)
    var = jnp.mean((x - mu) ** 2, axis=-1, keepdims=True)
    return (x - mu) * jax.lax.rsqrt(var + EPS) * g + b


def _gelu_new(x):  # GPT-2 "gelu_new" (tanh approximation), kept in f32
    return 0.5 * x * (1.0 + jnp.tanh(0.7978845608028654 * (x + 0.044715 * x * x * x)))


def _block_math(x, add_mask, lw, approx_recip):
    """One transformer block on the folded [B*TPAD, D] f32 activation slab."""
    vecs = lw["vecs"]                                   # [6, D] packed LN params + biases
    # --- attention ---
    xn = _layernorm(x, vecs[LN1_G:LN1_G + 1], vecs[LN1_B:LN1_B + 1])
    # fused QKV projection: one lane-dense [BT, D] x [D, 3D] bf16 matmul, f32 accumulation
    qkv = jnp.dot(xn.astype(jnp.bfloat16), lw["wqkv"],
                  preferred_element_type=jnp.float32) + lw["bqkv"]        # [BT, 3D]
    head_ctx = []
    for h in range(HEADS):                              # static unroll over 4 heads
        q = qkv[:, h * HEAD_DIM:(h + 1) * HEAD_DIM].astype(jnp.bfloat16)
        k = qkv[:, D + h * HEAD_DIM:D + (h + 1) * HEAD_DIM].astype(jnp.bfloat16)
        v = qkv[:, 2 * D + h * HEAD_DIM:2 * D + (h + 1) * HEAD_DIM].astype(jnp.bfloat16)
        # scores: contract head_dim of q against head_dim of k (no explicit k.T materialized)
        s = jax.lax.dot_general(q, k, (((1,), (1,)), ((), ())),
                                preferred_element_type=jnp.float32) * SCALE + add_mask
        m = jnp.max(s, axis=-1, keepdims=True)
        p = jnp.exp(s - m)
        denom = jnp.sum(p, axis=-1, keepdims=True)
        inv = pl.reciprocal(denom, approx=True) if approx_recip else 1.0 / denom
        p = p * inv
        head_ctx.append(jnp.dot(p.astype(jnp.bfloat16), v,
                                preferred_element_type=jnp.float32))      # [BT, hd]
    ctx = jnp.concatenate(head_ctx, axis=-1)                              # [BT, D]
    # fused output projection: one [BT, D] x [D, D] matmul + bias (no cross-head reduction)
    proj = jnp.dot(ctx.astype(jnp.bfloat16), lw["wo"],
                   preferred_element_type=jnp.float32) + vecs[ATTN_B:ATTN_B + 1]
    x = x + proj
    # --- MLP ---
    xn = _layernorm(x, vecs[LN2_G:LN2_G + 1], vecs[LN2_B:LN2_B + 1])
    h1 = jnp.dot(xn.astype(jnp.bfloat16), lw["wfc"],
                 preferred_element_type=jnp.float32) + lw["bfc"]
    h1 = _gelu_new(h1)
    h2 = jnp.dot(h1.astype(jnp.bfloat16), lw["wmp"],
                 preferred_element_type=jnp.float32) + vecs[MLP_B:MLP_B + 1]
    return x + h2


def _last_token_logits(x, lnf, wte):
    """Gather the last real token row of each folded example, final LN, bf16 LM head."""
    nb = x.shape[0] // TPAD
    x_last = jnp.concatenate(
        [x[b * TPAD + SEQ - 1: b * TPAD + SEQ, :] for b in range(nb)], axis=0)  # [B, D]
    xn = _layernorm(x_last, lnf[0:1], lnf[1:2])
    # tied LM head: contract D against D of wte [V, D] (no wte.T materialized), bf16 on the MXU
    # TODO(synk): at real vocab (50257) tile over V with a running (max, argmax) accumulator.
    return jax.lax.dot_general(xn.astype(jnp.bfloat16), wte, (((1,), (1,)), ((), ())),
                               preferred_element_type=jnp.float32)               # [B, V] f32


# ---- the single fused Pallas kernel -------------------------------------------
def gpt2_fused_kernel(x_ref, mask_ref, wqkv_ref, bqkv_ref, wo_ref, vecs_ref,
                      wfc_ref, bfc_ref, wmp_ref, lnf_ref, wte_ref, out_ref):
    x = x_ref[...]            # [B*TPAD, D] f32 activation slab (batch folded into sublanes)
    add_mask = mask_ref[...]  # [B*TPAD, B*TPAD] f32 block-diagonal causal + padding mask
    # TODO(synk): replace the static unroll with lax.fori_loop / a layer grid axis at 12 layers.
    for l in range(LAYERS):   # weights stay VMEM-resident across layers
        lw = dict(wqkv=wqkv_ref[l], bqkv=bqkv_ref[l], wo=wo_ref[l], vecs=vecs_ref[l],
                  wfc=wfc_ref[l], bfc=bfc_ref[l], wmp=wmp_ref[l])
        x = _block_math(x, add_mask, lw, approx_recip=True)
    logits = _last_token_logits(x, lnf_ref[...], wte_ref[...])               # [B, V] f32
    # first-max argmax (matches torch.argmax tie-breaking); one store for the whole batch
    m = jnp.max(logits, axis=-1, keepdims=True)
    idx = jax.lax.broadcasted_iota(jnp.int32, logits.shape, 1)
    cand = jnp.where(logits == m, idx, jnp.iinfo(jnp.int32).max)
    out_ref[...] = jnp.min(cand, axis=-1, keepdims=True)                     # [B, 1] int32


# ---- wrapper (== GPT2Wrapper.forward semantics) --------------------------------
def _prepare_inputs(input_ids, attention_mask, params):
    """Embed, pad each example to TPAD rows, fold batch into the sublane axis, and build the
    combined (block-diagonal x causal x key-padding) additive mask (NEG applied exactly once)."""
    B, T = input_ids.shape
    emb = params["wte"][input_ids].astype(jnp.float32) + params["wpe"][jnp.arange(T)][None]
    x0 = jnp.zeros((B, TPAD, D), jnp.float32).at[:, :T, :].set(emb)
    x0 = x0.reshape(B * TPAD, D)

    row_batch = jnp.repeat(jnp.arange(B), TPAD)                       # [B*TPAD]
    row_pos = jnp.tile(jnp.arange(TPAD), B)                           # [B*TPAD]
    key_valid = jnp.zeros((B, TPAD), bool).at[:, :T].set(
        attention_mask.astype(bool)).reshape(B * TPAD)
    allowed = ((row_batch[:, None] == row_batch[None, :])             # same example only
               & (row_pos[None, :] <= row_pos[:, None])               # causal
               & key_valid[None, :])                                  # key padding
    add_mask = jnp.where(allowed, 0.0, NEG).astype(jnp.float32)
    return x0, add_mask


def gpt2_wrapper_forward(input_ids, attention_mask, params):
    """input_ids [B,T] int32, attention_mask [B,T] int8 -> [B,1] int32 token ids."""
    B, T = input_ids.shape
    assert T == SEQ
    x0, add_mask = _prepare_inputs(input_ids, attention_mask, params)
    args = (x0, add_mask, params["wqkv"], params["bqkv"], params["wo"], params["vecs"],
            params["wfc"], params["bfc"], params["wmp"], params["lnf"], params["wte"])

    # Whole arrays VMEM-resident, untiled, single invocation (no grid).
    vmem = pl.BlockSpec(memory_space=pltpu.MemorySpace.VMEM)

    bt = B * TPAD
    layer_flops = (2 * bt * D * (3 * D)                    # fused QKV projection
                   + 2 * 2 * HEADS * bt * bt * HEAD_DIM    # scores + p@v
                   + 2 * bt * D * D                        # fused output projection
                   + 2 * 2 * bt * D * MLP)                 # MLP
    flops = LAYERS * layer_flops + 2 * B * D * VOCAB
    transcendentals = LAYERS * (HEADS * bt * bt + bt * MLP + 2 * bt) + B
    bytes_accessed = sum(int(a.size) * int(a.dtype.itemsize) for a in args) + B * 4

    return pl.pallas_call(
        gpt2_fused_kernel,
        out_shape=jax.ShapeDtypeStruct((B, 1), jnp.int32),
        in_specs=[vmem] * len(args),
        out_specs=vmem,
        cost_estimate=pl.CostEstimate(flops=flops, transcendentals=transcendentals,
                                      bytes_accessed=bytes_accessed),
    )(*args)


# ---- pure-JAX reference (same math; exact softmax reciprocal) -------------------
def _reference_logits(input_ids, attention_mask, params):
    x, add_mask = _prepare_inputs(input_ids, attention_mask, params)
    for l in range(LAYERS):
        lw = {k: params[k][l] for k in PER_LAYER_KEYS}
        x = _block_math(x, add_mask, lw, approx_recip=False)
    return _last_token_logits(x, params["lnf"], params["wte"])


# ---- deterministic synthetic parameters ----------------------------------------
def init_params(key):
    ks = jax.random.split(key, 6)

    def nrm(k, shape):
        return 0.02 * jax.random.normal(k, shape, jnp.float32)

    vecs = jnp.zeros((LAYERS, 6, D), jnp.float32)
    vecs = vecs.at[:, LN1_G, :].set(1.0).at[:, LN2_G, :].set(1.0)   # LN gains = 1
    return dict(
        wte=nrm(ks[0], (VOCAB, D)).astype(jnp.bfloat16),            # bf16 for gather + LM head
        wpe=nrm(ks[1], (SEQ, D)),
        lnf=jnp.concatenate([jnp.ones((1, D)), jnp.zeros((1, D))], axis=0).astype(jnp.float32),
        wqkv=nrm(ks[2], (LAYERS, D, 3 * D)).astype(jnp.bfloat16),   # fused Q|K|V
        bqkv=jnp.zeros((LAYERS, 1, 3 * D), jnp.float32),
        wo=nrm(ks[3], (LAYERS, D, D)).astype(jnp.bfloat16),         # fused output projection
        vecs=vecs,                                                  # ln1g,ln1b,ln2g,ln2b,bo,bmp
        wfc=nrm(ks[4], (LAYERS, D, MLP)).astype(jnp.bfloat16),
        bfc=jnp.zeros((LAYERS, 1, MLP), jnp.float32),
        wmp=nrm(ks[5], (LAYERS, MLP, D)).astype(jnp.bfloat16),
    )


if __name__ == "__main__":
    key = jax.random.PRNGKey(0)
    kp, ki = jax.random.split(key)
    params = init_params(kp)

    batch_size, seq_length = 2, SEQ
    input_ids = jax.random.randint(ki, (batch_size, seq_length), 0, VOCAB, dtype=jnp.int32)
    attention_mask = jnp.ones((batch_size, seq_length), dtype=jnp.int8)

    out = jax.block_until_ready(gpt2_wrapper_forward(input_ids, attention_mask, params))
    ref_logits = jax.block_until_ready(_reference_logits(input_ids, attention_mask, params))

    assert out.shape == (batch_size, 1) and out.dtype == jnp.int32
    assert bool(jnp.all((out >= 0) & (out < VOCAB)))
    # Tie/tolerance-aware argmax check: the kernel's token must score within 1e-2 of the
    # reference max logit (robust to Mosaic-vs-XLA accumulation order + approx reciprocal).
    picked = jnp.take_along_axis(ref_logits, out, axis=-1)[:, 0]
    best = jnp.max(ref_logits, axis=-1)
    assert bool(jnp.all(picked >= best - 1e-2)), (out, jnp.argmax(ref_logits, axis=-1))

    # TODO(synk): torch.argmax returns int64; this kernel emits int32 token ids.
    print("KERNEL_OK")
</pallas_src>

<mosaic_0001>
module attributes {stable_mosaic.version = 11 : i64} {
  func.func @gpt2_fused_kernel(%arg0: memref<16x64xf32, #tpu.memory_space<vmem>>, %arg1: memref<16x16xf32, #tpu.memory_space<vmem>>, %arg2: memref<2x64x192xbf16, #tpu.memory_space<vmem>>, %arg3: memref<2x1x192xf32, #tpu.memory_space<vmem>>, %arg4: memref<2x64x64xbf16, #tpu.memory_space<vmem>>, %arg5: memref<2x6x64xf32, #tpu.memory_space<vmem>>, %arg6: memref<2x64x256xbf16, #tpu.memory_space<vmem>>, %arg7: memref<2x1x256xf32, #tpu.memory_space<vmem>>, %arg8: memref<2x256x64xbf16, #tpu.memory_space<vmem>>, %arg9: memref<2x64xf32, #tpu.memory_space<vmem>>, %arg10: memref<512x64xbf16, #tpu.memory_space<vmem>>, %arg11: memref<2x1xi32, #tpu.memory_space<vmem>>) attributes {dimension_semantics = [], scalar_prefetch = 0 : i64, scratch_operands = 0 : i64, tpu.core_type = #tpu.core_type<tc>} {
    %c0 = arith.constant 0 : index
    %c0_0 = arith.constant 0 : index
    %0 = vector.load %arg0[%c0, %c0_0] : memref<16x64xf32, #tpu.memory_space<vmem>>, vector<16x64xf32>
    %c0_1 = arith.constant 0 : index
    %c0_2 = arith.constant 0 : index
    %1 = vector.load %arg1[%c0_1, %c0_2] : memref<16x16xf32, #tpu.memory_space<vmem>>, vector<16x16xf32>
    %c0_3 = arith.constant 0 : index
    %c0_4 = arith.constant 0 : index
    %c0_5 = arith.constant 0 : index
    %2 = vector.load %arg2[%c0_3, %c0_4, %c0_5] : memref<2x64x192xbf16, #tpu.memory_space<vmem>>, vector<1x64x192xbf16>
    %3 = vector.shape_cast %2 : vector<1x64x192xbf16> to vector<64x192xbf16>
    %c0_6 = arith.constant 0 : index
    %c0_7 = arith.constant 0 : index
    %c0_8 = arith.constant 0 : index
    %4 = vector.load %arg3[%c0_6, %c0_7, %c0_8] : memref<2x1x192xf32, #tpu.memory_space<vmem>>, vector<1x1x192xf32>
    %5 = vector.shape_cast %4 : vector<1x1x192xf32> to vector<1x192xf32>
    %c0_9 = arith.constant 0 : index
    %c0_10 = arith.constant 0 : index
    %c0_11 = arith.constant 0 : index
    %6 = vector.load %arg4[%c0_9, %c0_10, %c0_11] : memref<2x64x64xbf16, #tpu.memory_space<vmem>>, vector<1x64x64xbf16>
    %7 = vector.shape_cast %6 : vector<1x64x64xbf16> to vector<64x64xbf16>
    %c0_12 = arith.constant 0 : index
    %c0_13 = arith.constant 0 : index
    %c0_14 = arith.constant 0 : index
    %8 = vector.load %arg5[%c0_12, %c0_13, %c0_14] : memref<2x6x64xf32, #tpu.memory_space<vmem>>, vector<1x6x64xf32>
    %9 = vector.shape_cast %8 : vector<1x6x64xf32> to vector<6x64xf32>
    %c0_15 = arith.constant 0 : index
    %c0_16 = arith.constant 0 : index
    %c0_17 = arith.constant 0 : index
    %10 = vector.load %arg6[%c0_15, %c0_16, %c0_17] : memref<2x64x256xbf16, #tpu.memory_space<vmem>>, vector<1x64x256xbf16>
    %11 = vector.shape_cast %10 : vector<1x64x256xbf16> to vector<64x256xbf16>
    %c0_18 = arith.constant 0 : index
    %c0_19 = arith.constant 0 : index
    %c0_20 = arith.constant 0 : index
    %12 = vector.load %arg7[%c0_18, %c0_19, %c0_20] : memref<2x1x256xf32, #tpu.memory_space<vmem>>, vector<1x1x256xf32>
    %13 = vector.shape_cast %12 : vector<1x1x256xf32> to vector<1x256xf32>
    %c0_21 = arith.constant 0 : index
    %c0_22 = arith.constant 0 : index
    %c0_23 = arith.constant 0 : index
    %14 = vector.load %arg8[%c0_21, %c0_22, %c0_23] : memref<2x256x64xbf16, #tpu.memory_space<vmem>>, vector<1x256x64xbf16>
    %15 = vector.shape_cast %14 : vector<1x256x64xbf16> to vector<256x64xbf16>
    %16 = vector.extract_strided_slice %9 {offsets = [0, 0], sizes = [1, 64], strides = [1, 1]} : vector<6x64xf32> to vector<1x64xf32>
    %17 = vector.extract_strided_slice %9 {offsets = [1, 0], sizes = [1, 64], strides = [1, 1]} : vector<6x64xf32> to vector<1x64xf32>
    %cst = arith.constant dense<0.000000e+00> : vector<16xf32>
    %18 = vector.multi_reduction <add>, %0, %cst [1] : vector<16x64xf32> to vector<16xf32>
    %19 = vector.shape_cast %18 : vector<16xf32> to vector<16x1xf32>
    %cst_24 = arith.constant 6.400000e+01 : f32
    %20 = vector.broadcast %cst_24 : f32 to vector<16x1xf32>
    %21 = arith.divf %19, %20 : vector<16x1xf32>
    %22 = vector.broadcast %21 : vector<16x1xf32> to vector<16x64xf32>
    %23 = arith.subf %0, %22 : vector<16x64xf32>
    %24 = arith.mulf %23, %23 : vector<16x64xf32>
    %cst_25 = arith.constant dense<0.000000e+00> : vector<16xf32>
    %25 = vector.multi_reduction <add>, %24, %cst_25 [1] : vector<16x64xf32> to vector<16xf32>
    %26 = vector.shape_cast %25 : vector<16xf32> to vector<16x1xf32>
    %cst_26 = arith.constant 6.400000e+01 : f32
    %27 = vector.broadcast %cst_26 : f32 to vector<16x1xf32>
    %28 = arith.divf %26, %27 : vector<16x1xf32>
    %29 = vector.broadcast %21 : vector<16x1xf32> to vector<16x64xf32>
    %30 = arith.subf %0, %29 : vector<16x64xf32>
    %cst_27 = arith.constant 9.99999974E-6 : f32
    %31 = vector.broadcast %cst_27 : f32 to vector<16x1xf32>
    %32 = arith.addf %28, %31 : vector<16x1xf32>
    %33 = math.rsqrt %32 : vector<16x1xf32>
    %34 = vector.broadcast %33 : vector<16x1xf32> to vector<16x64xf32>
    %35 = arith.mulf %30, %34 : vector<16x64xf32>
    %36 = vector.broadcast %16 : vector<1x64xf32> to vector<16x64xf32>
    %37 = arith.mulf %35, %36 : vector<16x64xf32>
    %38 = vector.broadcast %17 : vector<1x64xf32> to vector<16x64xf32>
    %39 = arith.addf %37, %38 : vector<16x64xf32>
    %40 = arith.truncf %39 : vector<16x64xf32> to vector<16x64xbf16>
    %cst_28 = arith.constant dense<0.000000e+00> : vector<16x192xf32>
    %41 = tpu.matmul %40, %3, %cst_28 {dimension_numbers = #tpu.dot_dimension_numbers<[1], [0], [0], [1], [0, 0, 1, 1], [], []>} : vector<16x64xbf16>, vector<64x192xbf16>, vector<16x192xf32> -> vector<16x192xf32>
    %42 = vector.broadcast %5 : vector<1x192xf32> to vector<16x192xf32>
    %43 = arith.addf %41, %42 : vector<16x192xf32>
    %44 = vector.extract_strided_slice %43 {offsets = [0, 0], sizes = [16, 16], strides = [1, 1]} : vector<16x192xf32> to vector<16x16xf32>
    %45 = arith.truncf %44 : vector<16x16xf32> to vector<16x16xbf16>
    %46 = vector.extract_strided_slice %43 {offsets = [0, 64], sizes = [16, 16], strides = [1, 1]} : vector<16x192xf32> to vector<16x16xf32>
    %47 = arith.truncf %46 : vector<16x16xf32> to vector<16x16xbf16>
    %48 = vector.extract_strided_slice %43 {offsets = [0, 128], sizes = [16, 16], strides = [1, 1]} : vector<16x192xf32> to vector<16x16xf32>
    %49 = arith.truncf %48 : vector<16x16xf32> to vector<16x16xbf16>
    %cst_29 = arith.constant dense<0.000000e+00> : vector<16x16xf32>
    %50 = tpu.matmul %45, %47, %cst_29 {dimension_numbers = #tpu.dot_dimension_numbers<[1], [1], [0], [0], [0, 0, 1, 0], [], []>} : vector<16x16xbf16>, vector<16x16xbf16>, vector<16x16xf32> -> vector<16x16xf32>
    %cst_30 = arith.constant 2.500000e-01 : f32
    %51 = vector.broadcast %cst_30 : f32 to vector<16x16xf32>
    %52 = arith.mulf %50, %51 : vector<16x16xf32>
    %53 = arith.addf %52, %1 : vector<16x16xf32>
    %cst_31 = arith.constant dense<0xFF800000> : vector<16xf32>
    %54 = vector.multi_reduction <maximumf>, %53, %cst_31 [1] : vector<16x16xf32> to vector<16xf32>
    %55 = vector.shape_cast %54 : vector<16xf32> to vector<16x1xf32>
    %56 = vector.broadcast %55 : vector<16x1xf32> to vector<16x16xf32>
    %57 = arith.subf %53, %56 : vector<16x16xf32>
    %58 = math.exp %57 : vector<16x16xf32>
    %cst_32 = arith.constant dense<0.000000e+00> : vector<16xf32>
    %59 = vector.multi_reduction <add>, %58, %cst_32 [1] : vector<16x16xf32> to vector<16xf32>
    %60 = vector.shape_cast %59 : vector<16xf32> to vector<16x1xf32>
    %61 = tpu.reciprocal %60 {approx = true} : vector<16x1xf32> -> vector<16x1xf32>
    %62 = vector.broadcast %61 : vector<16x1xf32> to vector<16x16xf32>
    %63 = arith.mulf %58, %62 : vector<16x16xf32>
    %64 = arith.truncf %63 : vector<16x16xf32> to vector<16x16xbf16>
    %cst_33 = arith.constant dense<0.000000e+00> : vector<16x16xf32>
    %65 = tpu.matmul %64, %49, %cst_33 {dimension_numbers = #tpu.dot_dimension_numbers<[1], [0], [0], [1], [0, 0, 1, 1], [], []>} : vector<16x16xbf16>, vector<16x16xbf16>, vector<16x16xf32> -> vector<16x16xf32>
    %66 = vector.extract_strided_slice %43 {offsets = [0, 16], sizes = [16, 16], strides = [1, 1]} : vector<16x192xf32> to vector<16x16xf32>
    %67 = arith.truncf %66 : vector<16x16xf32> to vector<16x16xbf16>
    %68 = vector.extract_strided_slice %43 {offsets = [0, 80], sizes = [16, 16], strides = [1, 1]} : vector<16x192xf32> to vector<16x16xf32>
    %69 = arith.truncf %68 : vector<16x16xf32> to vector<16x16xbf16>
    %70 = vector.extract_strided_slice %43 {offsets = [0, 144], sizes = [16, 16], strides = [1, 1]} : vector<16x192xf32> to vector<16x16xf32>
    %71 = arith.truncf %70 : vector<16x16xf32> to vector<16x16xbf16>
    %cst_34 = arith.constant dense<0.000000e+00> : vector<16x16xf32>
    %72 = tpu.matmul %67, %69, %cst_34 {dimension_numbers = #tpu.dot_dimension_numbers<[1], [1], [0], [0], [0, 0, 1, 0], [], []>} : vector<16x16xbf16>, vector<16x16xbf16>, vector<16x16xf32> -> vector<16x16xf32>
    %cst_35 = arith.constant 2.500000e-01 : f32
    %73 = vector.broadcast %cst_35 : f32 to vector<16x16xf32>
    %74 = arith.mulf %72, %73 : vector<16x16xf32>
    %75 = arith.addf %74, %1 : vector<16x16xf32>
    %cst_36 = arith.constant dense<0xFF800000> : vector<16xf32>
    %76 = vector.multi_reduction <maximumf>, %75, %cst_36 [1] : vector<16x16xf32> to vector<16xf32>
    %77 = vector.shape_cast %76 : vector<16xf32> to vector<16x1xf32>
    %78 = vector.broadcast %77 : vector<16x1xf32> to vector<16x16xf32>
    %79 = arith.subf %75, %78 : vector<16x16xf32>
    %80 = math.exp %79 : vector<16x16xf32>
    %cst_37 = arith.constant dense<0.000000e+00> : vector<16xf32>
    %81 = vector.multi_reduction <add>, %80, %cst_37 [1] : vector<16x16xf32> to vector<16xf32>
    %82 = vector.shape_cast %81 : vector<16xf32> to vector<16x1xf32>
    %83 = tpu.reciprocal %82 {approx = true} : vector<16x1xf32> -> vector<16x1xf32>
    %84 = vector.broadcast %83 : vector<16x1xf32> to vector<16x16xf32>
    %85 = arith.mulf %80, %84 : vector<16x16xf32>
    %86 = arith.truncf %85 : vector<16x16xf32> to vector<16x16xbf16>
    %cst_38 = arith.constant dense<0.000000e+00> : vector<16x16xf32>
    %87 = tpu.matmul %86, %71, %cst_38 {dimension_numbers = #tpu.dot_dimension_numbers<[1], [0], [0], [1], [0, 0, 1, 1], [], []>} : vector<16x16xbf16>, vector<16x16xbf16>, vector<16x16xf32> -> vector<16x16xf32>
    %88 = vector.extract_strided_slice %43 {offsets = [0, 32], sizes = [16, 16], strides = [1, 1]} : vector<16x192xf32> to vector<16x16xf32>
    %89 = arith.truncf %88 : vector<16x16xf32> to vector<16x16xbf16>
    %90 = vector.extract_strided_slice %43 {offsets = [0, 96], sizes = [16, 16], strides = [1, 1]} : vector<16x192xf32> to vector<16x16xf32>
    %91 = arith.truncf %90 : vector<16x16xf32> to vector<16x16xbf16>
    %92 = vector.extract_strided_slice %43 {offsets = [0, 160], sizes = [16, 16], strides = [1, 1]} : vector<16x192xf32> to vector<16x16xf32>
    %93 = arith.truncf %92 : vector<16x16xf32> to vector<16x16xbf16>
    %cst_39 = arith.constant dense<0.000000e+00> : vector<16x16xf32>
    %94 = tpu.matmul %89, %91, %cst_39 {dimension_numbers = #tpu.dot_dimension_numbers<[1], [1], [0], [0], [0, 0, 1, 0], [], []>} : vector<16x16xbf16>, vector<16x16xbf16>, vector<16x16xf32> -> vector<16x16xf32>
    %cst_40 = arith.constant 2.500000e-01 : f32
    %95 = vector.broadcast %cst_40 : f32 to vector<16x16xf32>
    %96 = arith.mulf %94, %95 : vector<16x16xf32>
    %97 = arith.addf %96, %1 : vector<16x16xf32>
    %cst_41 = arith.constant dense<0xFF800000> : vector<16xf32>
    %98 = vector.multi_reduction <maximumf>, %97, %cst_41 [1] : vector<16x16xf32> to vector<16xf32>
    %99 = vector.shape_cast %98 : vector<16xf32> to vector<16x1xf32>
    %100 = vector.broadcast %99 : vector<16x1xf32> to vector<16x16xf32>
    %101 = arith.subf %97, %100 : vector<16x16xf32>
    %102 = math.exp %101 : vector<16x16xf32>
    %cst_42 = arith.constant dense<0.000000e+00> : vector<16xf32>
    %103 = vector.multi_reduction <add>, %102, %cst_42 [1] : vector<16x16xf32> to vector<16xf32>
    %104 = vector.shape_cast %103 : vector<16xf32> to vector<16x1xf32>
    %105 = tpu.reciprocal %104 {approx = true} : vector<16x1xf32> -> vector<16x1xf32>
    %106 = vector.broadcast %105 : vector<16x1xf32> to vector<16x16xf32>
    %107 = arith.mulf %102, %106 : vector<16x16xf32>
    %108 = arith.truncf %107 : vector<16x16xf32> to vector<16x16xbf16>
    %cst_43 = arith.constant dense<0.000000e+00> : vector<16x16xf32>
    %109 = tpu.matmul %108, %93, %cst_43 {dimension_numbers = #tpu.dot_dimension_numbers<[1], [0], [0], [1], [0, 0, 1, 1], [], []>} : vector<16x16xbf16>, vector<16x16xbf16>, vector<16x16xf32> -> vector<16x16xf32>
    %110 = vector.extract_strided_slice %43 {offsets = [0, 48], sizes = [16, 16], strides = [1, 1]} : vector<16x192xf32> to vector<16x16xf32>
    %111 = arith.truncf %110 : vector<16x16xf32> to vector<16x16xbf16>
    %112 = vector.extract_strided_slice %43 {offsets = [0, 112], sizes = [16, 16], strides = [1, 1]} : vector<16x192xf32> to vector<16x16xf32>
    %113 = arith.truncf %112 : vector<16x16xf32> to vector<16x16xbf16>
    %114 = vector.extract_strided_slice %43 {offsets = [0, 176], sizes = [16, 16], strides = [1, 1]} : vector<16x192xf32> to vector<16x16xf32>
    %115 = arith.truncf %114 : vector<16x16xf32> to vector<16x16xbf16>
    %cst_44 = arith.constant dense<0.000000e+00> : vector<16x16xf32>
    %116 = tpu.matmul %111, %113, %cst_44 {dimension_numbers = #tpu.dot_dimension_numbers<[1], [1], [0], [0], [0, 0, 1, 0], [], []>} : vector<16x16xbf16>, vector<16x16xbf16>, vector<16x16xf32> -> vector<16x16xf32>
    %cst_45 = arith.constant 2.500000e-01 : f32
    %117 = vector.broadcast %cst_45 : f32 to vector<16x16xf32>
    %118 = arith.mulf %116, %117 : vector<16x16xf32>
    %119 = arith.addf %118, %1 : vector<16x16xf32>
    %cst_46 = arith.constant dense<0xFF800000> : vector<16xf32>
    %120 = vector.multi_reduction <maximumf>, %119, %cst_46 [1] : vector<16x16xf32> to vector<16xf32>
    %121 = vector.shape_cast %120 : vector<16xf32> to vector<16x1xf32>
    %122 = vector.broadcast %121 : vector<16x1xf32> to vector<16x16xf32>
    %123 = arith.subf %119, %122 : vector<16x16xf32>
    %124 = math.exp %123 : vector<16x16xf32>
    %cst_47 = arith.constant dense<0.000000e+00> : vector<16xf32>
    %125 = vector.multi_reduction <add>, %124, %cst_47 [1] : vector<16x16xf32> to vector<16xf32>
    %126 = vector.shape_cast %125 : vector<16xf32> to vector<16x1xf32>
    %127 = tpu.reciprocal %126 {approx = true} : vector<16x1xf32> -> vector<16x1xf32>
    %128 = vector.broadcast %127 : vector<16x1xf32> to vector<16x16xf32>
    %129 = arith.mulf %124, %128 : vector<16x16xf32>
    %130 = arith.truncf %129 : vector<16x16xf32> to vector<16x16xbf16>
    %cst_48 = arith.constant dense<0.000000e+00> : vector<16x16xf32>
    %131 = tpu.matmul %130, %115, %cst_48 {dimension_numbers = #tpu.dot_dimension_numbers<[1], [0], [0], [1], [0, 0, 1, 1], [], []>} : vector<16x16xbf16>, vector<16x16xbf16>, vector<16x16xf32> -> vector<16x16xf32>
    %132 = tpu.concatenate %65, %87, %109, %131 in 1 : vector<16x16xf32>, vector<16x16xf32>, vector<16x16xf32>, vector<16x16xf32> -> vector<16x64xf32>
    %133 = arith.truncf %132 : vector<16x64xf32> to vector<16x64xbf16>
    %cst_49 = arith.constant dense<0.000000e+00> : vector<16x64xf32>
    %134 = tpu.matmul %133, %7, %cst_49 {dimension_numbers = #tpu.dot_dimension_numbers<[1], [0], [0], [1], [0, 0, 1, 1], [], []>} : vector<16x64xbf16>, vector<64x64xbf16>, vector<16x64xf32> -> vector<16x64xf32>
    %135 = vector.extract_strided_slice %9 {offsets = [4, 0], sizes = [1, 64], strides = [1, 1]} : vector<6x64xf32> to vector<1x64xf32>
    %136 = vector.broadcast %135 : vector<1x64xf32> to vector<16x64xf32>
    %137 = arith.addf %134, %136 : vector<16x64xf32>
    %138 = arith.addf %0, %137 : vector<16x64xf32>
    %139 = vector.extract_strided_slice %9 {offsets = [2, 0], sizes = [1, 64], strides = [1, 1]} : vector<6x64xf32> to vector<1x64xf32>
    %140 = vector.extract_strided_slice %9 {offsets = [3, 0], sizes = [1, 64], strides = [1, 1]} : vector<6x64xf32> to vector<1x64xf32>
    %cst_50 = arith.constant dense<0.000000e+00> : vector<16xf32>
    %141 = vector.multi_reduction <add>, %138, %cst_50 [1] : vector<16x64xf32> to vector<16xf32>
    %142 = vector.shape_cast %141 : vector<16xf32> to vector<16x1xf32>
    %cst_51 = arith.constant 6.400000e+01 : f32
    %143 = vector.broadcast %cst_51 : f32 to vector<16x1xf32>
    %144 = arith.divf %142, %143 : vector<16x1xf32>
    %145 = vector.broadcast %144 : vector<16x1xf32> to vector<16x64xf32>
    %146 = arith.subf %138, %145 : vector<16x64xf32>
    %147 = arith.mulf %146, %146 : vector<16x64xf32>
    %cst_52 = arith.constant dense<0.000000e+00> : vector<16xf32>
    %148 = vector.multi_reduction <add>, %147, %cst_52 [1] : vector<16x64xf32> to vector<16xf32>
    %149 = vector.shape_cast %148 : vector<16xf32> to vector<16x1xf32>
    %cst_53 = arith.constant 6.400000e+01 : f32
    %150 = vector.broadcast %cst_53 : f32 to vector<16x1xf32>
    %151 = arith.divf %149, %150 : vector<16x1xf32>
    %152 = vector.broadcast %144 : vector<16x1xf32> to vector<16x64xf32>
    %153 = arith.subf %138, %152 : vector<16x64xf32>
    %cst_54 = arith.constant 9.99999974E-6 : f32
    %154 = vector.broadcast %cst_54 : f32 to vector<16x1xf32>
    %155 = arith.addf %151, %154 : vector<16x1xf32>
    %156 = math.rsqrt %155 : vector<16x1xf32>
    %157 = vector.broadcast %156 : vector<16x1xf32> to vector<16x64xf32>
    %158 = arith.mulf %153, %157 : vector<16x64xf32>
    %159 = vector.broadcast %139 : vector<1x64xf32> to vector<16x64xf32>
    %160 = arith.mulf %158, %159 : vector<16x64xf32>
    %161 = vector.broadcast %140 : vector<1x64xf32> to vector<16x64xf32>
    %162 = arith.addf %160, %161 : vector<16x64xf32>
    %163 = arith.truncf %162 : vector<16x64xf32> to vector<16x64xbf16>
    %cst_55 = arith.constant dense<0.000000e+00> : vector<16x256xf32>
    %164 = tpu.matmul %163, %11, %cst_55 {dimension_numbers = #tpu.dot_dimension_numbers<[1], [0], [0], [1], [0, 0, 1, 1], [], []>} : vector<16x64xbf16>, vector<64x256xbf16>, vector<16x256xf32> -> vector<16x256xf32>
    %165 = vector.broadcast %13 : vector<1x256xf32> to vector<16x256xf32>
    %166 = arith.addf %164, %165 : vector<16x256xf32>
    %cst_56 = arith.constant 5.000000e-01 : f32
    %167 = vector.broadcast %cst_56 : f32 to vector<16x256xf32>
    %168 = arith.mulf %167, %166 : vector<16x256xf32>
    %cst_57 = arith.constant 4.471500e-02 : f32
    %169 = vector.broadcast %cst_57 : f32 to vector<16x256xf32>
    %170 = arith.mulf %169, %166 : vector<16x256xf32>
    %171 = arith.mulf %170, %166 : vector<16x256xf32>
    %172 = arith.mulf %171, %166 : vector<16x256xf32>
    %173 = arith.addf %166, %172 : vector<16x256xf32>
    %cst_58 = arith.constant 0.797884583 : f32
    %174 = vector.broadcast %cst_58 : f32 to vector<16x256xf32>
    %175 = arith.mulf %174, %173 : vector<16x256xf32>
    %176 = math.tanh %175 : vector<16x256xf32>
    %cst_59 = arith.constant 1.000000e+00 : f32
    %177 = vector.broadcast %cst_59 : f32 to vector<16x256xf32>
    %178 = arith.addf %177, %176 : vector<16x256xf32>
    %179 = arith.mulf %168, %178 : vector<16x256xf32>
    %180 = arith.truncf %179 : vector<16x256xf32> to vector<16x256xbf16>
    %cst_60 = arith.constant dense<0.000000e+00> : vector<16x64xf32>
    %181 = tpu.matmul %180, %15, %cst_60 {dimension_numbers = #tpu.dot_dimension_numbers<[1], [0], [0], [1], [0, 0, 1, 1], [], []>} : vector<16x256xbf16>, vector<256x64xbf16>, vector<16x64xf32> -> vector<16x64xf32>
    %182 = vector.extract_strided_slice %9 {offsets = [5, 0], sizes = [1, 64], strides = [1, 1]} : vector<6x64xf32> to vector<1x64xf32>
    %183 = vector.broadcast %182 : vector<1x64xf32> to vector<16x64xf32>
    %184 = arith.addf %181, %183 : vector<16x64xf32>
    %185 = arith.addf %138, %184 : vector<16x64xf32>
    %c1 = arith.constant 1 : index
    %c0_61 = arith.constant 0 : index
    %c0_62 = arith.constant 0 : index
    %186 = vector.load %arg2[%c1, %c0_61, %c0_62] : memref<2x64x192xbf16, #tpu.memory_space<vmem>>, vector<1x64x192xbf16>
    %187 = vector.shape_cast %186 : vector<1x64x192xbf16> to vector<64x192xbf16>
    %c1_63 = arith.constant 1 : index
    %c0_64 = arith.constant 0 : index
    %c0_65 = arith.constant 0 : index
    %188 = vector.load %arg3[%c1_63, %c0_64, %c0_65] : memref<2x1x192xf32, #tpu.memory_space<vmem>>, vector<1x1x192xf32>
    %189 = vector.shape_cast %188 : vector<1x1x192xf32> to vector<1x192xf32>
    %c1_66 = arith.constant 1 : index
    %c0_67 = arith.constant 0 : index
    %c0_68 = arith.constant 0 : index
    %190 = vector.load %arg4[%c1_66, %c0_67, %c0_68] : memref<2x64x64xbf16, #tpu.memory_space<vmem>>, vector<1x64x64xbf16>
    %191 = vector.shape_cast %190 : vector<1x64x64xbf16> to vector<64x64xbf16>
    %c1_69 = arith.constant 1 : index
    %c0_70 = arith.constant 0 : index
    %c0_71 = arith.constant 0 : index
    %192 = vector.load %arg5[%c1_69, %c0_70, %c0_71] : memref<2x6x64xf32, #tpu.memory_space<vmem>>, vector<1x6x64xf32>
    %193 = vector.shape_cast %192 : vector<1x6x64xf32> to vector<6x64xf32>
    %c1_72 = arith.constant 1 : index
    %c0_73 = arith.constant 0 : index
    %c0_74 = arith.constant 0 : index
    %194 = vector.load %arg6[%c1_72, %c0_73, %c0_74] : memref<2x64x256xbf16, #tpu.memory_space<vmem>>, vector<1x64x256xbf16>
    %195 = vector.shape_cast %194 : vector<1x64x256xbf16> to vector<64x256xbf16>
    %c1_75 = arith.constant 1 : index
    %c0_76 = arith.constant 0 : index
    %c0_77 = arith.constant 0 : index
    %196 = vector.load %arg7[%c1_75, %c0_76, %c0_77] : memref<2x1x256xf32, #tpu.memory_space<vmem>>, vector<1x1x256xf32>
    %197 = vector.shape_cast %196 : vector<1x1x256xf32> to vector<1x256xf32>
    %c1_78 = arith.constant 1 : index
    %c0_79 = arith.constant 0 : index
    %c0_80 = arith.constant 0 : index
    %198 = vector.load %arg8[%c1_78, %c0_79, %c0_80] : memref<2x256x64xbf16, #tpu.memory_space<vmem>>, vector<1x256x64xbf16>
    %199 = vector.shape_cast %198 : vector<1x256x64xbf16> to vector<256x64xbf16>
    %200 = vector.extract_strided_slice %193 {offsets = [0, 0], sizes = [1, 64], strides = [1, 1]} : vector<6x64xf32> to vector<1x64xf32>
    %201 = vector.extract_strided_slice %193 {offsets = [1, 0], sizes = [1, 64], strides = [1, 1]} : vector<6x64xf32> to vector<1x64xf32>
    %cst_81 = arith.constant dense<0.000000e+00> : vector<16xf32>
    %202 = vector.multi_reduction <add>, %185, %cst_81 [1] : vector<16x64xf32> to vector<16xf32>
    %203 = vector.shape_cast %202 : vector<16xf32> to vector<16x1xf32>
    %cst_82 = arith.constant 6.400000e+01 : f32
    %204 = vector.broadcast %cst_82 : f32 to vector<16x1xf32>
    %205 = arith.divf %203, %204 : vector<16x1xf32>
    %206 = vector.broadcast %205 : vector<16x1xf32> to vector<16x64xf32>
    %207 = arith.subf %185, %206 : vector<16x64xf32>
    %208 = arith.mulf %207, %207 : vector<16x64xf32>
    %cst_83 = arith.constant dense<0.000000e+00> : vector<16xf32>
    %209 = vector.multi_reduction <add>, %208, %cst_83 [1] : vector<16x64xf32> to vector<16xf32>
    %210 = vector.shape_cast %209 : vector<16xf32> to vector<16x1xf32>
    %cst_84 = arith.constant 6.400000e+01 : f32
    %211 = vector.broadcast %cst_84 : f32 to vector<16x1xf32>
    %212 = arith.divf %210, %211 : vector<16x1xf32>
    %213 = vector.broadcast %205 : vector<16x1xf32> to vector<16x64xf32>
    %214 = arith.subf %185, %213 : vector<16x64xf32>
    %cst_85 = arith.constant 9.99999974E-6 : f32
    %215 = vector.broadcast %cst_85 : f32 to vector<16x1xf32>
    %216 = arith.addf %212, %215 : vector<16x1xf32>
    %217 = math.rsqrt %216 : vector<16x1xf32>
    %218 = vector.broadcast %217 : vector<16x1xf32> to vector<16x64xf32>
    %219 = arith.mulf %214, %218 : vector<16x64xf32>
    %220 = vector.broadcast %200 : vector<1x64xf32> to vector<16x64xf32>
    %221 = arith.mulf %219, %220 : vector<16x64xf32>
    %222 = vector.broadcast %201 : vector<1x64xf32> to vector<16x64xf32>
    %223 = arith.addf %221, %222 : vector<16x64xf32>
    %224 = arith.truncf %223 : vector<16x64xf32> to vector<16x64xbf16>
    %cst_86 = arith.constant dense<0.000000e+00> : vector<16x192xf32>
    %225 = tpu.matmul %224, %187, %cst_86 {dimension_numbers = #tpu.dot_dimension_numbers<[1], [0], [0], [1], [0, 0, 1, 1], [], []>} : vector<16x64xbf16>, vector<64x192xbf16>, vector<16x192xf32> -> vector<16x192xf32>
    %226 = vector.broadcast %189 : vector<1x192xf32> to vector<16x192xf32>
    %227 = arith.addf %225, %226 : vector<16x192xf32>
    %228 = vector.extract_strided_slice %227 {offsets = [0, 0], sizes = [16, 16], strides = [1, 1]} : vector<16x192xf32> to vector<16x16xf32>
    %229 = arith.truncf %228 : vector<16x16xf32> to vector<16x16xbf16>
    %230 = vector.extract_strided_slice %227 {offsets = [0, 64], sizes = [16, 16], strides = [1, 1]} : vector<16x192xf32> to vector<16x16xf32>
    %231 = arith.truncf %230 : vector<16x16xf32> to vector<16x16xbf16>
    %232 = vector.extract_strided_slice %227 {offsets = [0, 128], sizes = [16, 16], strides = [1, 1]} : vector<16x192xf32> to vector<16x16xf32>
    %233 = arith.truncf %232 : vector<16x16xf32> to vector<16x16xbf16>
    %cst_87 = arith.constant dense<0.000000e+00> : vector<16x16xf32>
    %234 = tpu.matmul %229, %231, %cst_87 {dimension_numbers = #tpu.dot_dimension_numbers<[1], [1], [0], [0], [0, 0, 1, 0], [], []>} : vector<16x16xbf16>, vector<16x16xbf16>, vector<16x16xf32> -> vector<16x16xf32>
    %cst_88 = arith.constant 2.500000e-01 : f32
    %235 = vector.broadcast %cst_88 : f32 to vector<16x16xf32>
    %236 = arith.mulf %234, %235 : vector<16x16xf32>
    %237 = arith.addf %236, %1 : vector<16x16xf32>
    %cst_89 = arith.constant dense<0xFF800000> : vector<16xf32>
    %238 = vector.multi_reduction <maximumf>, %237, %cst_89 [1] : vector<16x16xf32> to vector<16xf32>
    %239 = vector.shape_cast %238 : vector<16xf32> to vector<16x1xf32>
    %240 = vector.broadcast %239 : vector<16x1xf32> to vector<16x16xf32>
    %241 = arith.subf %237, %240 : vector<16x16xf32>
    %242 = math.exp %241 : vector<16x16xf32>
    %cst_90 = arith.constant dense<0.000000e+00> : vector<16xf32>
    %243 = vector.multi_reduction <add>, %242, %cst_90 [1] : vector<16x16xf32> to vector<16xf32>
    %244 = vector.shape_cast %243 : vector<16xf32> to vector<16x1xf32>
    %245 = tpu.reciprocal %244 {approx = true} : vector<16x1xf32> -> vector<16x1xf32>
    %246 = vector.broadcast %245 : vector<16x1xf32> to vector<16x16xf32>
    %247 = arith.mulf %242, %246 : vector<16x16xf32>
    %248 = arith.truncf %247 : vector<16x16xf32> to vector<16x16xbf16>
    %cst_91 = arith.constant dense<0.000000e+00> : vector<16x16xf32>
    %249 = tpu.matmul %248, %233, %cst_91 {dimension_numbers = #tpu.dot_dimension_numbers<[1], [0], [0], [1], [0, 0, 1, 1], [], []>} : vector<16x16xbf16>, vector<16x16xbf16>, vector<16x16xf32> -> vector<16x16xf32>
    %250 = vector.extract_strided_slice %227 {offsets = [0, 16], sizes = [16, 16], strides = [1, 1]} : vector<16x192xf32> to vector<16x16xf32>
    %251 = arith.truncf %250 : vector<16x16xf32> to vector<16x16xbf16>
    %252 = vector.extract_strided_slice %227 {offsets = [0, 80], sizes = [16, 16], strides = [1, 1]} : vector<16x192xf32> to vector<16x16xf32>
    %253 = arith.truncf %252 : vector<16x16xf32> to vector<16x16xbf16>
    %254 = vector.extract_strided_slice %227 {offsets = [0, 144], sizes = [16, 16], strides = [1, 1]} : vector<16x192xf32> to vector<16x16xf32>
    %255 = arith.truncf %254 : vector<16x16xf32> to vector<16x16xbf16>
    %cst_92 = arith.constant dense<0.000000e+00> : vector<16x16xf32>
    %256 = tpu.matmul %251, %253, %cst_92 {dimension_numbers = #tpu.dot_dimension_numbers<[1], [1], [0], [0], [0, 0, 1, 0], [], []>} : vector<16x16xbf16>, vector<16x16xbf16>, vector<16x16xf32> -> vector<16x16xf32>
    %cst_93 = arith.constant 2.500000e-01 : f32
    %257 = vector.broadcast %cst_93 : f32 to vector<16x16xf32>
    %258 = arith.mulf %256, %257 : vector<16x16xf32>
    %259 = arith.addf %258, %1 : vector<16x16xf32>
    %cst_94 = arith.constant dense<0xFF800000> : vector<16xf32>
    %260 = vector.multi_reduction <maximumf>, %259, %cst_94 [1] : vector<16x16xf32> to vector<16xf32>
    %261 = vector.shape_cast %260 : vector<16xf32> to vector<16x1xf32>
    %262 = vector.broadcast %261 : vector<16x1xf32> to vector<16x16xf32>
    %263 = arith.subf %259, %262 : vector<16x16xf32>
    %264 = math.exp %263 : vector<16x16xf32>
    %cst_95 = arith.constant dense<0.000000e+00> : vector<16xf32>
    %265 = vector.multi_reduction <add>, %264, %cst_95 [1] : vector<16x16xf32> to vector<16xf32>
    %266 = vector.shape_cast %265 : vector<16xf32> to vector<16x1xf32>
    %267 = tpu.reciprocal %266 {approx = true} : vector<16x1xf32> -> vector<16x1xf32>
    %268 = vector.broadcast %267 : vector<16x1xf32> to vector<16x16xf32>
    %269 = arith.mulf %264, %268 : vector<16x16xf32>
    %270 = arith.truncf %269 : vector<16x16xf32> to vector<16x16xbf16>
    %cst_96 = arith.constant dense<0.000000e+00> : vector<16x16xf32>
    %271 = tpu.matmul %270, %255, %cst_96 {dimension_numbers = #tpu.dot_dimension_numbers<[1], [0], [0], [1], [0, 0, 1, 1], [], []>} : vector<16x16xbf16>, vector<16x16xbf16>, vector<16x16xf32> -> vector<16x16xf32>
    %272 = vector.extract_strided_slice %227 {offsets = [0, 32], sizes = [16, 16], strides = [1, 1]} : vector<16x192xf32> to vector<16x16xf32>
    %273 = arith.truncf %272 : vector<16x16xf32> to vector<16x16xbf16>
    %274 = vector.extract_strided_slice %227 {offsets = [0, 96], sizes = [16, 16], strides = [1, 1]} : vector<16x192xf32> to vector<16x16xf32>
    %275 = arith.truncf %274 : vector<16x16xf32> to vector<16x16xbf16>
    %276 = vector.extract_strided_slice %227 {offsets = [0, 160], sizes = [16, 16], strides = [1, 1]} : vector<16x192xf32> to vector<16x16xf32>
    %277 = arith.truncf %276 : vector<16x16xf32> to vector<16x16xbf16>
    %cst_97 = arith.constant dense<0.000000e+00> : vector<16x16xf32>
    %278 = tpu.matmul %273, %275, %cst_97 {dimension_numbers = #tpu.dot_dimension_numbers<[1], [1], [0], [0], [0, 0, 1, 0], [], []>} : vector<16x16xbf16>, vector<16x16xbf16>, vector<16x16xf32> -> vector<16x16xf32>
    %cst_98 = arith.constant 2.500000e-01 : f32
    %279 = vector.broadcast %cst_98 : f32 to vector<16x16xf32>
    %280 = arith.mulf %278, %279 : vector<16x16xf32>
    %281 = arith.addf %280, %1 : vector<16x16xf32>
    %cst_99 = arith.constant dense<0xFF800000> : vector<16xf32>
    %282 = vector.multi_reduction <maximumf>, %281, %cst_99 [1] : vector<16x16xf32> to vector<16xf32>
    %283 = vector.shape_cast %282 : vector<16xf32> to vector<16x1xf32>
    %284 = vector.broadcast %283 : vector<16x1xf32> to vector<16x16xf32>
    %285 = arith.subf %281, %284 : vector<16x16xf32>
    %286 = math.exp %285 : vector<16x16xf32>
    %cst_100 = arith.constant dense<0.000000e+00> : vector<16xf32>
    %287 = vector.multi_reduction <add>, %286, %cst_100 [1] : vector<16x16xf32> to vector<16xf32>
    %288 = vector.shape_cast %287 : vector<16xf32> to vector<16x1xf32>
    %289 = tpu.reciprocal %288 {approx = true} : vector<16x1xf32> -> vector<16x1xf32>
    %290 = vector.broadcast %289 : vector<16x1xf32> to vector<16x16xf32>
    %291 = arith.mulf %286, %290 : vector<16x16xf32>
    %292 = arith.truncf %291 : vector<16x16xf32> to vector<16x16xbf16>
    %cst_101 = arith.constant dense<0.000000e+00> : vector<16x16xf32>
    %293 = tpu.matmul %292, %277, %cst_101 {dimension_numbers = #tpu.dot_dimension_numbers<[1], [0], [0], [1], [0, 0, 1, 1], [], []>} : vector<16x16xbf16>, vector<16x16xbf16>, vector<16x16xf32> -> vector<16x16xf32>
    %294 = vector.extract_strided_slice %227 {offsets = [0, 48], sizes = [16, 16], strides = [1, 1]} : vector<16x192xf32> to vector<16x16xf32>
    %295 = arith.truncf %294 : vector<16x16xf32> to vector<16x16xbf16>
    %296 = vector.extract_strided_slice %227 {offsets = [0, 112], sizes = [16, 16], strides = [1, 1]} : vector<16x192xf32> to vector<16x16xf32>
    %297 = arith.truncf %296 : vector<16x16xf32> to vector<16x16xbf16>
    %298 = vector.extract_strided_slice %227 {offsets = [0, 176], sizes = [16, 16], strides = [1, 1]} : vector<16x192xf32> to vector<16x16xf32>
    %299 = arith.truncf %298 : vector<16x16xf32> to vector<16x16xbf16>
    %cst_102 = arith.constant dense<0.000000e+00> : vector<16x16xf32>
    %300 = tpu.matmul %295, %297, %cst_102 {dimension_numbers = #tpu.dot_dimension_numbers<[1], [1], [0], [0], [0, 0, 1, 0], [], []>} : vector<16x16xbf16>, vector<16x16xbf16>, vector<16x16xf32> -> vector<16x16xf32>
    %cst_103 = arith.constant 2.500000e-01 : f32
    %301 = vector.broadcast %cst_103 : f32 to vector<16x16xf32>
    %302 = arith.mulf %300, %301 : vector<16x16xf32>
    %303 = arith.addf %302, %1 : vector<16x16xf32>
    %cst_104 = arith.constant dense<0xFF800000> : vector<16xf32>
    %304 = vector.multi_reduction <maximumf>, %303, %cst_104 [1] : vector<16x16xf32> to vector<16xf32>
    %305 = vector.shape_cast %304 : vector<16xf32> to vector<16x1xf32>
    %306 = vector.broadcast %305 : vector<16x1xf32> to vector<16x16xf32>
    %307 = arith.subf %303, %306 : vector<16x16xf32>
    %308 = math.exp %307 : vector<16x16xf32>
    %cst_105 = arith.constant dense<0.000000e+00> : vector<16xf32>
    %309 = vector.multi_reduction <add>, %308, %cst_105 [1] : vector<16x16xf32> to vector<16xf32>
    %310 = vector.shape_cast %309 : vector<16xf32> to vector<16x1xf32>
    %311 = tpu.reciprocal %310 {approx = true} : vector<16x1xf32> -> vector<16x1xf32>
    %312 = vector.broadcast %311 : vector<16x1xf32> to vector<16x16xf32>
    %313 = arith.mulf %308, %312 : vector<16x16xf32>
    %314 = arith.truncf %313 : vector<16x16xf32> to vector<16x16xbf16>
    %cst_106 = arith.constant dense<0.000000e+00> : vector<16x16xf32>
    %315 = tpu.matmul %314, %299, %cst_106 {dimension_numbers = #tpu.dot_dimension_numbers<[1], [0], [0], [1], [0, 0, 1, 1], [], []>} : vector<16x16xbf16>, vector<16x16xbf16>, vector<16x16xf32> -> vector<16x16xf32>
    %316 = tpu.concatenate %249, %271, %293, %315 in 1 : vector<16x16xf32>, vector<16x16xf32>, vector<16x16xf32>, vector<16x16xf32> -> vector<16x64xf32>
    %317 = arith.truncf %316 : vector<16x64xf32> to vector<16x64xbf16>
    %cst_107 = arith.constant dense<0.000000e+00> : vector<16x64xf32>
    %318 = tpu.matmul %317, %191, %cst_107 {dimension_numbers = #tpu.dot_dimension_numbers<[1], [0], [0], [1], [0, 0, 1, 1], [], []>} : vector<16x64xbf16>, vector<64x64xbf16>, vector<16x64xf32> -> vector<16x64xf32>
    %319 = vector.extract_strided_slice %193 {offsets = [4, 0], sizes = [1, 64], strides = [1, 1]} : vector<6x64xf32> to vector<1x64xf32>
    %320 = vector.broadcast %319 : vector<1x64xf32> to vector<16x64xf32>
    %321 = arith.addf %318, %320 : vector<16x64xf32>
    %322 = arith.addf %185, %321 : vector<16x64xf32>
    %323 = vector.extract_strided_slice %193 {offsets = [2, 0], sizes = [1, 64], strides = [1, 1]} : vector<6x64xf32> to vector<1x64xf32>
    %324 = vector.extract_strided_slice %193 {offsets = [3, 0], sizes = [1, 64], strides = [1, 1]} : vector<6x64xf32> to vector<1x64xf32>
    %cst_108 = arith.constant dense<0.000000e+00> : vector<16xf32>
    %325 = vector.multi_reduction <add>, %322, %cst_108 [1] : vector<16x64xf32> to vector<16xf32>
    %326 = vector.shape_cast %325 : vector<16xf32> to vector<16x1xf32>
    %cst_109 = arith.constant 6.400000e+01 : f32
    %327 = vector.broadcast %cst_109 : f32 to vector<16x1xf32>
    %328 = arith.divf %326, %327 : vector<16x1xf32>
    %329 = vector.broadcast %328 : vector<16x1xf32> to vector<16x64xf32>
    %330 = arith.subf %322, %329 : vector<16x64xf32>
    %331 = arith.mulf %330, %330 : vector<16x64xf32>
    %cst_110 = arith.constant dense<0.000000e+00> : vector<16xf32>
    %332 = vector.multi_reduction <add>, %331, %cst_110 [1] : vector<16x64xf32> to vector<16xf32>
    %333 = vector.shape_cast %332 : vector<16xf32> to vector<16x1xf32>
    %cst_111 = arith.constant 6.400000e+01 : f32
    %334 = vector.broadcast %cst_111 : f32 to vector<16x1xf32>
    %335 = arith.divf %333, %334 : vector<16x1xf32>
    %336 = vector.broadcast %328 : vector<16x1xf32> to vector<16x64xf32>
    %337 = arith.subf %322, %336 : vector<16x64xf32>
    %cst_112 = arith.constant 9.99999974E-6 : f32
    %338 = vector.broadcast %cst_112 : f32 to vector<16x1xf32>
    %339 = arith.addf %335, %338 : vector<16x1xf32>
    %340 = math.rsqrt %339 : vector<16x1xf32>
    %341 = vector.broadcast %340 : vector<16x1xf32> to vector<16x64xf32>
    %342 = arith.mulf %337, %341 : vector<16x64xf32>
    %343 = vector.broadcast %323 : vector<1x64xf32> to vector<16x64xf32>
    %344 = arith.mulf %342, %343 : vector<16x64xf32>
    %345 = vector.broadcast %324 : vector<1x64xf32> to vector<16x64xf32>
    %346 = arith.addf %344, %345 : vector<16x64xf32>
    %347 = arith.truncf %346 : vector<16x64xf32> to vector<16x64xbf16>
    %cst_113 = arith.constant dense<0.000000e+00> : vector<16x256xf32>
    %348 = tpu.matmul %347, %195, %cst_113 {dimension_numbers = #tpu.dot_dimension_numbers<[1], [0], [0], [1], [0, 0, 1, 1], [], []>} : vector<16x64xbf16>, vector<64x256xbf16>, vector<16x256xf32> -> vector<16x256xf32>
    %349 = vector.broadcast %197 : vector<1x256xf32> to vector<16x256xf32>
    %350 = arith.addf %348, %349 : vector<16x256xf32>
    %cst_114 = arith.constant 5.000000e-01 : f32
    %351 = vector.broadcast %cst_114 : f32 to vector<16x256xf32>
    %352 = arith.mulf %351, %350 : vector<16x256xf32>
    %cst_115 = arith.constant 4.471500e-02 : f32
    %353 = vector.broadcast %cst_115 : f32 to vector<16x256xf32>
    %354 = arith.mulf %353, %350 : vector<16x256xf32>
    %355 = arith.mulf %354, %350 : vector<16x256xf32>
    %356 = arith.mulf %355, %350 : vector<16x256xf32>
    %357 = arith.addf %350, %356 : vector<16x256xf32>
    %cst_116 = arith.constant 0.797884583 : f32
    %358 = vector.broadcast %cst_116 : f32 to vector<16x256xf32>
    %359 = arith.mulf %358, %357 : vector<16x256xf32>
    %360 = math.tanh %359 : vector<16x256xf32>
    %cst_117 = arith.constant 1.000000e+00 : f32
    %361 = vector.broadcast %cst_117 : f32 to vector<16x256xf32>
    %362 = arith.addf %361, %360 : vector<16x256xf32>
    %363 = arith.mulf %352, %362 : vector<16x256xf32>
    %364 = arith.truncf %363 : vector<16x256xf32> to vector<16x256xbf16>
    %cst_118 = arith.constant dense<0.000000e+00> : vector<16x64xf32>
    %365 = tpu.matmul %364, %199, %cst_118 {dimension_numbers = #tpu.dot_dimension_numbers<[1], [0], [0], [1], [0, 0, 1, 1], [], []>} : vector<16x256xbf16>, vector<256x64xbf16>, vector<16x64xf32> -> vector<16x64xf32>
    %366 = vector.extract_strided_slice %193 {offsets = [5, 0], sizes = [1, 64], strides = [1, 1]} : vector<6x64xf32> to vector<1x64xf32>
    %367 = vector.broadcast %366 : vector<1x64xf32> to vector<16x64xf32>
    %368 = arith.addf %365, %367 : vector<16x64xf32>
    %369 = arith.addf %322, %368 : vector<16x64xf32>
    %c0_119 = arith.constant 0 : index
    %c0_120 = arith.constant 0 : index
    %370 = vector.load %arg9[%c0_119, %c0_120] : memref<2x64xf32, #tpu.memory_space<vmem>>, vector<2x64xf32>
    %c0_121 = arith.constant 0 : index
    %c0_122 = arith.constant 0 : index
    %371 = vector.load %arg10[%c0_121, %c0_122] : memref<512x64xbf16, #tpu.memory_space<vmem>>, vector<512x64xbf16>
    %372 = vector.extract_strided_slice %369 {offsets = [5, 0], sizes = [1, 64], strides = [1, 1]} : vector<16x64xf32> to vector<1x64xf32>
    %373 = vector.extract_strided_slice %369 {offsets = [13, 0], sizes = [1, 64], strides = [1, 1]} : vector<16x64xf32> to vector<1x64xf32>
    %374 = tpu.concatenate %372, %373 in 0 : vector<1x64xf32>, vector<1x64xf32> -> vector<2x64xf32>
    %375 = vector.extract_strided_slice %370 {offsets = [0, 0], sizes = [1, 64], strides = [1, 1]} : vector<2x64xf32> to vector<1x64xf32>
    %376 = vector.extract_strided_slice %370 {offsets = [1, 0], sizes = [1, 64], strides = [1, 1]} : vector<2x64xf32> to vector<1x64xf32>
    %cst_123 = arith.constant dense<0.000000e+00> : vector<2xf32>
    %377 = vector.multi_reduction <add>, %374, %cst_123 [1] : vector<2x64xf32> to vector<2xf32>
    %378 = vector.shape_cast %377 : vector<2xf32> to vector<2x1xf32>
    %cst_124 = arith.constant 6.400000e+01 : f32
    %379 = vector.broadcast %cst_124 : f32 to vector<2x1xf32>
    %380 = arith.divf %378, %379 : vector<2x1xf32>
    %381 = vector.broadcast %380 : vector<2x1xf32> to vector<2x64xf32>
    %382 = arith.subf %374, %381 : vector<2x64xf32>
    %383 = arith.mulf %382, %382 : vector<2x64xf32>
    %cst_125 = arith.constant dense<0.000000e+00> : vector<2xf32>
    %384 = vector.multi_reduction <add>, %383, %cst_125 [1] : vector<2x64xf32> to vector<2xf32>
    %385 = vector.shape_cast %384 : vector<2xf32> to vector<2x1xf32>
    %cst_126 = arith.constant 6.400000e+01 : f32
    %386 = vector.broadcast %cst_126 : f32 to vector<2x1xf32>
    %387 = arith.divf %385, %386 : vector<2x1xf32>
    %388 = vector.broadcast %380 : vector<2x1xf32> to vector<2x64xf32>
    %389 = arith.subf %374, %388 : vector<2x64xf32>
    %cst_127 = arith.constant 9.99999974E-6 : f32
    %390 = vector.broadcast %cst_127 : f32 to vector<2x1xf32>
    %391 = arith.addf %387, %390 : vector<2x1xf32>
    %392 = math.rsqrt %391 : vector<2x1xf32>
    %393 = vector.broadcast %392 : vector<2x1xf32> to vector<2x64xf32>
    %394 = arith.mulf %389, %393 : vector<2x64xf32>
    %395 = vector.broadcast %375 : vector<1x64xf32> to vector<2x64xf32>
    %396 = arith.mulf %394, %395 : vector<2x64xf32>
    %397 = vector.broadcast %376 : vector<1x64xf32> to vector<2x64xf32>
    %398 = arith.addf %396, %397 : vector<2x64xf32>
    %399 = arith.truncf %398 : vector<2x64xf32> to vector<2x64xbf16>
    %cst_128 = arith.constant dense<0.000000e+00> : vector<2x512xf32>
    %400 = tpu.matmul %399, %371, %cst_128 {dimension_numbers = #tpu.dot_dimension_numbers<[1], [1], [0], [0], [0, 0, 1, 0], [], []>} : vector<2x64xbf16>, vector<512x64xbf16>, vector<2x512xf32> -> vector<2x512xf32>
    %cst_129 = arith.constant dense<0xFF800000> : vector<2xf32>
    %401 = vector.multi_reduction <maximumf>, %400, %cst_129 [1] : vector<2x512xf32> to vector<2xf32>
    %402 = vector.shape_cast %401 : vector<2xf32> to vector<2x1xf32>
    %403 = tpu.iota {dimensions = array<i32: 1>} : vector<2x512xi32>
    %404 = vector.broadcast %402 : vector<2x1xf32> to vector<2x512xf32>
    %405 = arith.cmpf oeq, %400, %404 : vector<2x512xf32>
    %c2147483647_i32 = arith.constant 2147483647 : i32
    %406 = vector.broadcast %c2147483647_i32 : i32 to vector<2x512xi32>
    %407 = arith.select %405, %403, %406 : vector<2x512xi1>, vector<2x512xi32>
    %cst_130 = arith.constant dense<2147483647> : vector<2xi32>
    %408 = vector.multi_reduction <minsi>, %407, %cst_130 [1] : vector<2x512xi32> to vector<2xi32>
    %409 = vector.shape_cast %408 : vector<2xi32> to vector<2x1xi32>
    %c0_131 = arith.constant 0 : index
    %c0_132 = arith.constant 0 : index
    %410 = vector.load %arg11[%c0_131, %c0_132] : memref<2x1xi32, #tpu.memory_space<vmem>>, vector<2x1xi32>
    tpu.vector_store %arg11[%c0_131, %c0_132], %409 {strides = array<i32>} : memref<2x1xi32, #tpu.memory_space<vmem>>, vector<2x1xi32>,
    return
  }
}

</mosaic_0001>

<llo_original>
// kernel: tpu_custom_call.1
$region0: #{tpu_custom_call.1}
  #allocation0 [shape = 'u32[]', space=smem, size = 0x4, offset = 0x4, fixed_abs, tag = 'smem constant byte address 0x4 - core index']
  #allocation1 [shape = 'u32[144,128]{1,0:T(1,128)}', space=vmem, size = 0x12000, scoped, tag = 'internal scratch']
  %s0 = inlined_call_operand.vmem [shape: f32[16,64], index: 0, kind: input, shape index: {}]
  %s1 = inlined_call_operand.vmem [shape: f32[16,16], index: 1, kind: input, shape index: {}]
  %s2 = inlined_call_operand.vmem [shape: bf16[2,64,192], index: 2, kind: input, shape index: {}]
  %s3 = inlined_call_operand.vmem [shape: f32[2,1,192], index: 3, kind: input, shape index: {}]
  %s4 = inlined_call_operand.vmem [shape: bf16[2,64,64], index: 4, kind: input, shape index: {}]
  %s5 = inlined_call_operand.vmem [shape: f32[2,6,64], index: 5, kind: input, shape index: {}]
  %s6 = inlined_call_operand.vmem [shape: bf16[2,64,256], index: 6, kind: input, shape index: {}]
  %s7 = inlined_call_operand.vmem [shape: f32[2,1,256], index: 7, kind: input, shape index: {}]
  %s8 = inlined_call_operand.vmem [shape: bf16[2,256,64], index: 8, kind: input, shape index: {}]
  %s9 = inlined_call_operand.vmem [shape: f32[2,64], index: 9, kind: input, shape index: {}]
  %s10 = inlined_call_operand.vmem [shape: bf16[512,64], index: 10, kind: input, shape index: {}]
  %s11 = inlined_call_operand.vmem [shape: s32[2,1], index: 11, kind: output, shape index: {}]
  %s12 = sld [smem:[#allocation0]]
  $region54: #{tpu_custom_call.1} parent=0
    _
  %s14 = ssub.s32 1, %s12
  %s15 = scalar_select 0, %s14, %s12
  // Predicated region
  $region2: #{tpu_custom_call.1} parent=0 // pred_check
    _
  $region3: #{tpu_custom_call.1} parent=0 // pred_check_branch
    %17 = sbr.rel (0) target = $region5
  $region4: #{tpu_custom_call.1} parent=0 // pred_region
    _
  $region5: #{tpu_custom_call.1} parent=0 // pred_fallthru
    _
  // Predicated region
  $region6: #{tpu_custom_call.1} parent=0 // pred_check
    _
  $region7: #{tpu_custom_call.1} parent=0 // pred_check_branch
    %19 = sbr.rel (0) target = $region9
  $region8: #{tpu_custom_call.1} parent=0 // pred_region
    _
  $region9: #{tpu_custom_call.1} parent=0 // pred_fallthru
    _
  // Predicated region
  $region10: #{tpu_custom_call.1} parent=0 // pred_check
    _
  $region11: #{tpu_custom_call.1} parent=0 // pred_check_branch
    %21 = sbr.rel (0) target = $region13
  $region12: #{tpu_custom_call.1} parent=0 // pred_region
    _
  $region13: #{tpu_custom_call.1} parent=0 // pred_fallthru
    _
  // Predicated region
  $region14: #{tpu_custom_call.1} parent=0 // pred_check
    _
  $region15: #{tpu_custom_call.1} parent=0 // pred_check_branch
    %23 = sbr.rel (0) target = $region17
  $region16: #{tpu_custom_call.1} parent=0 // pred_region
    _
  $region17: #{tpu_custom_call.1} parent=0 // pred_fallthru
    _
  // Predicated region
  $region18: #{tpu_custom_call.1} parent=0 // pred_check
    _
  $region19: #{tpu_custom_call.1} parent=0 // pred_check_branch
    %25 = sbr.rel (0) target = $region21
  $region20: #{tpu_custom_call.1} parent=0 // pred_region
    _
  $region21: #{tpu_custom_call.1} parent=0 // pred_fallthru
    _
  // Predicated region
  $region22: #{tpu_custom_call.1} parent=0 // pred_check
    _
  $region23: #{tpu_custom_call.1} parent=0 // pred_check_branch
    %27 = sbr.rel (0) target = $region25
  $region24: #{tpu_custom_call.1} parent=0 // pred_region
    _
  $region25: #{tpu_custom_call.1} parent=0 // pred_fallthru
    _
  // Predicated region
  $region26: #{tpu_custom_call.1} parent=0 // pred_check
    _
  $region27: #{tpu_custom_call.1} parent=0 // pred_check_branch
    %29 = sbr.rel (0) target = $region29
  $region28: #{tpu_custom_call.1} parent=0 // pred_region
    _
  $region29: #{tpu_custom_call.1} parent=0 // pred_fallthru
    _
  // Predicated region
  $region30: #{tpu_custom_call.1} parent=0 // pred_check
    _
  $region31: #{tpu_custom_call.1} parent=0 // pred_check_branch
    %31 = sbr.rel (0) target = $region33
  $region32: #{tpu_custom_call.1} parent=0 // pred_region
    _
  $region33: #{tpu_custom_call.1} parent=0 // pred_fallthru
    _
  // Predicated region
  $region34: #{tpu_custom_call.1} parent=0 // pred_check
    _
  $region35: #{tpu_custom_call.1} parent=0 // pred_check_branch
    %33 = sbr.rel (0) target = $region37
  $region36: #{tpu_custom_call.1} parent=0 // pred_region
    _
  $region37: #{tpu_custom_call.1} parent=0 // pred_fallthru
    _
  // Predicated region
  $region38: #{tpu_custom_call.1} parent=0 // pred_check
    _
  $region39: #{tpu_custom_call.1} parent=0 // pred_check_branch
    %35 = sbr.rel (0) target = $region41
  $region40: #{tpu_custom_call.1} parent=0 // pred_region
    _
  $region41: #{tpu_custom_call.1} parent=0 // pred_fallthru
    _
  // Predicated region
  $region42: #{tpu_custom_call.1} parent=0 // pred_check
    _
  $region43: #{tpu_custom_call.1} parent=0 // pred_check_branch
    %37 = sbr.rel (0) target = $region45
  $region44: #{tpu_custom_call.1} parent=0 // pred_region
    _
  $region45: #{tpu_custom_call.1} parent=0 // pred_fallthru
    _
  %v39 = vld [vmem:[%s0] sm:$0xff]
  %v40 = vld [vmem:[%s0 + $0x8] sm:$0xff]
  %v41 = vld [vmem:[%s1] sm:$0xff]
  %v42 = vld [vmem:[%s1 + $0x8] sm:$0xff]
  %v43 = vld [vmem:[%s2] sm:$0xff]
  %v44 = vld [vmem:[%s2 + $0x8] sm:$0xff]
  %v45 = vld [vmem:[%s2 + $0x10] sm:$0xff]
  %v46 = vld [vmem:[%s2 + $0x18] sm:$0xff]
  %v47 = vld [vmem:[%s2 + $0x20] sm:$0xff]
  %v48 = vld [vmem:[%s2 + $0x28] sm:$0xff]
  %v49 = vld [vmem:[%s2 + $0x30] sm:$0xff]
  %v50 = vld [vmem:[%s2 + $0x38] sm:$0xff]
  %v51 = vld [vmem:[%s3] sm:$0x3]
  %v52 = vld [vmem:[%s4] sm:$0xf]
  %v53 = vld [vmem:[%s4 + $0x4] sm:$0xf]
  %v54 = vld [vmem:[%s4 + $0x8] sm:$0xf]
  %v55 = vld [vmem:[%s4 + $0xc] sm:$0xf]
  %v56 = vld [vmem:[%s4 + $0x10] sm:$0xf]
  %v57 = vld [vmem:[%s4 + $0x14] sm:$0xf]
  %v58 = vld [vmem:[%s4 + $0x18] sm:$0xf]
  %v59 = vld [vmem:[%s4 + $0x1c] sm:$0xf]
  %v60 = vld [vmem:[%s5] sm:$0x3f]
  %v61 = vld [vmem:[%s6] sm:$0xff]
  %v62 = vld [vmem:[%s6 + $0x8] sm:$0xff]
  %v63 = vld [vmem:[%s6 + $0x10] sm:$0xff]
  %v64 = vld [vmem:[%s6 + $0x18] sm:$0xff]
  %v65 = vld [vmem:[%s6 + $0x20] sm:$0xff]
  %v66 = vld [vmem:[%s6 + $0x28] sm:$0xff]
  %v67 = vld [vmem:[%s6 + $0x30] sm:$0xff]
  %v68 = vld [vmem:[%s6 + $0x38] sm:$0xff]
  %v69 = vld [vmem:[%s7] sm:$0x3]
  %v70 = vld [vmem:[%s8] sm:$0xf]
  %v71 = vld [vmem:[%s8 + $0x4] sm:$0xf]
  %v72 = vld [vmem:[%s8 + $0x8] sm:$0xf]
  %v73 = vld [vmem:[%s8 + $0xc] sm:$0xf]
  %v74 = vld [vmem:[%s8 + $0x10] sm:$0xf]
  %v75 = vld [vmem:[%s8 + $0x14] sm:$0xf]
  %v76 = vld [vmem:[%s8 + $0x18] sm:$0xf]
  %v77 = vld [vmem:[%s8 + $0x1c] sm:$0xf]
  %v78 = vld [vmem:[%s8 + $0x20] sm:$0xf]
  %v79 = vld [vmem:[%s8 + $0x24] sm:$0xf]
  %v80 = vld [vmem:[%s8 + $0x28] sm:$0xf]
  %v81 = vld [vmem:[%s8 + $0x2c] sm:$0xf]
  %v82 = vld [vmem:[%s8 + $0x30] sm:$0xf]
  %v83 = vld [vmem:[%s8 + $0x34] sm:$0xf]
  %v84 = vld [vmem:[%s8 + $0x38] sm:$0xf]
  %v85 = vld [vmem:[%s8 + $0x3c] sm:$0xf]
  %v86 = vld [vmem:[%s8 + $0x40] sm:$0xf]
  %v87 = vld [vmem:[%s8 + $0x44] sm:$0xf]
  %v88 = vld [vmem:[%s8 + $0x48] sm:$0xf]
  %v89 = vld [vmem:[%s8 + $0x4c] sm:$0xf]
  %v90 = vld [vmem:[%s8 + $0x50] sm:$0xf]
  %v91 = vld [vmem:[%s8 + $0x54] sm:$0xf]
  %v92 = vld [vmem:[%s8 + $0x58] sm:$0xf]
  %v93 = vld [vmem:[%s8 + $0x5c] sm:$0xf]
  %v94 = vld [vmem:[%s8 + $0x60] sm:$0xf]
  %v95 = vld [vmem:[%s8 + $0x64] sm:$0xf]
  %v96 = vld [vmem:[%s8 + $0x68] sm:$0xf]
  %v97 = vld [vmem:[%s8 + $0x6c] sm:$0xf]
  %v98 = vld [vmem:[%s8 + $0x70] sm:$0xf]
  %v99 = vld [vmem:[%s8 + $0x74] sm:$0xf]
  %v100 = vld [vmem:[%s8 + $0x78] sm:$0xf]
  %v101 = vld [vmem:[%s8 + $0x7c] sm:$0xf]
  %vm102 = vcmask 523264
  %v103 = vsel %vm102, %v39, 0.0
  %104 = vadd.xlane.f32.xlu0 %v103
  %v105 = vpop.xlane.xlu0 %104
  %v106 = vsel %vm102, %v40, 0.0
  %107 = vadd.xlane.f32.xlu0 %v106
  %v108 = vpop.xlane.xlu0 %107
  %v109 = vrcp.pop 64.0
  %v110 = vmul.f32 %v105, %v109
  %v111 = vmul.f32 %v108, %v109
  %v112 = vsub.f32 %v39, %v110
  %v113 = vsub.f32 %v40, %v111
  %v114 = vmul.f32 %v112, %v112
  %v115 = vmul.f32 %v113, %v113
  %v116 = vsel %vm102, %v114, 0.0
  %117 = vadd.xlane.f32.xlu0 %v116
  %v118 = vpop.xlane.xlu0 %117
  %v119 = vsel %vm102, %v115, 0.0
  %120 = vadd.xlane.f32.xlu0 %v119
  %v121 = vpop.xlane.xlu0 %120
  %v122 = vmul.f32 %v118, %v109
  %v123 = vmul.f32 %v121, %v109
  %v124 = vadd.f32 %v122, 1e-05
  %v125 = vadd.f32 %v123, 1e-05
  %v126 = vrsqrt.pop %v124
  %v127 = vrsqrt.pop %v125
  %v128 = vmul.f32 %v112, %v126
  %v129 = vmul.f32 %v113, %v127
  %v130 = vlaneseq
  %v131 = vshrl.u32 %v130, 7
  %v132 = vsub.s32 0, %v131
  %v133 = vrot.slane %v60, %v132
  %v134 = vmul.f32 %v128, %v133
  %v135 = vmul.f32 %v129, %v133
  %v136 = vlaneseq
  %v137 = vshrl.u32 %v136, 7
  %v138 = vsub.s32 1, %v137
  %v139 = vrot.slane %v60, %v138
  %v140 = vadd.f32 %v134, %v139
  %v141 = vadd.f32 %v135, %v139
  %v142 = vpack.c.bf16 %v141, %v140
  %v144 = vlaneseq
  %v145 = vshrl.u32 %v144, 7
  %v146 = vsub.s32 0, %v145
  %v147 = vrot.slane %v51, %v146
  %v148 = vlaneseq
  %v149 = vshrl.u32 %v148, 7
  %v150 = vsub.s32 1, %v149
  %v151 = vrot.slane %v51, %v150
  %v162 = vunpack.c.l.b16 %v43
  %v163 = vunpack.c.h.b16 %v43
  %v164 = vunpack.c.l.b16 %v44
  %v165 = vunpack.c.h.b16 %v44
  %v166 = vunpack.c.l.b16 %v45
  %v167 = vunpack.c.h.b16 %v45
  %v168 = vunpack.c.l.b16 %v46
  %v169 = vunpack.c.h.b16 %v46
  %v170 = vunpack.c.l.b16 %v47
  %v171 = vunpack.c.h.b16 %v47
  %v172 = vunpack.c.l.b16 %v48
  %v173 = vunpack.c.h.b16 %v48
  %v174 = vunpack.c.l.b16 %v49
  %v175 = vunpack.c.h.b16 %v49
  %v176 = vunpack.c.l.b16 %v50
  %v177 = vunpack.c.h.b16 %v50
  %v178 = vpack.c.b16 %v164, %v162
  %v179 = vpack.c.b16 %v165, %v163
  %v180 = vpack.c.b16 %v168, %v166
  %v181 = vpack.c.b16 %v169, %v167
  %v182 = vpack.c.b16 %v172, %v170
  %v183 = vpack.c.b16 %v173, %v171
  %v184 = vpack.c.b16 %v176, %v174
  %v185 = vpack.c.b16 %v177, %v175
  %v195 = vsel %vm102, %v142, 0
  %197 = vmatprep.subr.bf16.mxu0 %v179
  %198 = vmatpush1.bf16.msra.mxu0 %v178
  %199 = vmatprep.subr.bf16.mxu0 %v181
  %200 = vmatpush1.bf16.msra.mxu0 %v180
  %201 = vmatprep.subr.bf16.mxu0 %v183
  %202 = vmatpush1.bf16.msra.mxu0 %v182
  %203 = vmatprep.subr.bf16.mxu0 %v185
  %204 = vmatpush1.bf16.msra.mxu0 %v184
  %205 = vmatprep.subr.bf16.mxu0 0
  %206 = vmatpush1.bf16.msra.mxu0 0
  %207 = vmatprep.subr.bf16.mxu0 0
  %208 = vmatpush1.bf16.msra.mxu0 0
  %209 = vmatprep.subr.bf16.mxu0 0
  %210 = vmatpush1.bf16.msra.mxu0 0
  %211 = vmatprep.subr.bf16.mxu0 0
  %212 = vmatpush1.bf16.msra.mxu0 0
  %213 = vmatprep.subr.bf16.mxu0 0
  %214 = vmatpush1.bf16.msra.mxu0 0
  %215 = vmatprep.subr.bf16.mxu0 0
  %216 = vmatpush1.bf16.msra.mxu0 0
  %217 = vmatprep.subr.bf16.mxu0 0
  %218 = vmatpush1.bf16.msra.mxu0 0
  %219 = vmatprep.subr.bf16.mxu0 0
  %220 = vmatpush1.bf16.msra.mxu0 0
  %221 = vmatprep.subr.bf16.mxu0 0
  %222 = vmatpush1.bf16.msra.mxu0 0
  %223 = vmatprep.subr.bf16.mxu0 0
  %224 = vmatpush1.bf16.msra.mxu0 0
  %225 = vmatprep.subr.bf16.mxu0 0
  %226 = vmatpush1.bf16.msra.mxu0 0
  %227 = vmatprep.subr.bf16.mxu0 0
  %228 = vmatpush1.bf16.msra.mxu0 0
  %229 = vmatprep.mubr.bf16.mxu0 0
  %230 = vmatmul.mubr.bf16.gmra.mrb[0].mxu0 %v195
  %v231 = vpop.f32.mrb[0].mxu0
  %v232 = vadd.f32 %v147, %v231
  %v233 = vpop.f32.mrb[0].mxu0
  %v234 = vadd.f32 %v151, %v233
  %v235 = vpop.f32.mrb[0].mxu0
  %v236 = vadd.f32 %v147, %v235
  %v237 = vpop.f32.mrb[0].mxu0
  %v238 = vadd.f32 %v151, %v237
  %239 = vdwg.mxu0
  %v240 = vpack.c.bf16 %v236, %v232
  %v241 = vpack.c.bf16 %v238, %v234
  %243 = vrot.lane.b32.xlu0 %v240, 64
  %v244 = vpop.permute.xlu0 %243
  %vm245 = vcmask 130048
  %v247 = vsel %vm245, %v240, 0
  %v250 = vsel %vm245, %v244, 0
  %252 = vmatprep.subr.bf16.mxu0 0
  %253 = vmatpush1.bf16.xpose.msra.mxu0 %v250
  %254 = vmatprep.subr.bf16.mxu0 0
  %255 = vmatpush1.bf16.xpose.msra.mxu0 0
  %256 = vmatprep.subr.bf16.mxu0 0
  %257 = vmatpush1.bf16.xpose.msra.mxu0 0
  %258 = vmatprep.subr.bf16.mxu0 0
  %259 = vmatpush1.bf16.xpose.msra.mxu0 0
  %260 = vmatprep.subr.bf16.mxu0 0
  %261 = vmatpush1.bf16.xpose.msra.mxu0 0
  %262 = vmatprep.subr.bf16.mxu0 0
  %263 = vmatpush1.bf16.xpose.msra.mxu0 0
  %264 = vmatprep.subr.bf16.mxu0 0
  %265 = vmatpush1.bf16.xpose.msra.mxu0 0
  %266 = vmatprep.subr.bf16.mxu0 0
  %267 = vmatpush1.bf16.xpose.msra.mxu0 0
  %268 = vmatprep.subr.bf16.mxu0 0
  %269 = vmatpush1.bf16.xpose.msra.mxu0 0
  %270 = vmatprep.subr.bf16.mxu0 0
  %271 = vmatpush1.bf16.xpose.msra.mxu0 0
  %272 = vmatprep.subr.bf16.mxu0 0
  %273 = vmatpush1.bf16.xpose.msra.mxu0 0
  %274 = vmatprep.subr.bf16.mxu0 0
  %275 = vmatpush1.bf16.xpose.msra.mxu0 0
  %276 = vmatprep.subr.bf16.mxu0 0
  %277 = vmatpush1.bf16.xpose.msra.mxu0 0
  %278 = vmatprep.subr.bf16.mxu0 0
  %279 = vmatpush1.bf16.xpose.msra.mxu0 0
  %280 = vmatprep.subr.bf16.mxu0 0
  %281 = vmatpush1.bf16.xpose.msra.mxu0 0
  %282 = vmatprep.subr.bf16.mxu0 0
  %283 = vmatpush1.bf16.xpose.msra.mxu0 0
  %284 = vmatprep.mubr.bf16.mxu0 0
  %285 = vmatmul.mubr.bf16.gmra.mrb[0].mxu0 %v247
  %v286 = vpop.f32.mrb[0].mxu0
  %v287 = vadd.f32 0.0, %v286
  %v288 = vpop.f32.mrb[0].mxu0
  %v289 = vpop.f32.mrb[0].mxu0
  %v290 = vadd.f32 0.0, %v289
  %v291 = vpop.f32.mrb[0].mxu0
  %292 = vdwg.mxu0
  %v293 = vmul.f32 %v287, 0.25
  %v294 = vmul.f32 %v290, 0.25
  %v295 = vadd.f32 %v293, %v41
  %v296 = vadd.f32 %v294, %v42
  %v297 = vsel %vm245, %v295, -inf
  %298 = vmax.xlane.f32.xlu0 %v297
  %v299 = vpop.xlane.xlu0 %298
  %v300 = vsel %vm245, %v296, -inf
  %301 = vmax.xlane.f32.xlu0 %v300
  %v302 = vpop.xlane.xlu0 %301
  %v303 = vsub.f32 %v295, %v299
  %v304 = vsub.f32 %v296, %v302
  %v305 = vmul.f32 %v303, 1.442695
  %v306 = vpow.pop %v305
  %v307 = vmul.f32 %v304, 1.442695
  %v308 = vpow.pop %v307
  %v309 = vsel %vm245, %v306, 0.0
  %310 = vadd.xlane.f32.xlu0 %v309
  %v311 = vpop.xlane.xlu0 %310
  %v312 = vsel %vm245, %v308, 0.0
  %313 = vadd.xlane.f32.xlu0 %v312
  %v314 = vpop.xlane.xlu0 %313
  %v315 = vrcp.pop %v311
  %v316 = vrcp.pop %v314
  %v317 = vmul.f32 %v306, %v315
  %v318 = vmul.f32 %v308, %v316
  %v319 = vpack.c.bf16 %v318, %v317
  %v321 = vsel %vm245, %v319, 0
  %323 = vmatprep.subr.bf16.mxu0 0
  %324 = vmatpush1.bf16.msra.mxu0 %v241
  %325 = vmatprep.subr.bf16.mxu0 0
  %326 = vmatpush1.bf16.msra.mxu0 0
  %327 = vmatprep.subr.bf16.mxu0 0
  %328 = vmatpush1.bf16.msra.mxu0 0
  %329 = vmatprep.subr.bf16.mxu0 0
  %330 = vmatpush1.bf16.msra.mxu0 0
  %331 = vmatprep.subr.bf16.mxu0 0
  %332 = vmatpush1.bf16.msra.mxu0 0
  %333 = vmatprep.subr.bf16.mxu0 0
  %334 = vmatpush1.bf16.msra.mxu0 0
  %335 = vmatprep.subr.bf16.mxu0 0
  %336 = vmatpush1.bf16.msra.mxu0 0
  %337 = vmatprep.subr.bf16.mxu0 0
  %338 = vmatpush1.bf16.msra.mxu0 0
  %339 = vmatprep.subr.bf16.mxu0 0
  %340 = vmatpush1.bf16.msra.mxu0 0
  %341 = vmatprep.subr.bf16.mxu0 0
  %342 = vmatpush1.bf16.msra.mxu0 0
  %343 = vmatprep.subr.bf16.mxu0 0
  %344 = vmatpush1.bf16.msra.mxu0 0
  %345 = vmatprep.subr.bf16.mxu0 0
  %346 = vmatpush1.bf16.msra.mxu0 0
  %347 = vmatprep.subr.bf16.mxu0 0
  %348 = vmatpush1.bf16.msra.mxu0 0
  %349 = vmatprep.subr.bf16.mxu0 0
  %350 = vmatpush1.bf16.msra.mxu0 0
  %351 = vmatprep.subr.bf16.mxu0 0
  %352 = vmatpush1.bf16.msra.mxu0 0
  %353 = vmatprep.subr.bf16.mxu0 0
  %354 = vmatpush1.bf16.msra.mxu0 0
  %355 = vmatprep.mubr.bf16.mxu0 0
  %356 = vmatmul.mubr.bf16.gmra.mrb[0].mxu0 %v321
  %v357 = vpop.f32.mrb[0].mxu0
  %v358 = vadd.f32 0.0, %v357
  %v359 = vpop.f32.mrb[0].mxu0
  %v360 = vpop.f32.mrb[0].mxu0
  %v361 = vadd.f32 0.0, %v360
  %v362 = vpop.f32.mrb[0].mxu0
  %363 = vdwg.mxu0
  %364 = vrot.lane.b32.xlu0 %v240, 112
  %v365 = vpop.permute.xlu0 %364
  %366 = vrot.lane.b32.xlu0 %v240, 48
  %v367 = vpop.permute.xlu0 %366
  %v369 = vsel %vm245, %v365, 0
  %v372 = vsel %vm245, %v367, 0
  %374 = vmatprep.subr.bf16.mxu0 0
  %375 = vmatpush1.bf16.xpose.msra.mxu0 %v372
  %376 = vmatprep.subr.bf16.mxu0 0
  %377 = vmatpush1.bf16.xpose.msra.mxu0 0
  %378 = vmatprep.subr.bf16.mxu0 0
  %379 = vmatpush1.bf16.xpose.msra.mxu0 0
  %380 = vmatprep.subr.bf16.mxu0 0
  %381 = vmatpush1.bf16.xpose.msra.mxu0 0
  %382 = vmatprep.subr.bf16.mxu0 0
  %383 = vmatpush1.bf16.xpose.msra.mxu0 0
  %384 = vmatprep.subr.bf16.mxu0 0
  %385 = vmatpush1.bf16.xpose.msra.mxu0 0
  %386 = vmatprep.subr.bf16.mxu0 0
  %387 = vmatpush1.bf16.xpose.msra.mxu0 0
  %388 = vmatprep.subr.bf16.mxu0 0
  %389 = vmatpush1.bf16.xpose.msra.mxu0 0
  %390 = vmatprep.subr.bf16.mxu0 0
  %391 = vmatpush1.bf16.xpose.msra.mxu0 0
  %392 = vmatprep.subr.bf16.mxu0 0
  %393 = vmatpush1.bf16.xpose.msra.mxu0 0
  %394 = vmatprep.subr.bf16.mxu0 0
  %395 = vmatpush1.bf16.xpose.msra.mxu0 0
  %396 = vmatprep.subr.bf16.mxu0 0
  %397 = vmatpush1.bf16.xpose.msra.mxu0 0
  %398 = vmatprep.subr.bf16.mxu0 0
  %399 = vmatpush1.bf16.xpose.msra.mxu0 0
  %400 = vmatprep.subr.bf16.mxu0 0
  %401 = vmatpush1.bf16.xpose.msra.mxu0 0
  %402 = vmatprep.subr.bf16.mxu0 0
  %403 = vmatpush1.bf16.xpose.msra.mxu0 0
  %404 = vmatprep.subr.bf16.mxu0 0
  %405 = vmatpush1.bf16.xpose.msra.mxu0 0
  %406 = vmatprep.mubr.bf16.mxu0 0
  %407 = vmatmul.mubr.bf16.gmra.mrb[0].mxu0 %v369
  %v408 = vpop.f32.mrb[0].mxu0
  %v409 = vadd.f32 0.0, %v408
  %v410 = vpop.f32.mrb[0].mxu0
  %v411 = vpop.f32.mrb[0].mxu0
  %v412 = vadd.f32 0.0, %v411
  %v413 = vpop.f32.mrb[0].mxu0
  %414 = vdwg.mxu0
  %v415 = vmul.f32 %v409, 0.25
  %v416 = vmul.f32 %v412, 0.25
  %v417 = vadd.f32 %v415, %v41
  %v418 = vadd.f32 %v416, %v42
  %v419 = vsel %vm245, %v417, -inf
  %420 = vmax.xlane.f32.xlu0 %v419
  %v421 = vpop.xlane.xlu0 %420
  %v422 = vsel %vm245, %v418, -inf
  %423 = vmax.xlane.f32.xlu0 %v422
  %v424 = vpop.xlane.xlu0 %423
  %v425 = vsub.f32 %v417, %v421
  %v426 = vsub.f32 %v418, %v424
  %v427 = vmul.f32 %v425, 1.442695
  %v428 = vpow.pop %v427
  %v429 = vmul.f32 %v426, 1.442695
  %v430 = vpow.pop %v429
  %v431 = vsel %vm245, %v428, 0.0
  %432 = vadd.xlane.f32.xlu0 %v431
  %v433 = vpop.xlane.xlu0 %432
  %v434 = vsel %vm245, %v430, 0.0
  %435 = vadd.xlane.f32.xlu0 %v434
  %v436 = vpop.xlane.xlu0 %435
  %v437 = vrcp.pop %v433
  %v438 = vrcp.pop %v436
  %v439 = vmul.f32 %v428, %v437
  %v440 = vmul.f32 %v430, %v438
  %v441 = vpack.c.bf16 %v440, %v439
  %443 = vrot.lane.b32.xlu0 %v241, 112
  %v444 = vpop.permute.xlu0 %443
  %v447 = vsel %vm245, %v441, 0
  %449 = vmatprep.subr.bf16.mxu0 0
  %450 = vmatpush1.bf16.msra.mxu0 %v444
  %451 = vmatprep.subr.bf16.mxu0 0
  %452 = vmatpush1.bf16.msra.mxu0 0
  %453 = vmatprep.subr.bf16.mxu0 0
  %454 = vmatpush1.bf16.msra.mxu0 0
  %455 = vmatprep.subr.bf16.mxu0 0
  %456 = vmatpush1.bf16.msra.mxu0 0
  %457 = vmatprep.subr.bf16.mxu0 0
  %458 = vmatpush1.bf16.msra.mxu0 0
  %459 = vmatprep.subr.bf16.mxu0 0
  %460 = vmatpush1.bf16.msra.mxu0 0
  %461 = vmatprep.subr.bf16.mxu0 0
  %462 = vmatpush1.bf16.msra.mxu0 0
  %463 = vmatprep.subr.bf16.mxu0 0
  %464 = vmatpush1.bf16.msra.mxu0 0
  %465 = vmatprep.subr.bf16.mxu0 0
  %466 = vmatpush1.bf16.msra.mxu0 0
  %467 = vmatprep.subr.bf16.mxu0 0
  %468 = vmatpush1.bf16.msra.mxu0 0
  %469 = vmatprep.subr.bf16.mxu0 0
  %470 = vmatpush1.bf16.msra.mxu0 0
  %471 = vmatprep.subr.bf16.mxu0 0
  %472 = vmatpush1.bf16.msra.mxu0 0
  %473 = vmatprep.subr.bf16.mxu0 0
  %474 = vmatpush1.bf16.msra.mxu0 0
  %475 = vmatprep.subr.bf16.mxu0 0
  %476 = vmatpush1.bf16.msra.mxu0 0
  %477 = vmatprep.subr.bf16.mxu0 0
  %478 = vmatpush1.bf16.msra.mxu0 0
  %479 = vmatprep.subr.bf16.mxu0 0
  %480 = vmatpush1.bf16.msra.mxu0 0
  %481 = vmatprep.mubr.bf16.mxu0 0
  %482 = vmatmul.mubr.bf16.gmra.mrb[0].mxu0 %v447
  %v483 = vpop.f32.mrb[0].mxu0
  %v484 = vadd.f32 0.0, %v483
  %v485 = vpop.f32.mrb[0].mxu0
  %v486 = vpop.f32.mrb[0].mxu0
  %v487 = vadd.f32 0.0, %v486
  %v488 = vpop.f32.mrb[0].mxu0
  %489 = vdwg.mxu0
  %490 = vrot.lane.b32.xlu0 %v240, 96
  %v491 = vpop.permute.xlu0 %490
  %492 = vrot.lane.b32.xlu0 %v240, 32
  %v493 = vpop.permute.xlu0 %492
  %v495 = vsel %vm245, %v491, 0
  %v498 = vsel %vm245, %v493, 0
  %500 = vmatprep.subr.bf16.mxu0 0
  %501 = vmatpush1.bf16.xpose.msra.mxu0 %v498
  %502 = vmatprep.subr.bf16.mxu0 0
  %503 = vmatpush1.bf16.xpose.msra.mxu0 0
  %504 = vmatprep.subr.bf16.mxu0 0
  %505 = vmatpush1.bf16.xpose.msra.mxu0 0
  %506 = vmatprep.subr.bf16.mxu0 0
  %507 = vmatpush1.bf16.xpose.msra.mxu0 0
  %508 = vmatprep.subr.bf16.mxu0 0
  %509 = vmatpush1.bf16.xpose.msra.mxu0 0
  %510 = vmatprep.subr.bf16.mxu0 0
  %511 = vmatpush1.bf16.xpose.msra.mxu0 0
  %512 = vmatprep.subr.bf16.mxu0 0
  %513 = vmatpush1.bf16.xpose.msra.mxu0 0
  %514 = vmatprep.subr.bf16.mxu0 0
  %515 = vmatpush1.bf16.xpose.msra.mxu0 0
  %516 = vmatprep.subr.bf16.mxu0 0
  %517 = vmatpush1.bf16.xpose.msra.mxu0 0
  %518 = vmatprep.subr.bf16.mxu0 0
  %519 = vmatpush1.bf16.xpose.msra.mxu0 0
  %520 = vmatprep.subr.bf16.mxu0 0
  %521 = vmatpush1.bf16.xpose.msra.mxu0 0
  %522 = vmatprep.subr.bf16.mxu0 0
  %523 = vmatpush1.bf16.xpose.msra.mxu0 0
  %524 = vmatprep.subr.bf16.mxu0 0
  %525 = vmatpush1.bf16.xpose.msra.mxu0 0
  %526 = vmatprep.subr.bf16.mxu0 0
  %527 = vmatpush1.bf16.xpose.msra.mxu0 0
  %528 = vmatprep.subr.bf16.mxu0 0
  %529 = vmatpush1.bf16.xpose.msra.mxu0 0
  %530 = vmatprep.subr.bf16.mxu0 0
  %531 = vmatpush1.bf16.xpose.msra.mxu0 0
  %532 = vmatprep.mubr.bf16.mxu0 0
  %533 = vmatmul.mubr.bf16.gmra.mrb[0].mxu0 %v495
  %v534 = vpop.f32.mrb[0].mxu0
  %v535 = vadd.f32 0.0, %v534
  %v536 = vpop.f32.mrb[0].mxu0
  %v537 = vpop.f32.mrb[0].mxu0
  %v538 = vadd.f32 0.0, %v537
  %v539 = vpop.f32.mrb[0].mxu0
  %540 = vdwg.mxu0
  %v541 = vmul.f32 %v535, 0.25
  %v542 = vmul.f32 %v538, 0.25
  %v543 = vadd.f32 %v541, %v41
  %v544 = vadd.f32 %v542, %v42
  %v545 = vsel %vm245, %v543, -inf
  %546 = vmax.xlane.f32.xlu0 %v545
  %v547 = vpop.xlane.xlu0 %546
  %v548 = vsel %vm245, %v544, -inf
  %549 = vmax.xlane.f32.xlu0 %v548
  %v550 = vpop.xlane.xlu0 %549
  %v551 = vsub.f32 %v543, %v547
  %v552 = vsub.f32 %v544, %v550
  %v553 = vmul.f32 %v551, 1.442695
  %v554 = vpow.pop %v553
  %v555 = vmul.f32 %v552, 1.442695
  %v556 = vpow.pop %v555
  %v557 = vsel %vm245, %v554, 0.0
  %558 = vadd.xlane.f32.xlu0 %v557
  %v559 = vpop.xlane.xlu0 %558
  %v560 = vsel %vm245, %v556, 0.0
  %561 = vadd.xlane.f32.xlu0 %v560
  %v562 = vpop.xlane.xlu0 %561
  %v563 = vrcp.pop %v559
  %v564 = vrcp.pop %v562
  %v565 = vmul.f32 %v554, %v563
  %v566 = vmul.f32 %v556, %v564
  %v567 = vpack.c.bf16 %v566, %v565
  %568 = vrot.lane.b32.xlu0 %v241, 96
  %v569 = vpop.permute.xlu0 %568
  %v572 = vsel %vm245, %v567, 0
  %574 = vmatprep.subr.bf16.mxu0 0
  %575 = vmatpush1.bf16.msra.mxu0 %v569
  %576 = vmatprep.subr.bf16.mxu0 0
  %577 = vmatpush1.bf16.msra.mxu0 0
  %578 = vmatprep.subr.bf16.mxu0 0
  %579 = vmatpush1.bf16.msra.mxu0 0
  %580 = vmatprep.subr.bf16.mxu0 0
  %581 = vmatpush1.bf16.msra.mxu0 0
  %582 = vmatprep.subr.bf16.mxu0 0
  %583 = vmatpush1.bf16.msra.mxu0 0
  %584 = vmatprep.subr.bf16.mxu0 0
  %585 = vmatpush1.bf16.msra.mxu0 0
  %586 = vmatprep.subr.bf16.mxu0 0
  %587 = vmatpush1.bf16.msra.mxu0 0
  %588 = vmatprep.subr.bf16.mxu0 0
  %589 = vmatpush1.bf16.msra.mxu0 0
  %590 = vmatprep.subr.bf16.mxu0 0
  %591 = vmatpush1.bf16.msra.mxu0 0
  %592 = vmatprep.subr.bf16.mxu0 0
  %593 = vmatpush1.bf16.msra.mxu0 0
  %594 = vmatprep.subr.bf16.mxu0 0
  %595 = vmatpush1.bf16.msra.mxu0 0
  %596 = vmatprep.subr.bf16.mxu0 0
  %597 = vmatpush1.bf16.msra.mxu0 0
  %598 = vmatprep.subr.bf16.mxu0 0
  %599 = vmatpush1.bf16.msra.mxu0 0
  %600 = vmatprep.subr.bf16.mxu0 0
  %601 = vmatpush1.bf16.msra.mxu0 0
  %602 = vmatprep.subr.bf16.mxu0 0
  %603 = vmatpush1.bf16.msra.mxu0 0
  %604 = vmatprep.subr.bf16.mxu0 0
  %605 = vmatpush1.bf16.msra.mxu0 0
  %606 = vmatprep.mubr.bf16.mxu0 0
  %607 = vmatmul.mubr.bf16.gmra.mrb[0].mxu0 %v572
  %v608 = vpop.f32.mrb[0].mxu0
  %v609 = vadd.f32 0.0, %v608
  %v610 = vpop.f32.mrb[0].mxu0
  %v611 = vpop.f32.mrb[0].mxu0
  %v612 = vadd.f32 0.0, %v611
  %v613 = vpop.f32.mrb[0].mxu0
  %614 = vdwg.mxu0
  %615 = vrot.lane.b32.xlu0 %v240, 80
  %v616 = vpop.permute.xlu0 %615
  %617 = vrot.lane.b32.xlu0 %v240, 16
  %v618 = vpop.permute.xlu0 %617
  %v620 = vsel %vm245, %v616, 0
  %v623 = vsel %vm245, %v618, 0
  %625 = vmatprep.subr.bf16.mxu0 0
  %626 = vmatpush1.bf16.xpose.msra.mxu0 %v623
  %627 = vmatprep.subr.bf16.mxu0 0
  %628 = vmatpush1.bf16.xpose.msra.mxu0 0
  %629 = vmatprep.subr.bf16.mxu0 0
  %630 = vmatpush1.bf16.xpose.msra.mxu0 0
  %631 = vmatprep.subr.bf16.mxu0 0
  %632 = vmatpush1.bf16.xpose.msra.mxu0 0
  %633 = vmatprep.subr.bf16.mxu0 0
  %634 = vmatpush1.bf16.xpose.msra.mxu0 0
  %635 = vmatprep.subr.bf16.mxu0 0
  %636 = vmatpush1.bf16.xpose.msra.mxu0 0
  %637 = vmatprep.subr.bf16.mxu0 0
  %638 = vmatpush1.bf16.xpose.msra.mxu0 0
  %639 = vmatprep.subr.bf16.mxu0 0
  %640 = vmatpush1.bf16.xpose.msra.mxu0 0
  %641 = vmatprep.subr.bf16.mxu0 0
  %642 = vmatpush1.bf16.xpose.msra.mxu0 0
  %643 = vmatprep.subr.bf16.mxu0 0
  %644 = vmatpush1.bf16.xpose.msra.mxu0 0
  %645 = vmatprep.subr.bf16.mxu0 0
  %646 = vmatpush1.bf16.xpose.msra.mxu0 0
  %647 = vmatprep.subr.bf16.mxu0 0
  %648 = vmatpush1.bf16.xpose.msra.mxu0 0
  %649 = vmatprep.subr.bf16.mxu0 0
  %650 = vmatpush1.bf16.xpose.msra.mxu0 0
  %651 = vmatprep.subr.bf16.mxu0 0
  %652 = vmatpush1.bf16.xpose.msra.mxu0 0
  %653 = vmatprep.subr.bf16.mxu0 0
  %654 = vmatpush1.bf16.xpose.msra.mxu0 0
  %655 = vmatprep.subr.bf16.mxu0 0
  %656 = vmatpush1.bf16.xpose.msra.mxu0 0
  %657 = vmatprep.mubr.bf16.mxu0 0
  %658 = vmatmul.mubr.bf16.gmra.mrb[0].mxu0 %v620
  %v659 = vpop.f32.mrb[0].mxu0
  %v660 = vadd.f32 0.0, %v659
  %v661 = vpop.f32.mrb[0].mxu0
  %v662 = vpop.f32.mrb[0].mxu0
  %v663 = vadd.f32 0.0, %v662
  %v664 = vpop.f32.mrb[0].mxu0
  %665 = vdwg.mxu0
  %v666 = vmul.f32 %v660, 0.25
  %v667 = vmul.f32 %v663, 0.25
  %v668 = vadd.f32 %v666, %v41
  %v669 = vadd.f32 %v667, %v42
  %v670 = vsel %vm245, %v668, -inf
  %671 = vmax.xlane.f32.xlu0 %v670
  %v672 = vpop.xlane.xlu0 %671
  %v673 = vsel %vm245, %v669, -inf
  %674 = vmax.xlane.f32.xlu0 %v673
  %v675 = vpop.xlane.xlu0 %674
  %v676 = vsub.f32 %v668, %v672
  %v677 = vsub.f32 %v669, %v675
  %v678 = vmul.f32 %v676, 1.442695
  %v679 = vpow.pop %v678
  %v680 = vmul.f32 %v677, 1.442695
  %v681 = vpow.pop %v680
  %v682 = vsel %vm245, %v679, 0.0
  %683 = vadd.xlane.f32.xlu0 %v682
  %v684 = vpop.xlane.xlu0 %683
  %v685 = vsel %vm245, %v681, 0.0
  %686 = vadd.xlane.f32.xlu0 %v685
  %v687 = vpop.xlane.xlu0 %686
  %v688 = vrcp.pop %v684
  %v689 = vrcp.pop %v687
  %v690 = vmul.f32 %v679, %v688
  %v691 = vmul.f32 %v681, %v689
  %v692 = vpack.c.bf16 %v691, %v690
  %693 = vrot.lane.b32.xlu0 %v241, 80
  %v694 = vpop.permute.xlu0 %693
  %v697 = vsel %vm245, %v692, 0
  %699 = vmatprep.subr.bf16.mxu0 0
  %700 = vmatpush1.bf16.msra.mxu0 %v694
  %701 = vmatprep.subr.bf16.mxu0 0
  %702 = vmatpush1.bf16.msra.mxu0 0
  %703 = vmatprep.subr.bf16.mxu0 0
  %704 = vmatpush1.bf16.msra.mxu0 0
  %705 = vmatprep.subr.bf16.mxu0 0
  %706 = vmatpush1.bf16.msra.mxu0 0
  %707 = vmatprep.subr.bf16.mxu0 0
  %708 = vmatpush1.bf16.msra.mxu0 0
  %709 = vmatprep.subr.bf16.mxu0 0
  %710 = vmatpush1.bf16.msra.mxu0 0
  %711 = vmatprep.subr.bf16.mxu0 0
  %712 = vmatpush1.bf16.msra.mxu0 0
  %713 = vmatprep.subr.bf16.mxu0 0
  %714 = vmatpush1.bf16.msra.mxu0 0
  %715 = vmatprep.subr.bf16.mxu0 0
  %716 = vmatpush1.bf16.msra.mxu0 0
  %717 = vmatprep.subr.bf16.mxu0 0
  %718 = vmatpush1.bf16.msra.mxu0 0
  %719 = vmatprep.subr.bf16.mxu0 0
  %720 = vmatpush1.bf16.msra.mxu0 0
  %721 = vmatprep.subr.bf16.mxu0 0
  %722 = vmatpush1.bf16.msra.mxu0 0
  %723 = vmatprep.subr.bf16.mxu0 0
  %724 = vmatpush1.bf16.msra.mxu0 0
  %725 = vmatprep.subr.bf16.mxu0 0
  %726 = vmatpush1.bf16.msra.mxu0 0
  %727 = vmatprep.subr.bf16.mxu0 0
  %728 = vmatpush1.bf16.msra.mxu0 0
  %729 = vmatprep.subr.bf16.mxu0 0
  %730 = vmatpush1.bf16.msra.mxu0 0
  %731 = vmatprep.mubr.bf16.mxu0 0
  %732 = vmatmul.mubr.bf16.gmra.mrb[0].mxu0 %v697
  %v733 = vpop.f32.mrb[0].mxu0
  %v734 = vadd.f32 0.0, %v733
  %v735 = vpop.f32.mrb[0].mxu0
  %v736 = vpop.f32.mrb[0].mxu0
  %v737 = vadd.f32 0.0, %v736
  %v738 = vpop.f32.mrb[0].mxu0
  %739 = vdwg.mxu0
  %742 = vrot.lane.b32.xlu0 %v484, 16
  %v743 = vpop.permute.xlu0 %742
  %744 = vrot.lane.b32.xlu0 %v487, 16
  %v745 = vpop.permute.xlu0 %744
  %750 = vrot.lane.b32.xlu0 %v609, 32
  %v751 = vpop.permute.xlu0 %750
  %752 = vrot.lane.b32.xlu0 %v612, 32
  %v753 = vpop.permute.xlu0 %752
  %758 = vrot.lane.b32.xlu0 %v734, 48
  %v759 = vpop.permute.xlu0 %758
  %760 = vrot.lane.b32.xlu0 %v737, 48
  %v761 = vpop.permute.xlu0 %760
  %v764 = vsel %vm245, %v358, %v743
  %v765 = vsel %vm245, %v361, %v745
  %vm766 = vcmask 261120
  %v767 = vsel %vm766, %v764, %v751
  %v768 = vsel %vm766, %v765, %v753
  %vm769 = vcmask 392192
  %v770 = vsel %vm769, %v767, %v759
  %v771 = vsel %vm769, %v768, %v761
  %v772 = vpack.c.bf16 %v771, %v770
  %v773 = vlaneseq
  %v774 = vshrl.u32 %v773, 7
  %v775 = vsub.s32 4, %v774
  %v776 = vrot.slane %v60, %v775
  %v785 = vunpack.c.l.b16 %v52
  %v786 = vunpack.c.l.b16 %v53
  %v787 = vunpack.c.l.b16 %v54
  %v788 = vunpack.c.l.b16 %v55
  %v789 = vunpack.c.l.b16 %v56
  %v790 = vunpack.c.l.b16 %v57
  %v791 = vunpack.c.l.b16 %v58
  %v792 = vunpack.c.l.b16 %v59
  %v793 = vpack.c.b16 %v786, %v785
  %v794 = vpack.c.b16 %v788, %v787
  %v795 = vpack.c.b16 %v790, %v789
  %v796 = vpack.c.b16 %v792, %v791
  %v802 = vsel %vm102, %v772, 0
  %804 = vmatprep.subr.bf16.mxu0 0
  %805 = vmatpush1.bf16.msra.mxu0 %v793
  %806 = vmatprep.subr.bf16.mxu0 0
  %807 = vmatpush1.bf16.msra.mxu0 %v794
  %808 = vmatprep.subr.bf16.mxu0 0
  %809 = vmatpush1.bf16.msra.mxu0 %v795
  %810 = vmatprep.subr.bf16.mxu0 0
  %811 = vmatpush1.bf16.msra.mxu0 %v796
  %812 = vmatprep.subr.bf16.mxu0 0
  %813 = vmatpush1.bf16.msra.mxu0 0
  %814 = vmatprep.subr.bf16.mxu0 0
  %815 = vmatpush1.bf16.msra.mxu0 0
  %816 = vmatprep.subr.bf16.mxu0 0
  %817 = vmatpush1.bf16.msra.mxu0 0
  %818 = vmatprep.subr.bf16.mxu0 0
  %819 = vmatpush1.bf16.msra.mxu0 0
  %820 = vmatprep.subr.bf16.mxu0 0
  %821 = vmatpush1.bf16.msra.mxu0 0
  %822 = vmatprep.subr.bf16.mxu0 0
  %823 = vmatpush1.bf16.msra.mxu0 0
  %824 = vmatprep.subr.bf16.mxu0 0
  %825 = vmatpush1.bf16.msra.mxu0 0
  %826 = vmatprep.subr.bf16.mxu0 0
  %827 = vmatpush1.bf16.msra.mxu0 0
  %828 = vmatprep.subr.bf16.mxu0 0
  %829 = vmatpush1.bf16.msra.mxu0 0
  %830 = vmatprep.subr.bf16.mxu0 0
  %831 = vmatpush1.bf16.msra.mxu0 0
  %832 = vmatprep.subr.bf16.mxu0 0
  %833 = vmatpush1.bf16.msra.mxu0 0
  %834 = vmatprep.subr.bf16.mxu0 0
  %835 = vmatpush1.bf16.msra.mxu0 0
  %836 = vmatprep.mubr.bf16.mxu0 0
  %837 = vmatmul.mubr.bf16.gmra.mrb[0].mxu0 %v802
  %v838 = vpop.f32.mrb[0].mxu0
  %v839 = vadd.f32 %v776, %v838
  %v840 = vpop.f32.mrb[0].mxu0
  %v841 = vpop.f32.mrb[0].mxu0
  %v842 = vadd.f32 %v776, %v841
  %v843 = vpop.f32.mrb[0].mxu0
  %844 = vdwg.mxu0
  %v845 = vadd.f32 %v39, %v839
  %v846 = vadd.f32 %v40, %v842
  %v847 = vsel %vm102, %v845, 0.0
  %848 = vadd.xlane.f32.xlu0 %v847
  %v849 = vpop.xlane.xlu0 %848
  %v850 = vsel %vm102, %v846, 0.0
  %851 = vadd.xlane.f32.xlu0 %v850
  %v852 = vpop.xlane.xlu0 %851
  %v853 = vmul.f32 %v849, %v109
  %v854 = vmul.f32 %v852, %v109
  %v855 = vsub.f32 %v845, %v853
  %v856 = vsub.f32 %v846, %v854
  %v857 = vmul.f32 %v855, %v855
  %v858 = vmul.f32 %v856, %v856
  %v859 = vsel %vm102, %v857, 0.0
  %860 = vadd.xlane.f32.xlu0 %v859
  %v861 = vpop.xlane.xlu0 %860
  %v862 = vsel %vm102, %v858, 0.0
  %863 = vadd.xlane.f32.xlu0 %v862
  %v864 = vpop.xlane.xlu0 %863
  %v865 = vmul.f32 %v861, %v109
  %v866 = vmul.f32 %v864, %v109
  %v867 = vadd.f32 %v865, 1e-05
  %v868 = vadd.f32 %v866, 1e-05
  %v869 = vrsqrt.pop %v867
  %v870 = vrsqrt.pop %v868
  %v871 = vmul.f32 %v855, %v869
  %v872 = vmul.f32 %v856, %v870
  %v873 = vlaneseq
  %v874 = vshrl.u32 %v873, 7
  %v875 = vsub.s32 2, %v874
  %v876 = vrot.slane %v60, %v875
  %v877 = vmul.f32 %v871, %v876
  %v878 = vmul.f32 %v872, %v876
  %v879 = vlaneseq
  %v880 = vshrl.u32 %v879, 7
  %v881 = vsub.s32 3, %v880
  %v882 = vrot.slane %v60, %v881
  %v883 = vadd.f32 %v877, %v882
  %v884 = vadd.f32 %v878, %v882
  %v885 = vpack.c.bf16 %v884, %v883
  %v887 = vlaneseq
  %v888 = vshrl.u32 %v887, 7
  %v889 = vsub.s32 0, %v888
  %v890 = vrot.slane %v69, %v889
  %v891 = vlaneseq
  %v892 = vshrl.u32 %v891, 7
  %v893 = vsub.s32 1, %v892
  %v894 = vrot.slane %v69, %v893
  %v905 = vunpack.c.l.b16 %v61
  %v906 = vunpack.c.h.b16 %v61
  %v907 = vunpack.c.l.b16 %v62
  %v908 = vunpack.c.h.b16 %v62
  %v909 = vunpack.c.l.b16 %v63
  %v910 = vunpack.c.h.b16 %v63
  %v911 = vunpack.c.l.b16 %v64
  %v912 = vunpack.c.h.b16 %v64
  %v913 = vunpack.c.l.b16 %v65
  %v914 = vunpack.c.h.b16 %v65
  %v915 = vunpack.c.l.b16 %v66
  %v916 = vunpack.c.h.b16 %v66
  %v917 = vunpack.c.l.b16 %v67
  %v918 = vunpack.c.h.b16 %v67
  %v919 = vunpack.c.l.b16 %v68
  %v920 = vunpack.c.h.b16 %v68
  %v921 = vpack.c.b16 %v907, %v905
  %v922 = vpack.c.b16 %v908, %v906
  %v923 = vpack.c.b16 %v911, %v909
  %v924 = vpack.c.b16 %v912, %v910
  %v925 = vpack.c.b16 %v915, %v913
  %v926 = vpack.c.b16 %v916, %v914
  %v927 = vpack.c.b16 %v919, %v917
  %v928 = vpack.c.b16 %v920, %v918
  %v938 = vsel %vm102, %v885, 0
  %940 = vmatprep.subr.bf16.mxu0 %v922
  %941 = vmatpush1.bf16.msra.mxu0 %v921
  %942 = vmatprep.subr.bf16.mxu0 %v924
  %943 = vmatpush1.bf16.msra.mxu0 %v923
  %944 = vmatprep.subr.bf16.mxu0 %v926
  %945 = vmatpush1.bf16.msra.mxu0 %v925
  %946 = vmatprep.subr.bf16.mxu0 %v928
  %947 = vmatpush1.bf16.msra.mxu0 %v927
  %948 = vmatprep.subr.bf16.mxu0 0
  %949 = vmatpush1.bf16.msra.mxu0 0
  %950 = vmatprep.subr.bf16.mxu0 0
  %951 = vmatpush1.bf16.msra.mxu0 0
  %952 = vmatprep.subr.bf16.mxu0 0
  %953 = vmatpush1.bf16.msra.mxu0 0
  %954 = vmatprep.subr.bf16.mxu0 0
  %955 = vmatpush1.bf16.msra.mxu0 0
  %956 = vmatprep.subr.bf16.mxu0 0
  %957 = vmatpush1.bf16.msra.mxu0 0
  %958 = vmatprep.subr.bf16.mxu0 0
  %959 = vmatpush1.bf16.msra.mxu0 0
  %960 = vmatprep.subr.bf16.mxu0 0
  %961 = vmatpush1.bf16.msra.mxu0 0
  %962 = vmatprep.subr.bf16.mxu0 0
  %963 = vmatpush1.bf16.msra.mxu0 0
  %964 = vmatprep.subr.bf16.mxu0 0
  %965 = vmatpush1.bf16.msra.mxu0 0
  %966 = vmatprep.subr.bf16.mxu0 0
  %967 = vmatpush1.bf16.msra.mxu0 0
  %968 = vmatprep.subr.bf16.mxu0 0
  %969 = vmatpush1.bf16.msra.mxu0 0
  %970 = vmatprep.subr.bf16.mxu0 0
  %971 = vmatpush1.bf16.msra.mxu0 0
  %972 = vmatprep.mubr.bf16.mxu0 0
  %973 = vmatmul.mubr.bf16.gmra.mrb[0].mxu0 %v938
  %v974 = vpop.f32.mrb[0].mxu0
  %v975 = vadd.f32 %v890, %v974
  %v976 = vpop.f32.mrb[0].mxu0
  %v977 = vadd.f32 %v894, %v976
  %v978 = vpop.f32.mrb[0].mxu0
  %v979 = vadd.f32 %v890, %v978
  %v980 = vpop.f32.mrb[0].mxu0
  %v981 = vadd.f32 %v894, %v980
  %982 = vdwg.mxu0
  %v983 = vmul.f32 %v975, 0.5
  %v984 = vmul.f32 %v977, 0.5
  %v985 = vmul.f32 %v979, 0.5
  %v986 = vmul.f32 %v981, 0.5
  %v987 = vmul.f32 %v975, 0.044715
  %v988 = vmul.f32 %v977, 0.044715
  %v989 = vmul.f32 %v979, 0.044715
  %v990 = vmul.f32 %v981, 0.044715
  %v991 = vmul.f32 %v987, %v975
  %v992 = vmul.f32 %v988, %v977
  %v993 = vmul.f32 %v989, %v979
  %v994 = vmul.f32 %v990, %v981
  %v995 = vmul.f32 %v991, %v975
  %v996 = vmul.f32 %v992, %v977
  %v997 = vmul.f32 %v993, %v979
  %v998 = vmul.f32 %v994, %v981
  %v999 = vadd.f32 %v975, %v995
  %v1000 = vadd.f32 %v977, %v996
  %v1001 = vadd.f32 %v979, %v997
  %v1002 = vadd.f32 %v981, %v998
  %v1003 = vmul.f32 %v999, 0.7978846
  %v1004 = vmul.f32 %v1000, 0.7978846
  %v1005 = vmul.f32 %v1001, 0.7978846
  %v1006 = vmul.f32 %v1002, 0.7978846
  %v1007 = vtanh.pop %v1003
  %v1008 = vtanh.pop %v1004
  %v1009 = vtanh.pop %v1005
  %v1010 = vtanh.pop %v1006
  %v1011 = vadd.f32 %v1007, 1.0
  %v1012 = vadd.f32 %v1008, 1.0
  %v1013 = vadd.f32 %v1009, 1.0
  %v1014 = vadd.f32 %v1010, 1.0
  %v1015 = vmul.f32 %v983, %v1011
  %v1016 = vmul.f32 %v984, %v1012
  %v1017 = vmul.f32 %v985, %v1013
  %v1018 = vmul.f32 %v986, %v1014
  %v1019 = vpack.c.bf16 %v1017, %v1015
  %v1020 = vpack.c.bf16 %v1018, %v1016
  %v1021 = vlaneseq
  %v1022 = vshrl.u32 %v1021, 7
  %v1023 = vsub.s32 5, %v1022
  %v1024 = vrot.slane %v60, %v1023
  %v1057 = vunpack.c.l.b16 %v70
  %v1058 = vunpack.c.l.b16 %v71
  %v1059 = vunpack.c.l.b16 %v72
  %v1060 = vunpack.c.l.b16 %v73
  %v1061 = vunpack.c.l.b16 %v74
  %v1062 = vunpack.c.l.b16 %v75
  %v1063 = vunpack.c.l.b16 %v76
  %v1064 = vunpack.c.l.b16 %v77
  %v1065 = vunpack.c.l.b16 %v78
  %v1066 = vunpack.c.l.b16 %v79
  %v1067 = vunpack.c.l.b16 %v80
  %v1068 = vunpack.c.l.b16 %v81
  %v1069 = vunpack.c.l.b16 %v82
  %v1070 = vunpack.c.l.b16 %v83
  %v1071 = vunpack.c.l.b16 %v84
  %v1072 = vunpack.c.l.b16 %v85
  %v1073 = vunpack.c.l.b16 %v86
  %v1074 = vunpack.c.l.b16 %v87
  %v1075 = vunpack.c.l.b16 %v88
  %v1076 = vunpack.c.l.b16 %v89
  %v1077 = vunpack.c.l.b16 %v90
  %v1078 = vunpack.c.l.b16 %v91
  %v1079 = vunpack.c.l.b16 %v92
  %v1080 = vunpack.c.l.b16 %v93
  %v1081 = vunpack.c.l.b16 %v94
  %v1082 = vunpack.c.l.b16 %v95
  %v1083 = vunpack.c.l.b16 %v96
  %v1084 = vunpack.c.l.b16 %v97
  %v1085 = vunpack.c.l.b16 %v98
  %v1086 = vunpack.c.l.b16 %v99
  %v1087 = vunpack.c.l.b16 %v100
  %v1088 = vunpack.c.l.b16 %v101
  %v1089 = vpack.c.b16 %v1058, %v1057
  %v1090 = vpack.c.b16 %v1060, %v1059
  %v1091 = vpack.c.b16 %v1062, %v1061
  %v1092 = vpack.c.b16 %v1064, %v1063
  %v1093 = vpack.c.b16 %v1066, %v1065
  %v1094 = vpack.c.b16 %v1068, %v1067
  %v1095 = vpack.c.b16 %v1070, %v1069
  %v1096 = vpack.c.b16 %v1072, %v1071
  %v1097 = vpack.c.b16 %v1074, %v1073
  %v1098 = vpack.c.b16 %v1076, %v1075
  %v1099 = vpack.c.b16 %v1078, %v1077
  %v1100 = vpack.c.b16 %v1080, %v1079
  %v1101 = vpack.c.b16 %v1082, %v1081
  %v1102 = vpack.c.b16 %v1084, %v1083
  %v1103 = vpack.c.b16 %v1086, %v1085
  %v1104 = vpack.c.b16 %v1088, %v1087
  %1121 = vmatprep.subr.bf16.mxu0 0
  %1122 = vmatpush1.bf16.msra.mxu0 %v1089
  %1123 = vmatprep.subr.bf16.mxu0 0
  %1124 = vmatpush1.bf16.msra.mxu0 %v1090
  %1125 = vmatprep.subr.bf16.mxu0 0
  %1126 = vmatpush1.bf16.msra.mxu0 %v1091
  %1127 = vmatprep.subr.bf16.mxu0 0
  %1128 = vmatpush1.bf16.msra.mxu0 %v1092
  %1129 = vmatprep.subr.bf16.mxu0 0
  %1130 = vmatpush1.bf16.msra.mxu0 %v1093
  %1131 = vmatprep.subr.bf16.mxu0 0
  %1132 = vmatpush1.bf16.msra.mxu0 %v1094
  %1133 = vmatprep.subr.bf16.mxu0 0
  %1134 = vmatpush1.bf16.msra.mxu0 %v1095
  %1135 = vmatprep.subr.bf16.mxu0 0
  %1136 = vmatpush1.bf16.msra.mxu0 %v1096
  %1137 = vmatprep.subr.bf16.mxu0 0
  %1138 = vmatpush1.bf16.msra.mxu0 %v1097
  %1139 = vmatprep.subr.bf16.mxu0 0
  %1140 = vmatpush1.bf16.msra.mxu0 %v1098
  %1141 = vmatprep.subr.bf16.mxu0 0
  %1142 = vmatpush1.bf16.msra.mxu0 %v1099
  %1143 = vmatprep.subr.bf16.mxu0 0
  %1144 = vmatpush1.bf16.msra.mxu0 %v1100
  %1145 = vmatprep.subr.bf16.mxu0 0
  %1146 = vmatpush1.bf16.msra.mxu0 %v1101
  %1147 = vmatprep.subr.bf16.mxu0 0
  %1148 = vmatpush1.bf16.msra.mxu0 %v1102
  %1149 = vmatprep.subr.bf16.mxu0 0
  %1150 = vmatpush1.bf16.msra.mxu0 %v1103
  %1151 = vmatprep.subr.bf16.mxu0 0
  %1152 = vmatpush1.bf16.msra.mxu0 %v1104
  %1153 = vmatprep.mubr.bf16.mxu0 %v1020
  %1154 = vmatmul.mubr.bf16.gmra.mrb[0].mxu0 %v1019
  %v1155 = vpop.f32.mrb[0].mxu0
  %v1156 = vadd.f32 %v1024, %v1155
  %v1157 = vpop.f32.mrb[0].mxu0
  %v1158 = vpop.f32.mrb[0].mxu0
  %v1159 = vadd.f32 %v1024, %v1158
  %v1160 = vpop.f32.mrb[0].mxu0
  %1161 = vdwg.mxu0
  %v1162 = vadd.f32 %v845, %v1156
  %v1163 = vadd.f32 %v846, %v1159
  %s1164 = scalar_lea.vmem %s2, 64
  %v1165 = vld [vmem:[%s1164] sm:$0xff]
  %v1166 = vld [vmem:[%s1164 + $0x8] sm:$0xff]
  %v1167 = vld [vmem:[%s1164 + $0x10] sm:$0xff]
  %v1168 = vld [vmem:[%s1164 + $0x18] sm:$0xff]
  %v1169 = vld [vmem:[%s1164 + $0x20] sm:$0xff]
  %v1170 = vld [vmem:[%s1164 + $0x28] sm:$0xff]
  %v1171 = vld [vmem:[%s1164 + $0x30] sm:$0xff]
  %v1172 = vld [vmem:[%s1164 + $0x38] sm:$0xff]
  %s1173 = scalar_lea.vmem %s3, 2
  %v1174 = vld [vmem:[%s1173] sm:$0x3]
  %s1175 = scalar_lea.vmem %s4, 32
  %v1176 = vld [vmem:[%s1175] sm:$0xf]
  %v1177 = vld [vmem:[%s1175 + $0x4] sm:$0xf]
  %v1178 = vld [vmem:[%s1175 + $0x8] sm:$0xf]
  %v1179 = vld [vmem:[%s1175 + $0xc] sm:$0xf]
  %v1180 = vld [vmem:[%s1175 + $0x10] sm:$0xf]
  %v1181 = vld [vmem:[%s1175 + $0x14] sm:$0xf]
  %v1182 = vld [vmem:[%s1175 + $0x18] sm:$0xf]
  %v1183 = vld [vmem:[%s1175 + $0x1c] sm:$0xf]
  %s1184 = scalar_lea.vmem %s5, 8
  %v1185 = vld [vmem:[%s1184] sm:$0x3f]
  %s1186 = scalar_lea.vmem %s6, 64
  %v1187 = vld [vmem:[%s1186] sm:$0xff]
  %v1188 = vld [vmem:[%s1186 + $0x8] sm:$0xff]
  %v1189 = vld [vmem:[%s1186 + $0x10] sm:$0xff]
  %v1190 = vld [vmem:[%s1186 + $0x18] sm:$0xff]
  %v1191 = vld [vmem:[%s1186 + $0x20] sm:$0xff]
  %v1192 = vld [vmem:[%s1186 + $0x28] sm:$0xff]
  %v1193 = vld [vmem:[%s1186 + $0x30] sm:$0xff]
  %v1194 = vld [vmem:[%s1186 + $0x38] sm:$0xff]
  %s1195 = scalar_lea.vmem %s7, 2
  %v1196 = vld [vmem:[%s1195] sm:$0x3]
  %s1197 = scalar_lea.vmem %s8, 128
  %v1198 = vld [vmem:[%s1197] sm:$0xf]
  %v1199 = vld [vmem:[%s1197 + $0x4] sm:$0xf]
  %v1200 = vld [vmem:[%s1197 + $0x8] sm:$0xf]
  %v1201 = vld [vmem:[%s1197 + $0xc] sm:$0xf]
  %v1202 = vld [vmem:[%s1197 + $0x10] sm:$0xf]
  %v1203 = vld [vmem:[%s1197 + $0x14] sm:$0xf]
  %v1204 = vld [vmem:[%s1197 + $0x18] sm:$0xf]
  %v1205 = vld [vmem:[%s1197 + $0x1c] sm:$0xf]
  %v1206 = vld [vmem:[%s1197 + $0x20] sm:$0xf]
  %v1207 = vld [vmem:[%s1197 + $0x24] sm:$0xf]
  %v1208 = vld [vmem:[%s1197 + $0x28] sm:$0xf]
  %v1209 = vld [vmem:[%s1197 + $0x2c] sm:$0xf]
  %v1210 = vld [vmem:[%s1197 + $0x30] sm:$0xf]
  %v1211 = vld [vmem:[%s1197 + $0x34] sm:$0xf]
  %v1212 = vld [vmem:[%s1197 + $0x38] sm:$0xf]
  %v1213 = vld [vmem:[%s1197 + $0x3c] sm:$0xf]
  %v1214 = vld [vmem:[%s1197 + $0x40] sm:$0xf]
  %v1215 = vld [vmem:[%s1197 + $0x44] sm:$0xf]
  %v1216 = vld [vmem:[%s1197 + $0x48] sm:$0xf]
  %v1217 = vld [vmem:[%s1197 + $0x4c] sm:$0xf]
  %v1218 = vld [vmem:[%s1197 + $0x50] sm:$0xf]
  %v1219 = vld [vmem:[%s1197 + $0x54] sm:$0xf]
  %v1220 = vld [vmem:[%s1197 + $0x58] sm:$0xf]
  %v1221 = vld [vmem:[%s1197 + $0x5c] sm:$0xf]
  %v1222 = vld [vmem:[%s1197 + $0x60] sm:$0xf]
  %v1223 = vld [vmem:[%s1197 + $0x64] sm:$0xf]
  %v1224 = vld [vmem:[%s1197 + $0x68] sm:$0xf]
  %v1225 = vld [vmem:[%s1197 + $0x6c] sm:$0xf]
  %v1226 = vld [vmem:[%s1197 + $0x70] sm:$0xf]
  %v1227 = vld [vmem:[%s1197 + $0x74] sm:$0xf]
  %v1228 = vld [vmem:[%s1197 + $0x78] sm:$0xf]
  %v1229 = vld [vmem:[%s1197 + $0x7c] sm:$0xf]
  %v1230 = vsel %vm102, %v1162, 0.0
  %1231 = vadd.xlane.f32.xlu0 %v1230
  %v1232 = vpop.xlane.xlu0 %1231
  %v1233 = vsel %vm102, %v1163, 0.0
  %1234 = vadd.xlane.f32.xlu0 %v1233
  %v1235 = vpop.xlane.xlu0 %1234
  %v1236 = vmul.f32 %v1232, %v109
  %v1237 = vmul.f32 %v1235, %v109
  %v1238 = vsub.f32 %v1162, %v1236
  %v1239 = vsub.f32 %v1163, %v1237
  %v1240 = vmul.f32 %v1238, %v1238
  %v1241 = vmul.f32 %v1239, %v1239
  %v1242 = vsel %vm102, %v1240, 0.0
  %1243 = vadd.xlane.f32.xlu0 %v1242
  %v1244 = vpop.xlane.xlu0 %1243
  %v1245 = vsel %vm102, %v1241, 0.0
  %1246 = vadd.xlane.f32.xlu0 %v1245
  %v1247 = vpop.xlane.xlu0 %1246
  %v1248 = vmul.f32 %v1244, %v109
  %v1249 = vmul.f32 %v1247, %v109
  %v1250 = vadd.f32 %v1248, 1e-05
  %v1251 = vadd.f32 %v1249, 1e-05
  %v1252 = vrsqrt.pop %v1250
  %v1253 = vrsqrt.pop %v1251
  %v1254 = vmul.f32 %v1238, %v1252
  %v1255 = vmul.f32 %v1239, %v1253
  %v1256 = vlaneseq
  %v1257 = vshrl.u32 %v1256, 7
  %v1258 = vsub.s32 0, %v1257
  %v1259 = vrot.slane %v1185, %v1258
  %v1260 = vmul.f32 %v1254, %v1259
  %v1261 = vmul.f32 %v1255, %v1259
  %v1262 = vlaneseq
  %v1263 = vshrl.u32 %v1262, 7
  %v1264 = vsub.s32 1, %v1263
  %v1265 = vrot.slane %v1185, %v1264
  %v1266 = vadd.f32 %v1260, %v1265
  %v1267 = vadd.f32 %v1261, %v1265
  %v1268 = vpack.c.bf16 %v1267, %v1266
  %v1270 = vlaneseq
  %v1271 = vshrl.u32 %v1270, 7
  %v1272 = vsub.s32 0, %v1271
  %v1273 = vrot.slane %v1174, %v1272
  %v1274 = vlaneseq
  %v1275 = vshrl.u32 %v1274, 7
  %v1276 = vsub.s32 1, %v1275
  %v1277 = vrot.slane %v1174, %v1276
  %v1288 = vunpack.c.l.b16 %v1165
  %v1289 = vunpack.c.h.b16 %v1165
  %v1290 = vunpack.c.l.b16 %v1166
  %v1291 = vunpack.c.h.b16 %v1166
  %v1292 = vunpack.c.l.b16 %v1167
  %v1293 = vunpack.c.h.b16 %v1167
  %v1294 = vunpack.c.l.b16 %v1168
  %v1295 = vunpack.c.h.b16 %v1168
  %v1296 = vunpack.c.l.b16 %v1169
  %v1297 = vunpack.c.h.b16 %v1169
  %v1298 = vunpack.c.l.b16 %v1170
  %v1299 = vunpack.c.h.b16 %v1170
  %v1300 = vunpack.c.l.b16 %v1171
  %v1301 = vunpack.c.h.b16 %v1171
  %v1302 = vunpack.c.l.b16 %v1172
  %v1303 = vunpack.c.h.b16 %v1172
  %v1304 = vpack.c.b16 %v1290, %v1288
  %v1305 = vpack.c.b16 %v1291, %v1289
  %v1306 = vpack.c.b16 %v1294, %v1292
  %v1307 = vpack.c.b16 %v1295, %v1293
  %v1308 = vpack.c.b16 %v1298, %v1296
  %v1309 = vpack.c.b16 %v1299, %v1297
  %v1310 = vpack.c.b16 %v1302, %v1300
  %v1311 = vpack.c.b16 %v1303, %v1301
  %v1321 = vsel %vm102, %v1268, 0
  %1323 = vmatprep.subr.bf16.mxu0 %v1305
  %1324 = vmatpush1.bf16.msra.mxu0 %v1304
  %1325 = vmatprep.subr.bf16.mxu0 %v1307
  %1326 = vmatpush1.bf16.msra.mxu0 %v1306
  %1327 = vmatprep.subr.bf16.mxu0 %v1309
  %1328 = vmatpush1.bf16.msra.mxu0 %v1308
  %1329 = vmatprep.subr.bf16.mxu0 %v1311
  %1330 = vmatpush1.bf16.msra.mxu0 %v1310
  %1331 = vmatprep.subr.bf16.mxu0 0
  %1332 = vmatpush1.bf16.msra.mxu0 0
  %1333 = vmatprep.subr.bf16.mxu0 0
  %1334 = vmatpush1.bf16.msra.mxu0 0
  %1335 = vmatprep.subr.bf16.mxu0 0
  %1336 = vmatpush1.bf16.msra.mxu0 0
  %1337 = vmatprep.subr.bf16.mxu0 0
  %1338 = vmatpush1.bf16.msra.mxu0 0
  %1339 = vmatprep.subr.bf16.mxu0 0
  %1340 = vmatpush1.bf16.msra.mxu0 0
  %1341 = vmatprep.subr.bf16.mxu0 0
  %1342 = vmatpush1.bf16.msra.mxu0 0
  %1343 = vmatprep.subr.bf16.mxu0 0
  %1344 = vmatpush1.bf16.msra.mxu0 0
  %1345 = vmatprep.subr.bf16.mxu0 0
  %1346 = vmatpush1.bf16.msra.mxu0 0
  %1347 = vmatprep.subr.bf16.mxu0 0
  %1348 = vmatpush1.bf16.msra.mxu0 0
  %1349 = vmatprep.subr.bf16.mxu0 0
  %1350 = vmatpush1.bf16.msra.mxu0 0
  %1351 = vmatprep.subr.bf16.mxu0 0
  %1352 = vmatpush1.bf16.msra.mxu0 0
  %1353 = vmatprep.subr.bf16.mxu0 0
  %1354 = vmatpush1.bf16.msra.mxu0 0
  %1355 = vmatprep.mubr.bf16.mxu0 0
  %1356 = vmatmul.mubr.bf16.gmra.mrb[0].mxu0 %v1321
  %v1357 = vpop.f32.mrb[0].mxu0
  %v1358 = vadd.f32 %v1273, %v1357
  %v1359 = vpop.f32.mrb[0].mxu0
  %v1360 = vadd.f32 %v1277, %v1359
  %v1361 = vpop.f32.mrb[0].mxu0
  %v1362 = vadd.f32 %v1273, %v1361
  %v1363 = vpop.f32.mrb[0].mxu0
  %v1364 = vadd.f32 %v1277, %v1363
  %1365 = vdwg.mxu0
  %v1366 = vpack.c.bf16 %v1362, %v1358
  %v1367 = vpack.c.bf16 %v1364, %v1360
  %1369 = vrot.lane.b32.xlu0 %v1366, 64
  %v1370 = vpop.permute.xlu0 %1369
  %v1372 = vsel %vm245, %v1366, 0
  %v1375 = vsel %vm245, %v1370, 0
  %1377 = vmatprep.subr.bf16.mxu0 0
  %1378 = vmatpush1.bf16.xpose.msra.mxu0 %v1375
  %1379 = vmatprep.subr.bf16.mxu0 0
  %1380 = vmatpush1.bf16.xpose.msra.mxu0 0
  %1381 = vmatprep.subr.bf16.mxu0 0
  %1382 = vmatpush1.bf16.xpose.msra.mxu0 0
  %1383 = vmatprep.subr.bf16.mxu0 0
  %1384 = vmatpush1.bf16.xpose.msra.mxu0 0
  %1385 = vmatprep.subr.bf16.mxu0 0
  %1386 = vmatpush1.bf16.xpose.msra.mxu0 0
  %1387 = vmatprep.subr.bf16.mxu0 0
  %1388 = vmatpush1.bf16.xpose.msra.mxu0 0
  %1389 = vmatprep.subr.bf16.mxu0 0
  %1390 = vmatpush1.bf16.xpose.msra.mxu0 0
  %1391 = vmatprep.subr.bf16.mxu0 0
  %1392 = vmatpush1.bf16.xpose.msra.mxu0 0
  %1393 = vmatprep.subr.bf16.mxu0 0
  %1394 = vmatpush1.bf16.xpose.msra.mxu0 0
  %1395 = vmatprep.subr.bf16.mxu0 0
  %1396 = vmatpush1.bf16.xpose.msra.mxu0 0
  %1397 = vmatprep.subr.bf16.mxu0 0
  %1398 = vmatpush1.bf16.xpose.msra.mxu0 0
  %1399 = vmatprep.subr.bf16.mxu0 0
  %1400 = vmatpush1.bf16.xpose.msra.mxu0 0
  %1401 = vmatprep.subr.bf16.mxu0 0
  %1402 = vmatpush1.bf16.xpose.msra.mxu0 0
  %1403 = vmatprep.subr.bf16.mxu0 0
  %1404 = vmatpush1.bf16.xpose.msra.mxu0 0
  %1405 = vmatprep.subr.bf16.mxu0 0
  %1406 = vmatpush1.bf16.xpose.msra.mxu0 0
  %1407 = vmatprep.subr.bf16.mxu0 0
  %1408 = vmatpush1.bf16.xpose.msra.mxu0 0
  %1409 = vmatprep.mubr.bf16.mxu0 0
  %1410 = vmatmul.mubr.bf16.gmra.mrb[0].mxu0 %v1372
  %v1411 = vpop.f32.mrb[0].mxu0
  %v1412 = vadd.f32 0.0, %v1411
  %v1413 = vpop.f32.mrb[0].mxu0
  %v1414 = vpop.f32.mrb[0].mxu0
  %v1415 = vadd.f32 0.0, %v1414
  %v1416 = vpop.f32.mrb[0].mxu0
  %1417 = vdwg.mxu0
  %v1418 = vmul.f32 %v1412, 0.25
  %v1419 = vmul.f32 %v1415, 0.25
  %v1420 = vadd.f32 %v1418, %v41
  %v1421 = vadd.f32 %v1419, %v42
  %v1422 = vsel %vm245, %v1420, -inf
  %1423 = vmax.xlane.f32.xlu0 %v1422
  %v1424 = vpop.xlane.xlu0 %1423
  %v1425 = vsel %vm245, %v1421, -inf
  %1426 = vmax.xlane.f32.xlu0 %v1425
  %v1427 = vpop.xlane.xlu0 %1426
  %v1428 = vsub.f32 %v1420, %v1424
  %v1429 = vsub.f32 %v1421, %v1427
  %v1430 = vmul.f32 %v1428, 1.442695
  %v1431 = vpow.pop %v1430
  %v1432 = vmul.f32 %v1429, 1.442695
  %v1433 = vpow.pop %v1432
  %v1434 = vsel %vm245, %v1431, 0.0
  %1435 = vadd.xlane.f32.xlu0 %v1434
  %v1436 = vpop.xlane.xlu0 %1435
  %v1437 = vsel %vm245, %v1433, 0.0
  %1438 = vadd.xlane.f32.xlu0 %v1437
  %v1439 = vpop.xlane.xlu0 %1438
  %v1440 = vrcp.pop %v1436
  %v1441 = vrcp.pop %v1439
  %v1442 = vmul.f32 %v1431, %v1440
  %v1443 = vmul.f32 %v1433, %v1441
  %v1444 = vpack.c.bf16 %v1443, %v1442
  %v1446 = vsel %vm245, %v1444, 0
  %1448 = vmatprep.subr.bf16.mxu0 0
  %1449 = vmatpush1.bf16.msra.mxu0 %v1367
  %1450 = vmatprep.subr.bf16.mxu0 0
  %1451 = vmatpush1.bf16.msra.mxu0 0
  %1452 = vmatprep.subr.bf16.mxu0 0
  %1453 = vmatpush1.bf16.msra.mxu0 0
  %1454 = vmatprep.subr.bf16.mxu0 0
  %1455 = vmatpush1.bf16.msra.mxu0 0
  %1456 = vmatprep.subr.bf16.mxu0 0
  %1457 = vmatpush1.bf16.msra.mxu0 0
  %1458 = vmatprep.subr.bf16.mxu0 0
  %1459 = vmatpush1.bf16.msra.mxu0 0
  %1460 = vmatprep.subr.bf16.mxu0 0
  %1461 = vmatpush1.bf16.msra.mxu0 0
  %1462 = vmatprep.subr.bf16.mxu0 0
  %1463 = vmatpush1.bf16.msra.mxu0 0
  %1464 = vmatprep.subr.bf16.mxu0 0
  %1465 = vmatpush1.bf16.msra.mxu0 0
  %1466 = vmatprep.subr.bf16.mxu0 0
  %1467 = vmatpush1.bf16.msra.mxu0 0
  %1468 = vmatprep.subr.bf16.mxu0 0
  %1469 = vmatpush1.bf16.msra.mxu0 0
  %1470 = vmatprep.subr.bf16.mxu0 0
  %1471 = vmatpush1.bf16.msra.mxu0 0
  %1472 = vmatprep.subr.bf16.mxu0 0
  %1473 = vmatpush1.bf16.msra.mxu0 0
  %1474 = vmatprep.subr.bf16.mxu0 0
  %1475 = vmatpush1.bf16.msra.mxu0 0
  %1476 = vmatprep.subr.bf16.mxu0 0
  %1477 = vmatpush1.bf16.msra.mxu0 0
  %1478 = vmatprep.subr.bf16.mxu0 0
  %1479 = vmatpush1.bf16.msra.mxu0 0
  %1480 = vmatprep.mubr.bf16.mxu0 0
  %1481 = vmatmul.mubr.bf16.gmra.mrb[0].mxu0 %v1446
  %v1482 = vpop.f32.mrb[0].mxu0
  %v1483 = vadd.f32 0.0, %v1482
  %v1484 = vpop.f32.mrb[0].mxu0
  %v1485 = vpop.f32.mrb[0].mxu0
  %v1486 = vadd.f32 0.0, %v1485
  %v1487 = vpop.f32.mrb[0].mxu0
  %1488 = vdwg.mxu0
  %1489 = vrot.lane.b32.xlu0 %v1366, 112
  %v1490 = vpop.permute.xlu0 %1489
  %1491 = vrot.lane.b32.xlu0 %v1366, 48
  %v1492 = vpop.permute.xlu0 %1491
  %v1494 = vsel %vm245, %v1490, 0
  %v1497 = vsel %vm245, %v1492, 0
  %1499 = vmatprep.subr.bf16.mxu0 0
  %1500 = vmatpush1.bf16.xpose.msra.mxu0 %v1497
  %1501 = vmatprep.subr.bf16.mxu0 0
  %1502 = vmatpush1.bf16.xpose.msra.mxu0 0
  %1503 = vmatprep.subr.bf16.mxu0 0
  %1504 = vmatpush1.bf16.xpose.msra.mxu0 0
  %1505 = vmatprep.subr.bf16.mxu0 0
  %1506 = vmatpush1.bf16.xpose.msra.mxu0 0
  %1507 = vmatprep.subr.bf16.mxu0 0
  %1508 = vmatpush1.bf16.xpose.msra.mxu0 0
  %1509 = vmatprep.subr.bf16.mxu0 0
  %1510 = vmatpush1.bf16.xpose.msra.mxu0 0
  %1511 = vmatprep.subr.bf16.mxu0 0
  %1512 = vmatpush1.bf16.xpose.msra.mxu0 0
  %1513 = vmatprep.subr.bf16.mxu0 0
  %1514 = vmatpush1.bf16.xpose.msra.mxu0 0
  %1515 = vmatprep.subr.bf16.mxu0 0
  %1516 = vmatpush1.bf16.xpose.msra.mxu0 0
  %1517 = vmatprep.subr.bf16.mxu0 0
  %1518 = vmatpush1.bf16.xpose.msra.mxu0 0
  %1519 = vmatprep.subr.bf16.mxu0 0
  %1520 = vmatpush1.bf16.xpose.msra.mxu0 0
  %1521 = vmatprep.subr.bf16.mxu0 0
  %1522 = vmatpush1.bf16.xpose.msra.mxu0 0
  %1523 = vmatprep.subr.bf16.mxu0 0
  %1524 = vmatpush1.bf16.xpose.msra.mxu0 0
  %1525 = vmatprep.subr.bf16.mxu0 0
  %1526 = vmatpush1.bf16.xpose.msra.mxu0 0
  %1527 = vmatprep.subr.bf16.mxu0 0
  %1528 = vmatpush1.bf16.xpose.msra.mxu0 0
  %1529 = vmatprep.subr.bf16.mxu0 0
  %1530 = vmatpush1.bf16.xpose.msra.mxu0 0
  %1531 = vmatprep.mubr.bf16.mxu0 0
  %1532 = vmatmul.mubr.bf16.gmra.mrb[0].mxu0 %v1494
  %v1533 = vpop.f32.mrb[0].mxu0
  %v1534 = vadd.f32 0.0, %v1533
  %v1535 = vpop.f32.mrb[0].mxu0
  %v1536 = vpop.f32.mrb[0].mxu0
  %v1537 = vadd.f32 0.0, %v1536
  %v1538 = vpop.f32.mrb[0].mxu0
  %1539 = vdwg.mxu0
  %v1540 = vmul.f32 %v1534, 0.25
  %v1541 = vmul.f32 %v1537, 0.25
  %v1542 = vadd.f32 %v1540, %v41
  %v1543 = vadd.f32 %v1541, %v42
  %v1544 = vsel %vm245, %v1542, -inf
  %1545 = vmax.xlane.f32.xlu0 %v1544
  %v1546 = vpop.xlane.xlu0 %1545
  %v1547 = vsel %vm245, %v1543, -inf
  %1548 = vmax.xlane.f32.xlu0 %v1547
  %v1549 = vpop.xlane.xlu0 %1548
  %v1550 = vsub.f32 %v1542, %v1546
  %v1551 = vsub.f32 %v1543, %v1549
  %v1552 = vmul.f32 %v1550, 1.442695
  %v1553 = vpow.pop %v1552
  %v1554 = vmul.f32 %v1551, 1.442695
  %v1555 = vpow.pop %v1554
  %v1556 = vsel %vm245, %v1553, 0.0
  %1557 = vadd.xlane.f32.xlu0 %v1556
  %v1558 = vpop.xlane.xlu0 %1557
  %v1559 = vsel %vm245, %v1555, 0.0
  %1560 = vadd.xlane.f32.xlu0 %v1559
  %v1561 = vpop.xlane.xlu0 %1560
  %v1562 = vrcp.pop %v1558
  %v1563 = vrcp.pop %v1561
  %v1564 = vmul.f32 %v1553, %v1562
  %v1565 = vmul.f32 %v1555, %v1563
  %v1566 = vpack.c.bf16 %v1565, %v1564
  %1568 = vrot.lane.b32.xlu0 %v1367, 112
  %v1569 = vpop.permute.xlu0 %1568
  %v1572 = vsel %vm245, %v1566, 0
  %1574 = vmatprep.subr.bf16.mxu0 0
  %1575 = vmatpush1.bf16.msra.mxu0 %v1569
  %1576 = vmatprep.subr.bf16.mxu0 0
  %1577 = vmatpush1.bf16.msra.mxu0 0
  %1578 = vmatprep.subr.bf16.mxu0 0
  %1579 = vmatpush1.bf16.msra.mxu0 0
  %1580 = vmatprep.subr.bf16.mxu0 0
  %1581 = vmatpush1.bf16.msra.mxu0 0
  %1582 = vmatprep.subr.bf16.mxu0 0
  %1583 = vmatpush1.bf16.msra.mxu0 0
  %1584 = vmatprep.subr.bf16.mxu0 0
  %1585 = vmatpush1.bf16.msra.mxu0 0
  %1586 = vmatprep.subr.bf16.mxu0 0
  %1587 = vmatpush1.bf16.msra.mxu0 0
  %1588 = vmatprep.subr.bf16.mxu0 0
  %1589 = vmatpush1.bf16.msra.mxu0 0
  %1590 = vmatprep.subr.bf16.mxu0 0
  %1591 = vmatpush1.bf16.msra.mxu0 0
  %1592 = vmatprep.subr.bf16.mxu0 0
  %1593 = vmatpush1.bf16.msra.mxu0 0
  %1594 = vmatprep.subr.bf16.mxu0 0
  %1595 = vmatpush1.bf16.msra.mxu0 0
  %1596 = vmatprep.subr.bf16.mxu0 0
  %1597 = vmatpush1.bf16.msra.mxu0 0
  %1598 = vmatprep.subr.bf16.mxu0 0
  %1599 = vmatpush1.bf16.msra.mxu0 0
  %1600 = vmatprep.subr.bf16.mxu0 0
  %1601 = vmatpush1.bf16.msra.mxu0 0
  %1602 = vmatprep.subr.bf16.mxu0 0
  %1603 = vmatpush1.bf16.msra.mxu0 0
  %1604 = vmatprep.subr.bf16.mxu0 0
  %1605 = vmatpush1.bf16.msra.mxu0 0
  %1606 = vmatprep.mubr.bf16.mxu0 0
  %1607 = vmatmul.mubr.bf16.gmra.mrb[0].mxu0 %v1572
  %v1608 = vpop.f32.mrb[0].mxu0
  %v1609 = vadd.f32 0.0, %v1608
  %v1610 = vpop.f32.mrb[0].mxu0
  %v1611 = vpop.f32.mrb[0].mxu0
  %v1612 = vadd.f32 0.0, %v1611
  %v1613 = vpop.f32.mrb[0].mxu0
  %1614 = vdwg.mxu0
  %1615 = vrot.lane.b32.xlu0 %v1366, 96
  %v1616 = vpop.permute.xlu0 %1615
  %1617 = vrot.lane.b32.xlu0 %v1366, 32
  %v1618 = vpop.permute.xlu0 %1617
  %v1620 = vsel %vm245, %v1616, 0
  %v1623 = vsel %vm245, %v1618, 0
  %1625 = vmatprep.subr.bf16.mxu0 0
  %1626 = vmatpush1.bf16.xpose.msra.mxu0 %v1623
  %1627 = vmatprep.subr.bf16.mxu0 0
  %1628 = vmatpush1.bf16.xpose.msra.mxu0 0
  %1629 = vmatprep.subr.bf16.mxu0 0
  %1630 = vmatpush1.bf16.xpose.msra.mxu0 0
  %1631 = vmatprep.subr.bf16.mxu0 0
  %1632 = vmatpush1.bf16.xpose.msra.mxu0 0
  %1633 = vmatprep.subr.bf16.mxu0 0
  %1634 = vmatpush1.bf16.xpose.msra.mxu0 0
  %1635 = vmatprep.subr.bf16.mxu0 0
  %1636 = vmatpush1.bf16.xpose.msra.mxu0 0
  %1637 = vmatprep.subr.bf16.mxu0 0
  %1638 = vmatpush1.bf16.xpose.msra.mxu0 0
  %1639 = vmatprep.subr.bf16.mxu0 0
  %1640 = vmatpush1.bf16.xpose.msra.mxu0 0
  %1641 = vmatprep.subr.bf16.mxu0 0
  %1642 = vmatpush1.bf16.xpose.msra.mxu0 0
  %1643 = vmatprep.subr.bf16.mxu0 0
  %1644 = vmatpush1.bf16.xpose.msra.mxu0 0
  %1645 = vmatprep.subr.bf16.mxu0 0
  %1646 = vmatpush1.bf16.xpose.msra.mxu0 0
  %1647 = vmatprep.subr.bf16.mxu0 0
  %1648 = vmatpush1.bf16.xpose.msra.mxu0 0
  %1649 = vmatprep.subr.bf16.mxu0 0
  %1650 = vmatpush1.bf16.xpose.msra.mxu0 0
  %1651 = vmatprep.subr.bf16.mxu0 0
  %1652 = vmatpush1.bf16.xpose.msra.mxu0 0
  %1653 = vmatprep.subr.bf16.mxu0 0
  %1654 = vmatpush1.bf16.xpose.msra.mxu0 0
  %1655 = vmatprep.subr.bf16.mxu0 0
  %1656 = vmatpush1.bf16.xpose.msra.mxu0 0
  %1657 = vmatprep.mubr.bf16.mxu0 0
  %1658 = vmatmul.mubr.bf16.gmra.mrb[0].mxu0 %v1620
  %v1659 = vpop.f32.mrb[0].mxu0
  %v1660 = vadd.f32 0.0, %v1659
  %v1661 = vpop.f32.mrb[0].mxu0
  %v1662 = vpop.f32.mrb[0].mxu0
  %v1663 = vadd.f32 0.0, %v1662
  %v1664 = vpop.f32.mrb[0].mxu0
  %1665 = vdwg.mxu0
  %v1666 = vmul.f32 %v1660, 0.25
  %v1667 = vmul.f32 %v1663, 0.25
  %v1668 = vadd.f32 %v1666, %v41
  %v1669 = vadd.f32 %v1667, %v42
  %v1670 = vsel %vm245, %v1668, -inf
  %1671 = vmax.xlane.f32.xlu0 %v1670
  %v1672 = vpop.xlane.xlu0 %1671
  %v1673 = vsel %vm245, %v1669, -inf
  %1674 = vmax.xlane.f32.xlu0 %v1673
  %v1675 = vpop.xlane.xlu0 %1674
  %v1676 = vsub.f32 %v1668, %v1672
  %v1677 = vsub.f32 %v1669, %v1675
  %v1678 = vmul.f32 %v1676, 1.442695
  %v1679 = vpow.pop %v1678
  %v1680 = vmul.f32 %v1677, 1.442695
  %v1681 = vpow.pop %v1680
  %v1682 = vsel %vm245, %v1679, 0.0
  %1683 = vadd.xlane.f32.xlu0 %v1682
  %v1684 = vpop.xlane.xlu0 %1683
  %v1685 = vsel %vm245, %v1681, 0.0
  %1686 = vadd.xlane.f32.xlu0 %v1685
  %v1687 = vpop.xlane.xlu0 %1686
  %v1688 = vrcp.pop %v1684
  %v1689 = vrcp.pop %v1687
  %v1690 = vmul.f32 %v1679, %v1688
  %v1691 = vmul.f32 %v1681, %v1689
  %v1692 = vpack.c.bf16 %v1691, %v1690
  %1693 = vrot.lane.b32.xlu0 %v1367, 96
  %v1694 = vpop.permute.xlu0 %1693
  %v1697 = vsel %vm245, %v1692, 0
  %1699 = vmatprep.subr.bf16.mxu0 0
  %1700 = vmatpush1.bf16.msra.mxu0 %v1694
  %1701 = vmatprep.subr.bf16.mxu0 0
  %1702 = vmatpush1.bf16.msra.mxu0 0
  %1703 = vmatprep.subr.bf16.mxu0 0
  %1704 = vmatpush1.bf16.msra.mxu0 0
  %1705 = vmatprep.subr.bf16.mxu0 0
  %1706 = vmatpush1.bf16.msra.mxu0 0
  %1707 = vmatprep.subr.bf16.mxu0 0
  %1708 = vmatpush1.bf16.msra.mxu0 0
  %1709 = vmatprep.subr.bf16.mxu0 0
  %1710 = vmatpush1.bf16.msra.mxu0 0
  %1711 = vmatprep.subr.bf16.mxu0 0
  %1712 = vmatpush1.bf16.msra.mxu0 0
  %1713 = vmatprep.subr.bf16.mxu0 0
  %1714 = vmatpush1.bf16.msra.mxu0 0
  %1715 = vmatprep.subr.bf16.mxu0 0
  %1716 = vmatpush1.bf16.msra.mxu0 0
  %1717 = vmatprep.subr.bf16.mxu0 0
  %1718 = vmatpush1.bf16.msra.mxu0 0
  %1719 = vmatprep.subr.bf16.mxu0 0
  %1720 = vmatpush1.bf16.msra.mxu0 0
  %1721 = vmatprep.subr.bf16.mxu0 0
  %1722 = vmatpush1.bf16.msra.mxu0 0
  %1723 = vmatprep.subr.bf16.mxu0 0
  %1724 = vmatpush1.bf16.msra.mxu0 0
  %1725 = vmatprep.subr.bf16.mxu0 0
  %1726 = vmatpush1.bf16.msra.mxu0 0
  %1727 = vmatprep.subr.bf16.mxu0 0
  %1728 = vmatpush1.bf16.msra.mxu0 0
  %1729 = vmatprep.subr.bf16.mxu0 0
  %1730 = vmatpush1.bf16.msra.mxu0 0
  %1731 = vmatprep.mubr.bf16.mxu0 0
  %1732 = vmatmul.mubr.bf16.gmra.mrb[0].mxu0 %v1697
  %v1733 = vpop.f32.mrb[0].mxu0
  %v1734 = vadd.f32 0.0, %v1733
  %v1735 = vpop.f32.mrb[0].mxu0
  %v1736 = vpop.f32.mrb[0].mxu0
  %v1737 = vadd.f32 0.0, %v1736
  %v1738 = vpop.f32.mrb[0].mxu0
  %1739 = vdwg.mxu0
  %1740 = vrot.lane.b32.xlu0 %v1366, 80
  %v1741 = vpop.permute.xlu0 %1740
  %1742 = vrot.lane.b32.xlu0 %v1366, 16
  %v1743 = vpop.permute.xlu0 %1742
  %v1745 = vsel %vm245, %v1741, 0
  %v1748 = vsel %vm245, %v1743, 0
  %1750 = vmatprep.subr.bf16.mxu0 0
  %1751 = vmatpush1.bf16.xpose.msra.mxu0 %v1748
  %1752 = vmatprep.subr.bf16.mxu0 0
  %1753 = vmatpush1.bf16.xpose.msra.mxu0 0
  %1754 = vmatprep.subr.bf16.mxu0 0
  %1755 = vmatpush1.bf16.xpose.msra.mxu0 0
  %1756 = vmatprep.subr.bf16.mxu0 0
  %1757 = vmatpush1.bf16.xpose.msra.mxu0 0
  %1758 = vmatprep.subr.bf16.mxu0 0
  %1759 = vmatpush1.bf16.xpose.msra.mxu0 0
  %1760 = vmatprep.subr.bf16.mxu0 0
  %1761 = vmatpush1.bf16.xpose.msra.mxu0 0
  %1762 = vmatprep.subr.bf16.mxu0 0
  %1763 = vmatpush1.bf16.xpose.msra.mxu0 0
  %1764 = vmatprep.subr.bf16.mxu0 0
  %1765 = vmatpush1.bf16.xpose.msra.mxu0 0
  %1766 = vmatprep.subr.bf16.mxu0 0
  %1767 = vmatpush1.bf16.xpose.msra.mxu0 0
  %1768 = vmatprep.subr.bf16.mxu0 0
  %1769 = vmatpush1.bf16.xpose.msra.mxu0 0
  %1770 = vmatprep.subr.bf16.mxu0 0
  %1771 = vmatpush1.bf16.xpose.msra.mxu0 0
  %1772 = vmatprep.subr.bf16.mxu0 0
  %1773 = vmatpush1.bf16.xpose.msra.mxu0 0
  %1774 = vmatprep.subr.bf16.mxu0 0
  %1775 = vmatpush1.bf16.xpose.msra.mxu0 0
  %1776 = vmatprep.subr.bf16.mxu0 0
  %1777 = vmatpush1.bf16.xpose.msra.mxu0 0
  %1778 = vmatprep.subr.bf16.mxu0 0
  %1779 = vmatpush1.bf16.xpose.msra.mxu0 0
  %1780 = vmatprep.subr.bf16.mxu0 0
  %1781 = vmatpush1.bf16.xpose.msra.mxu0 0
  %1782 = vmatprep.mubr.bf16.mxu0 0
  %1783 = vmatmul.mubr.bf16.gmra.mrb[0].mxu0 %v1745
  %v1784 = vpop.f32.mrb[0].mxu0
  %v1785 = vadd.f32 0.0, %v1784
  %v1786 = vpop.f32.mrb[0].mxu0
  %v1787 = vpop.f32.mrb[0].mxu0
  %v1788 = vadd.f32 0.0, %v1787
  %v1789 = vpop.f32.mrb[0].mxu0
  %1790 = vdwg.mxu0
  %v1791 = vmul.f32 %v1785, 0.25
  %v1792 = vmul.f32 %v1788, 0.25
  %v1793 = vadd.f32 %v1791, %v41
  %v1794 = vadd.f32 %v1792, %v42
  %v1795 = vsel %vm245, %v1793, -inf
  %1796 = vmax.xlane.f32.xlu0 %v1795
  %v1797 = vpop.xlane.xlu0 %1796
  %v1798 = vsel %vm245, %v1794, -inf
  %1799 = vmax.xlane.f32.xlu0 %v1798
  %v1800 = vpop.xlane.xlu0 %1799
  %v1801 = vsub.f32 %v1793, %v1797
  %v1802 = vsub.f32 %v1794, %v1800
  %v1803 = vmul.f32 %v1801, 1.442695
  %v1804 = vpow.pop %v1803
  %v1805 = vmul.f32 %v1802, 1.442695
  %v1806 = vpow.pop %v1805
  %v1807 = vsel %vm245, %v1804, 0.0
  %1808 = vadd.xlane.f32.xlu0 %v1807
  %v1809 = vpop.xlane.xlu0 %1808
  %v1810 = vsel %vm245, %v1806, 0.0
  %1811 = vadd.xlane.f32.xlu0 %v1810
  %v1812 = vpop.xlane.xlu0 %1811
  %v1813 = vrcp.pop %v1809
  %v1814 = vrcp.pop %v1812
  %v1815 = vmul.f32 %v1804, %v1813
  %v1816 = vmul.f32 %v1806, %v1814
  %v1817 = vpack.c.bf16 %v1816, %v1815
  %1818 = vrot.lane.b32.xlu0 %v1367, 80
  %v1819 = vpop.permute.xlu0 %1818
  %v1822 = vsel %vm245, %v1817, 0
  %1824 = vmatprep.subr.bf16.mxu0 0
  %1825 = vmatpush1.bf16.msra.mxu0 %v1819
  %1826 = vmatprep.subr.bf16.mxu0 0
  %1827 = vmatpush1.bf16.msra.mxu0 0
  %1828 = vmatprep.subr.bf16.mxu0 0
  %1829 = vmatpush1.bf16.msra.mxu0 0
  %1830 = vmatprep.subr.bf16.mxu0 0
  %1831 = vmatpush1.bf16.msra.mxu0 0
  %1832 = vmatprep.subr.bf16.mxu0 0
  %1833 = vmatpush1.bf16.msra.mxu0 0
  %1834 = vmatprep.subr.bf16.mxu0 0
  %1835 = vmatpush1.bf16.msra.mxu0 0
  %1836 = vmatprep.subr.bf16.mxu0 0
  %1837 = vmatpush1.bf16.msra.mxu0 0
  %1838 = vmatprep.subr.bf16.mxu0 0
  %1839 = vmatpush1.bf16.msra.mxu0 0
  %1840 = vmatprep.subr.bf16.mxu0 0
  %1841 = vmatpush1.bf16.msra.mxu0 0
  %1842 = vmatprep.subr.bf16.mxu0 0
  %1843 = vmatpush1.bf16.msra.mxu0 0
  %1844 = vmatprep.subr.bf16.mxu0 0
  %1845 = vmatpush1.bf16.msra.mxu0 0
  %1846 = vmatprep.subr.bf16.mxu0 0
  %1847 = vmatpush1.bf16.msra.mxu0 0
  %1848 = vmatprep.subr.bf16.mxu0 0
  %1849 = vmatpush1.bf16.msra.mxu0 0
  %1850 = vmatprep.subr.bf16.mxu0 0
  %1851 = vmatpush1.bf16.msra.mxu0 0
  %1852 = vmatprep.subr.bf16.mxu0 0
  %1853 = vmatpush1.bf16.msra.mxu0 0
  %1854 = vmatprep.subr.bf16.mxu0 0
  %1855 = vmatpush1.bf16.msra.mxu0 0
  %1856 = vmatprep.mubr.bf16.mxu0 0
  %1857 = vmatmul.mubr.bf16.gmra.mrb[0].mxu0 %v1822
  %v1858 = vpop.f32.mrb[0].mxu0
  %v1859 = vadd.f32 0.0, %v1858
  %v1860 = vpop.f32.mrb[0].mxu0
  %v1861 = vpop.f32.mrb[0].mxu0
  %v1862 = vadd.f32 0.0, %v1861
  %v1863 = vpop.f32.mrb[0].mxu0
  %1864 = vdwg.mxu0
  %1867 = vrot.lane.b32.xlu0 %v1609, 16
  %v1868 = vpop.permute.xlu0 %1867
  %1869 = vrot.lane.b32.xlu0 %v1612, 16
  %v1870 = vpop.permute.xlu0 %1869
  %1875 = vrot.lane.b32.xlu0 %v1734, 32
  %v1876 = vpop.permute.xlu0 %1875
  %1877 = vrot.lane.b32.xlu0 %v1737, 32
  %v1878 = vpop.permute.xlu0 %1877
  %1883 = vrot.lane.b32.xlu0 %v1859, 48
  %v1884 = vpop.permute.xlu0 %1883
  %1885 = vrot.lane.b32.xlu0 %v1862, 48
  %v1886 = vpop.permute.xlu0 %1885
  %v1889 = vsel %vm245, %v1483, %v1868
  %v1890 = vsel %vm245, %v1486, %v1870
  %v1891 = vsel %vm766, %v1889, %v1876
  %v1892 = vsel %vm766, %v1890, %v1878
  %v1893 = vsel %vm769, %v1891, %v1884
  %v1894 = vsel %vm769, %v1892, %v1886
  %v1895 = vpack.c.bf16 %v1894, %v1893
  %v1896 = vlaneseq
  %v1897 = vshrl.u32 %v1896, 7
  %v1898 = vsub.s32 4, %v1897
  %v1899 = vrot.slane %v1185, %v1898
  %v1908 = vunpack.c.l.b16 %v1176
  %v1909 = vunpack.c.l.b16 %v1177
  %v1910 = vunpack.c.l.b16 %v1178
  %v1911 = vunpack.c.l.b16 %v1179
  %v1912 = vunpack.c.l.b16 %v1180
  %v1913 = vunpack.c.l.b16 %v1181
  %v1914 = vunpack.c.l.b16 %v1182
  %v1915 = vunpack.c.l.b16 %v1183
  %v1916 = vpack.c.b16 %v1909, %v1908
  %v1917 = vpack.c.b16 %v1911, %v1910
  %v1918 = vpack.c.b16 %v1913, %v1912
  %v1919 = vpack.c.b16 %v1915, %v1914
  %v1925 = vsel %vm102, %v1895, 0
  %1927 = vmatprep.subr.bf16.mxu0 0
  %1928 = vmatpush1.bf16.msra.mxu0 %v1916
  %1929 = vmatprep.subr.bf16.mxu0 0
  %1930 = vmatpush1.bf16.msra.mxu0 %v1917
  %1931 = vmatprep.subr.bf16.mxu0 0
  %1932 = vmatpush1.bf16.msra.mxu0 %v1918
  %1933 = vmatprep.subr.bf16.mxu0 0
  %1934 = vmatpush1.bf16.msra.mxu0 %v1919
  %1935 = vmatprep.subr.bf16.mxu0 0
  %1936 = vmatpush1.bf16.msra.mxu0 0
  %1937 = vmatprep.subr.bf16.mxu0 0
  %1938 = vmatpush1.bf16.msra.mxu0 0
  %1939 = vmatprep.subr.bf16.mxu0 0
  %1940 = vmatpush1.bf16.msra.mxu0 0
  %1941 = vmatprep.subr.bf16.mxu0 0
  %1942 = vmatpush1.bf16.msra.mxu0 0
  %1943 = vmatprep.subr.bf16.mxu0 0
  %1944 = vmatpush1.bf16.msra.mxu0 0
  %1945 = vmatprep.subr.bf16.mxu0 0
  %1946 = vmatpush1.bf16.msra.mxu0 0
  %1947 = vmatprep.subr.bf16.mxu0 0
  %1948 = vmatpush1.bf16.msra.mxu0 0
  %1949 = vmatprep.subr.bf16.mxu0 0
  %1950 = vmatpush1.bf16.msra.mxu0 0
  %1951 = vmatprep.subr.bf16.mxu0 0
  %1952 = vmatpush1.bf16.msra.mxu0 0
  %1953 = vmatprep.subr.bf16.mxu0 0
  %1954 = vmatpush1.bf16.msra.mxu0 0
  %1955 = vmatprep.subr.bf16.mxu0 0
  %1956 = vmatpush1.bf16.msra.mxu0 0
  %1957 = vmatprep.subr.bf16.mxu0 0
  %1958 = vmatpush1.bf16.msra.mxu0 0
  %1959 = vmatprep.mubr.bf16.mxu0 0
  %1960 = vmatmul.mubr.bf16.gmra.mrb[0].mxu0 %v1925
  %v1961 = vpop.f32.mrb[0].mxu0
  %v1962 = vadd.f32 %v1899, %v1961
  %v1963 = vpop.f32.mrb[0].mxu0
  %v1964 = vpop.f32.mrb[0].mxu0
  %v1965 = vadd.f32 %v1899, %v1964
  %v1966 = vpop.f32.mrb[0].mxu0
  %1967 = vdwg.mxu0
  %v1968 = vadd.f32 %v1162, %v1962
  %v1969 = vadd.f32 %v1163, %v1965
  %v1970 = vsel %vm102, %v1968, 0.0
  %1971 = vadd.xlane.f32.xlu0 %v1970
  %v1972 = vpop.xlane.xlu0 %1971
  %v1973 = vsel %vm102, %v1969, 0.0
  %1974 = vadd.xlane.f32.xlu0 %v1973
  %v1975 = vpop.xlane.xlu0 %1974
  %v1976 = vmul.f32 %v1972, %v109
  %v1977 = vmul.f32 %v1975, %v109
  %v1978 = vsub.f32 %v1968, %v1976
  %v1979 = vsub.f32 %v1969, %v1977
  %v1980 = vmul.f32 %v1978, %v1978
  %v1981 = vmul.f32 %v1979, %v1979
  %v1982 = vsel %vm102, %v1980, 0.0
  %1983 = vadd.xlane.f32.xlu0 %v1982
  %v1984 = vpop.xlane.xlu0 %1983
  %v1985 = vsel %vm102, %v1981, 0.0
  %1986 = vadd.xlane.f32.xlu0 %v1985
  %v1987 = vpop.xlane.xlu0 %1986
  %v1988 = vmul.f32 %v1984, %v109
  %v1989 = vmul.f32 %v1987, %v109
  %v1990 = vadd.f32 %v1988, 1e-05
  %v1991 = vadd.f32 %v1989, 1e-05
  %v1992 = vrsqrt.pop %v1990
  %v1993 = vrsqrt.pop %v1991
  %v1994 = vmul.f32 %v1978, %v1992
  %v1995 = vmul.f32 %v1979, %v1993
  %v1996 = vlaneseq
  %v1997 = vshrl.u32 %v1996, 7
  %v1998 = vsub.s32 2, %v1997
  %v1999 = vrot.slane %v1185, %v1998
  %v2000 = vmul.f32 %v1994, %v1999
  %v2001 = vmul.f32 %v1995, %v1999
  %v2002 = vlaneseq
  %v2003 = vshrl.u32 %v2002, 7
  %v2004 = vsub.s32 3, %v2003
  %v2005 = vrot.slane %v1185, %v2004
  %v2006 = vadd.f32 %v2000, %v2005
  %v2007 = vadd.f32 %v2001, %v2005
  %v2008 = vpack.c.bf16 %v2007, %v2006
  %v2010 = vlaneseq
  %v2011 = vshrl.u32 %v2010, 7
  %v2012 = vsub.s32 0, %v2011
  %v2013 = vrot.slane %v1196, %v2012
  %v2014 = vlaneseq
  %v2015 = vshrl.u32 %v2014, 7
  %v2016 = vsub.s32 1, %v2015
  %v2017 = vrot.slane %v1196, %v2016
  %v2028 = vunpack.c.l.b16 %v1187
  %v2029 = vunpack.c.h.b16 %v1187
  %v2030 = vunpack.c.l.b16 %v1188
  %v2031 = vunpack.c.h.b16 %v1188
  %v2032 = vunpack.c.l.b16 %v1189
  %v2033 = vunpack.c.h.b16 %v1189
  %v2034 = vunpack.c.l.b16 %v1190
  %v2035 = vunpack.c.h.b16 %v1190
  %v2036 = vunpack.c.l.b16 %v1191
  %v2037 = vunpack.c.h.b16 %v1191
  %v2038 = vunpack.c.l.b16 %v1192
  %v2039 = vunpack.c.h.b16 %v1192
  %v2040 = vunpack.c.l.b16 %v1193
  %v2041 = vunpack.c.h.b16 %v1193
  %v2042 = vunpack.c.l.b16 %v1194
  %v2043 = vunpack.c.h.b16 %v1194
  %v2044 = vpack.c.b16 %v2030, %v2028
  %v2045 = vpack.c.b16 %v2031, %v2029
  %v2046 = vpack.c.b16 %v2034, %v2032
  %v2047 = vpack.c.b16 %v2035, %v2033
  %v2048 = vpack.c.b16 %v2038, %v2036
  %v2049 = vpack.c.b16 %v2039, %v2037
  %v2050 = vpack.c.b16 %v2042, %v2040
  %v2051 = vpack.c.b16 %v2043, %v2041
  %v2061 = vsel %vm102, %v2008, 0
  %2063 = vmatprep.subr.bf16.mxu0 %v2045
  %2064 = vmatpush1.bf16.msra.mxu0 %v2044
  %2065 = vmatprep.subr.bf16.mxu0 %v2047
  %2066 = vmatpush1.bf16.msra.mxu0 %v2046
  %2067 = vmatprep.subr.bf16.mxu0 %v2049
  %2068 = vmatpush1.bf16.msra.mxu0 %v2048
  %2069 = vmatprep.subr.bf16.mxu0 %v2051
  %2070 = vmatpush1.bf16.msra.mxu0 %v2050
  %2071 = vmatprep.subr.bf16.mxu0 0
  %2072 = vmatpush1.bf16.msra.mxu0 0
  %2073 = vmatprep.subr.bf16.mxu0 0
  %2074 = vmatpush1.bf16.msra.mxu0 0
  %2075 = vmatprep.subr.bf16.mxu0 0
  %2076 = vmatpush1.bf16.msra.mxu0 0
  %2077 = vmatprep.subr.bf16.mxu0 0
  %2078 = vmatpush1.bf16.msra.mxu0 0
  %2079 = vmatprep.subr.bf16.mxu0 0
  %2080 = vmatpush1.bf16.msra.mxu0 0
  %2081 = vmatprep.subr.bf16.mxu0 0
  %2082 = vmatpush1.bf16.msra.mxu0 0
  %2083 = vmatprep.subr.bf16.mxu0 0
  %2084 = vmatpush1.bf16.msra.mxu0 0
  %2085 = vmatprep.subr.bf16.mxu0 0
  %2086 = vmatpush1.bf16.msra.mxu0 0
  %2087 = vmatprep.subr.bf16.mxu0 0
  %2088 = vmatpush1.bf16.msra.mxu0 0
  %2089 = vmatprep.subr.bf16.mxu0 0
  %2090 = vmatpush1.bf16.msra.mxu0 0
  %2091 = vmatprep.subr.bf16.mxu0 0
  %2092 = vmatpush1.bf16.msra.mxu0 0
  %2093 = vmatprep.subr.bf16.mxu0 0
  %2094 = vmatpush1.bf16.msra.mxu0 0
  %2095 = vmatprep.mubr.bf16.mxu0 0
  %2096 = vmatmul.mubr.bf16.gmra.mrb[0].mxu0 %v2061
  %v2097 = vpop.f32.mrb[0].mxu0
  %v2098 = vadd.f32 %v2013, %v2097
  %v2099 = vpop.f32.mrb[0].mxu0
  %v2100 = vadd.f32 %v2017, %v2099
  %v2101 = vpop.f32.mrb[0].mxu0
  %v2102 = vadd.f32 %v2013, %v2101
  %v2103 = vpop.f32.mrb[0].mxu0
  %v2104 = vadd.f32 %v2017, %v2103
  %2105 = vdwg.mxu0
  %v2106 = vmul.f32 %v2098, 0.5
  %v2107 = vmul.f32 %v2100, 0.5
  %v2108 = vmul.f32 %v2102, 0.5
  %v2109 = vmul.f32 %v2104, 0.5
  %v2110 = vmul.f32 %v2098, 0.044715
  %v2111 = vmul.f32 %v2100, 0.044715
  %v2112 = vmul.f32 %v2102, 0.044715
  %v2113 = vmul.f32 %v2104, 0.044715
  %v2114 = vmul.f32 %v2110, %v2098
  %v2115 = vmul.f32 %v2111, %v2100
  %v2116 = vmul.f32 %v2112, %v2102
  %v2117 = vmul.f32 %v2113, %v2104
  %v2118 = vmul.f32 %v2114, %v2098
  %v2119 = vmul.f32 %v2115, %v2100
  %v2120 = vmul.f32 %v2116, %v2102
  %v2121 = vmul.f32 %v2117, %v2104
  %v2122 = vadd.f32 %v2098, %v2118
  %v2123 = vadd.f32 %v2100, %v2119
  %v2124 = vadd.f32 %v2102, %v2120
  %v2125 = vadd.f32 %v2104, %v2121
  %v2126 = vmul.f32 %v2122, 0.7978846
  %v2127 = vmul.f32 %v2123, 0.7978846
  %v2128 = vmul.f32 %v2124, 0.7978846
  %v2129 = vmul.f32 %v2125, 0.7978846
  %v2130 = vtanh.pop %v2126
  %v2131 = vtanh.pop %v2127
  %v2132 = vtanh.pop %v2128
  %v2133 = vtanh.pop %v2129
  %v2134 = vadd.f32 %v2130, 1.0
  %v2135 = vadd.f32 %v2131, 1.0
  %v2136 = vadd.f32 %v2132, 1.0
  %v2137 = vadd.f32 %v2133, 1.0
  %v2138 = vmul.f32 %v2106, %v2134
  %v2139 = vmul.f32 %v2107, %v2135
  %v2140 = vmul.f32 %v2108, %v2136
  %v2141 = vmul.f32 %v2109, %v2137
  %v2142 = vpack.c.bf16 %v2140, %v2138
  %v2143 = vpack.c.bf16 %v2141, %v2139
  %v2144 = vlaneseq
  %v2145 = vshrl.u32 %v2144, 7
  %v2146 = vsub.s32 5, %v2145
  %v2147 = vrot.slane %v1185, %v2146
  %v2180 = vunpack.c.l.b16 %v1198
  %v2181 = vunpack.c.l.b16 %v1199
  %v2182 = vunpack.c.l.b16 %v1200
  %v2183 = vunpack.c.l.b16 %v1201
  %v2184 = vunpack.c.l.b16 %v1202
  %v2185 = vunpack.c.l.b16 %v1203
  %v2186 = vunpack.c.l.b16 %v1204
  %v2187 = vunpack.c.l.b16 %v1205
  %v2188 = vunpack.c.l.b16 %v1206
  %v2189 = vunpack.c.l.b16 %v1207
  %v2190 = vunpack.c.l.b16 %v1208
  %v2191 = vunpack.c.l.b16 %v1209
  %v2192 = vunpack.c.l.b16 %v1210
  %v2193 = vunpack.c.l.b16 %v1211
  %v2194 = vunpack.c.l.b16 %v1212
  %v2195 = vunpack.c.l.b16 %v1213
  %v2196 = vunpack.c.l.b16 %v1214
  %v2197 = vunpack.c.l.b16 %v1215
  %v2198 = vunpack.c.l.b16 %v1216
  %v2199 = vunpack.c.l.b16 %v1217
  %v2200 = vunpack.c.l.b16 %v1218
  %v2201 = vunpack.c.l.b16 %v1219
  %v2202 = vunpack.c.l.b16 %v1220
  %v2203 = vunpack.c.l.b16 %v1221
  %v2204 = vunpack.c.l.b16 %v1222
  %v2205 = vunpack.c.l.b16 %v1223
  %v2206 = vunpack.c.l.b16 %v1224
  %v2207 = vunpack.c.l.b16 %v1225
  %v2208 = vunpack.c.l.b16 %v1226
  %v2209 = vunpack.c.l.b16 %v1227
  %v2210 = vunpack.c.l.b16 %v1228
  %v2211 = vunpack.c.l.b16 %v1229
  %v2212 = vpack.c.b16 %v2181, %v2180
  %v2213 = vpack.c.b16 %v2183, %v2182
  %v2214 = vpack.c.b16 %v2185, %v2184
  %v2215 = vpack.c.b16 %v2187, %v2186
  %v2216 = vpack.c.b16 %v2189, %v2188
  %v2217 = vpack.c.b16 %v2191, %v2190
  %v2218 = vpack.c.b16 %v2193, %v2192
  %v2219 = vpack.c.b16 %v2195, %v2194
  %v2220 = vpack.c.b16 %v2197, %v2196
  %v2221 = vpack.c.b16 %v2199, %v2198
  %v2222 = vpack.c.b16 %v2201, %v2200
  %v2223 = vpack.c.b16 %v2203, %v2202
  %v2224 = vpack.c.b16 %v2205, %v2204
  %v2225 = vpack.c.b16 %v2207, %v2206
  %v2226 = vpack.c.b16 %v2209, %v2208
  %v2227 = vpack.c.b16 %v2211, %v2210
  %2244 = vmatprep.subr.bf16.mxu0 0
  %2245 = vmatpush1.bf16.msra.mxu0 %v2212
  %2246 = vmatprep.subr.bf16.mxu0 0
  %2247 = vmatpush1.bf16.msra.mxu0 %v2213
  %2248 = vmatprep.subr.bf16.mxu0 0
  %2249 = vmatpush1.bf16.msra.mxu0 %v2214
  %2250 = vmatprep.subr.bf16.mxu0 0
  %2251 = vmatpush1.bf16.msra.mxu0 %v2215
  %2252 = vmatprep.subr.bf16.mxu0 0
  %2253 = vmatpush1.bf16.msra.mxu0 %v2216
  %2254 = vmatprep.subr.bf16.mxu0 0
  %2255 = vmatpush1.bf16.msra.mxu0 %v2217
  %2256 = vmatprep.subr.bf16.mxu0 0
  %2257 = vmatpush1.bf16.msra.mxu0 %v2218
  %2258 = vmatprep.subr.bf16.mxu0 0
  %2259 = vmatpush1.bf16.msra.mxu0 %v2219
  %2260 = vmatprep.subr.bf16.mxu0 0
  %2261 = vmatpush1.bf16.msra.mxu0 %v2220
  %2262 = vmatprep.subr.bf16.mxu0 0
  %2263 = vmatpush1.bf16.msra.mxu0 %v2221
  %2264 = vmatprep.subr.bf16.mxu0 0
  %2265 = vmatpush1.bf16.msra.mxu0 %v2222
  %2266 = vmatprep.subr.bf16.mxu0 0
  %2267 = vmatpush1.bf16.msra.mxu0 %v2223
  %2268 = vmatprep.subr.bf16.mxu0 0
  %2269 = vmatpush1.bf16.msra.mxu0 %v2224
  %2270 = vmatprep.subr.bf16.mxu0 0
  %2271 = vmatpush1.bf16.msra.mxu0 %v2225
  %2272 = vmatprep.subr.bf16.mxu0 0
  %2273 = vmatpush1.bf16.msra.mxu0 %v2226
  %2274 = vmatprep.subr.bf16.mxu0 0
  %2275 = vmatpush1.bf16.msra.mxu0 %v2227
  %2276 = vmatprep.mubr.bf16.mxu0 %v2143
  %2277 = vmatmul.mubr.bf16.gmra.mrb[0].mxu0 %v2142
  %v2278 = vpop.f32.mrb[0].mxu0
  %v2279 = vadd.f32 %v2147, %v2278
  %v2280 = vpop.f32.mrb[0].mxu0
  %v2281 = vpop.f32.mrb[0].mxu0
  %v2282 = vadd.f32 %v2147, %v2281
  %v2283 = vpop.f32.mrb[0].mxu0
  %2284 = vdwg.mxu0
  %v2285 = vadd.f32 %v1968, %v2279
  %v2286 = vadd.f32 %v1969, %v2282
  %v2287 = vld [vmem:[%s9] sm:$0x3]
  %v2288 = vld [vmem:[%s10] sm:$0xf]
  %v2289 = vld [vmem:[%s10 + $0x4] sm:$0xf]
  %v2290 = vld [vmem:[%s10 + $0x8] sm:$0xf]
  %v2291 = vld [vmem:[%s10 + $0xc] sm:$0xf]
  %v2292 = vld [vmem:[%s10 + $0x10] sm:$0xf]
  %v2293 = vld [vmem:[%s10 + $0x14] sm:$0xf]
  %v2294 = vld [vmem:[%s10 + $0x18] sm:$0xf]
  %v2295 = vld [vmem:[%s10 + $0x1c] sm:$0xf]
  %v2296 = vld [vmem:[%s10 + $0x20] sm:$0xf]
  %v2297 = vld [vmem:[%s10 + $0x24] sm:$0xf]
  %v2298 = vld [vmem:[%s10 + $0x28] sm:$0xf]
  %v2299 = vld [vmem:[%s10 + $0x2c] sm:$0xf]
  %v2300 = vld [vmem:[%s10 + $0x30] sm:$0xf]
  %v2301 = vld [vmem:[%s10 + $0x34] sm:$0xf]
  %v2302 = vld [vmem:[%s10 + $0x38] sm:$0xf]
  %v2303 = vld [vmem:[%s10 + $0x3c] sm:$0xf]
  %v2304 = vld [vmem:[%s10 + $0x40] sm:$0xf]
  %v2305 = vld [vmem:[%s10 + $0x44] sm:$0xf]
  %v2306 = vld [vmem:[%s10 + $0x48] sm:$0xf]
  %v2307 = vld [vmem:[%s10 + $0x4c] sm:$0xf]
  %v2308 = vld [vmem:[%s10 + $0x50] sm:$0xf]
  %v2309 = vld [vmem:[%s10 + $0x54] sm:$0xf]
  %v2310 = vld [vmem:[%s10 + $0x58] sm:$0xf]
  %v2311 = vld [vmem:[%s10 + $0x5c] sm:$0xf]
  %v2312 = vld [vmem:[%s10 + $0x60] sm:$0xf]
  %v2313 = vld [vmem:[%s10 + $0x64] sm:$0xf]
  %v2314 = vld [vmem:[%s10 + $0x68] sm:$0xf]
  %v2315 = vld [vmem:[%s10 + $0x6c] sm:$0xf]
  %v2316 = vld [vmem:[%s10 + $0x70] sm:$0xf]
  %v2317 = vld [vmem:[%s10 + $0x74] sm:$0xf]
  %v2318 = vld [vmem:[%s10 + $0x78] sm:$0xf]
  %v2319 = vld [vmem:[%s10 + $0x7c] sm:$0xf]
  %v2320 = vld [vmem:[%s10 + $0x80] sm:$0xf]
  %v2321 = vld [vmem:[%s10 + $0x84] sm:$0xf]
  %v2322 = vld [vmem:[%s10 + $0x88] sm:$0xf]
  %v2323 = vld [vmem:[%s10 + $0x8c] sm:$0xf]
  %v2324 = vld [vmem:[%s10 + $0x90] sm:$0xf]
  %v2325 = vld [vmem:[%s10 + $0x94] sm:$0xf]
  %v2326 = vld [vmem:[%s10 + $0x98] sm:$0xf]
  %v2327 = vld [vmem:[%s10 + $0x9c] sm:$0xf]
  %v2328 = vld [vmem:[%s10 + $0xa0] sm:$0xf]
  %v2329 = vld [vmem:[%s10 + $0xa4] sm:$0xf]
  %v2330 = vld [vmem:[%s10 + $0xa8] sm:$0xf]
  %v2331 = vld [vmem:[%s10 + $0xac] sm:$0xf]
  %v2332 = vld [vmem:[%s10 + $0xb0] sm:$0xf]
  %v2333 = vld [vmem:[%s10 + $0xb4] sm:$0xf]
  %v2334 = vld [vmem:[%s10 + $0xb8] sm:$0xf]
  %v2335 = vld [vmem:[%s10 + $0xbc] sm:$0xf]
  %v2336 = vld [vmem:[%s10 + $0xc0] sm:$0xf]
  %v2337 = vld [vmem:[%s10 + $0xc4] sm:$0xf]
  %v2338 = vld [vmem:[%s10 + $0xc8] sm:$0xf]
  %v2339 = vld [vmem:[%s10 + $0xcc] sm:$0xf]
  %v2340 = vld [vmem:[%s10 + $0xd0] sm:$0xf]
  %v2341 = vld [vmem:[%s10 + $0xd4] sm:$0xf]
  %v2342 = vld [vmem:[%s10 + $0xd8] sm:$0xf]
  %v2343 = vld [vmem:[%s10 + $0xdc] sm:$0xf]
  %v2344 = vld [vmem:[%s10 + $0xe0] sm:$0xf]
  %v2345 = vld [vmem:[%s10 + $0xe4] sm:$0xf]
  %v2346 = vld [vmem:[%s10 + $0xe8] sm:$0xf]
  %v2347 = vld [vmem:[%s10 + $0xec] sm:$0xf]
  %v2348 = vld [vmem:[%s10 + $0xf0] sm:$0xf]
  %v2349 = vld [vmem:[%s10 + $0xf4] sm:$0xf]
  %v2350 = vld [vmem:[%s10 + $0xf8] sm:$0xf]
  %v2351 = vld [vmem:[%s10 + $0xfc] sm:$0xf]
  %v2353 = vrot.slane %v2285, 5
  %v2356 = vrot.slane %v2286, 4
  %vm2358 = vcmask 1040384
  %v2359 = vsel %vm2358, %v2353, %v2356
  %vm2360 = vcmask 517120
  %v2361 = vsel %vm2360, %v2359, 0.0
  %2362 = vadd.xlane.f32.xlu0 %v2361
  %v2363 = vpop.xlane.xlu0 %2362
  %v2364 = vmul.f32 %v2363, %v109
  %v2365 = vsub.f32 %v2359, %v2364
  %v2366 = vmul.f32 %v2365, %v2365
  %v2367 = vsel %vm2360, %v2366, 0.0
  %2368 = vadd.xlane.f32.xlu0 %v2367
  %v2369 = vpop.xlane.xlu0 %2368
  %v2370 = vmul.f32 %v2369, %v109
  %v2371 = vadd.f32 %v2370, 1e-05
  %v2372 = vrsqrt.pop %v2371
  %v2373 = vmul.f32 %v2365, %v2372
  %v2374 = vlaneseq
  %v2375 = vshrl.u32 %v2374, 7
  %v2376 = vsub.s32 0, %v2375
  %v2377 = vrot.slane %v2287, %v2376
  %v2378 = vmul.f32 %v2373, %v2377
  %v2379 = vlaneseq
  %v2380 = vshrl.u32 %v2379, 7
  %v2381 = vsub.s32 1, %v2380
  %v2382 = vrot.slane %v2287, %v2381
  %v2383 = vadd.f32 %v2378, %v2382
  %v2384 = vpack.c.bf16 %v2383, %v2383
  %v2449 = vunpack.c.l.b16 %v2288
  %v2450 = vunpack.c.l.b16 %v2289
  %v2451 = vunpack.c.l.b16 %v2290
  %v2452 = vunpack.c.l.b16 %v2291
  %v2453 = vunpack.c.l.b16 %v2292
  %v2454 = vunpack.c.l.b16 %v2293
  %v2455 = vunpack.c.l.b16 %v2294
  %v2456 = vunpack.c.l.b16 %v2295
  %v2457 = vunpack.c.l.b16 %v2296
  %v2458 = vunpack.c.l.b16 %v2297
  %v2459 = vunpack.c.l.b16 %v2298
  %v2460 = vunpack.c.l.b16 %v2299
  %v2461 = vunpack.c.l.b16 %v2300
  %v2462 = vunpack.c.l.b16 %v2301
  %v2463 = vunpack.c.l.b16 %v2302
  %v2464 = vunpack.c.l.b16 %v2303
  %v2465 = vunpack.c.l.b16 %v2304
  %v2466 = vunpack.c.l.b16 %v2305
  %v2467 = vunpack.c.l.b16 %v2306
  %v2468 = vunpack.c.l.b16 %v2307
  %v2469 = vunpack.c.l.b16 %v2308
  %v2470 = vunpack.c.l.b16 %v2309
  %v2471 = vunpack.c.l.b16 %v2310
  %v2472 = vunpack.c.l.b16 %v2311
  %v2473 = vunpack.c.l.b16 %v2312
  %v2474 = vunpack.c.l.b16 %v2313
  %v2475 = vunpack.c.l.b16 %v2314
  %v2476 = vunpack.c.l.b16 %v2315
  %v2477 = vunpack.c.l.b16 %v2316
  %v2478 = vunpack.c.l.b16 %v2317
  %v2479 = vunpack.c.l.b16 %v2318
  %v2480 = vunpack.c.l.b16 %v2319
  %v2481 = vunpack.c.l.b16 %v2320
  %v2482 = vunpack.c.l.b16 %v2321
  %v2483 = vunpack.c.l.b16 %v2322
  %v2484 = vunpack.c.l.b16 %v2323
  %v2485 = vunpack.c.l.b16 %v2324
  %v2486 = vunpack.c.l.b16 %v2325
  %v2487 = vunpack.c.l.b16 %v2326
  %v2488 = vunpack.c.l.b16 %v2327
  %v2489 = vunpack.c.l.b16 %v2328
  %v2490 = vunpack.c.l.b16 %v2329
  %v2491 = vunpack.c.l.b16 %v2330
  %v2492 = vunpack.c.l.b16 %v2331
  %v2493 = vunpack.c.l.b16 %v2332
  %v2494 = vunpack.c.l.b16 %v2333
  %v2495 = vunpack.c.l.b16 %v2334
  %v2496 = vunpack.c.l.b16 %v2335
  %v2497 = vunpack.c.l.b16 %v2336
  %v2498 = vunpack.c.l.b16 %v2337
  %v2499 = vunpack.c.l.b16 %v2338
  %v2500 = vunpack.c.l.b16 %v2339
  %v2501 = vunpack.c.l.b16 %v2340
  %v2502 = vunpack.c.l.b16 %v2341
  %v2503 = vunpack.c.l.b16 %v2342
  %v2504 = vunpack.c.l.b16 %v2343
  %v2505 = vunpack.c.l.b16 %v2344
  %v2506 = vunpack.c.l.b16 %v2345
  %v2507 = vunpack.c.l.b16 %v2346
  %v2508 = vunpack.c.l.b16 %v2347
  %v2509 = vunpack.c.l.b16 %v2348
  %v2510 = vunpack.c.l.b16 %v2349
  %v2511 = vunpack.c.l.b16 %v2350
  %v2512 = vunpack.c.l.b16 %v2351
  %v2513 = vpack.c.b16 %v2450, %v2449
  %v2514 = vpack.c.b16 %v2452, %v2451
  %v2515 = vpack.c.b16 %v2454, %v2453
  %v2516 = vpack.c.b16 %v2456, %v2455
  %v2517 = vpack.c.b16 %v2458, %v2457
  %v2518 = vpack.c.b16 %v2460, %v2459
  %v2519 = vpack.c.b16 %v2462, %v2461
  %v2520 = vpack.c.b16 %v2464, %v2463
  %v2521 = vpack.c.b16 %v2466, %v2465
  %v2522 = vpack.c.b16 %v2468, %v2467
  %v2523 = vpack.c.b16 %v2470, %v2469
  %v2524 = vpack.c.b16 %v2472, %v2471
  %v2525 = vpack.c.b16 %v2474, %v2473
  %v2526 = vpack.c.b16 %v2476, %v2475
  %v2527 = vpack.c.b16 %v2478, %v2477
  %v2528 = vpack.c.b16 %v2480, %v2479
  %v2529 = vpack.c.b16 %v2482, %v2481
  %v2530 = vpack.c.b16 %v2484, %v2483
  %v2531 = vpack.c.b16 %v2486, %v2485
  %v2532 = vpack.c.b16 %v2488, %v2487
  %v2533 = vpack.c.b16 %v2490, %v2489
  %v2534 = vpack.c.b16 %v2492, %v2491
  %v2535 = vpack.c.b16 %v2494, %v2493
  %v2536 = vpack.c.b16 %v2496, %v2495
  %v2537 = vpack.c.b16 %v2498, %v2497
  %v2538 = vpack.c.b16 %v2500, %v2499
  %v2539 = vpack.c.b16 %v2502, %v2501
  %v2540 = vpack.c.b16 %v2504, %v2503
  %v2541 = vpack.c.b16 %v2506, %v2505
  %v2542 = vpack.c.b16 %v2508, %v2507
  %v2543 = vpack.c.b16 %v2510, %v2509
  %v2544 = vpack.c.b16 %v2512, %v2511
  %v2546 = vsel %vm102, %v2384, 0
  %v2549 = vsel %vm102, %v2513, 0
  %v2552 = vsel %vm102, %v2514, 0
  %v2555 = vsel %vm102, %v2515, 0
  %v2558 = vsel %vm102, %v2516, 0
  %v2561 = vsel %vm102, %v2517, 0
  %v2564 = vsel %vm102, %v2518, 0
  %v2567 = vsel %vm102, %v2519, 0
  %v2570 = vsel %vm102, %v2520, 0
  %v2573 = vsel %vm102, %v2521, 0
  %v2576 = vsel %vm102, %v2522, 0
  %v2579 = vsel %vm102, %v2523, 0
  %v2582 = vsel %vm102, %v2524, 0
  %v2585 = vsel %vm102, %v2525, 0
  %v2588 = vsel %vm102, %v2526, 0
  %v2591 = vsel %vm102, %v2527, 0
  %v2594 = vsel %vm102, %v2528, 0
  %v2597 = vsel %vm102, %v2529, 0
  %v2600 = vsel %vm102, %v2530, 0
  %v2603 = vsel %vm102, %v2531, 0
  %v2606 = vsel %vm102, %v2532, 0
  %v2609 = vsel %vm102, %v2533, 0
  %v2612 = vsel %vm102, %v2534, 0
  %v2615 = vsel %vm102, %v2535, 0
  %v2618 = vsel %vm102, %v2536, 0
  %v2621 = vsel %vm102, %v2537, 0
  %v2624 = vsel %vm102, %v2538, 0
  %v2627 = vsel %vm102, %v2539, 0
  %v2630 = vsel %vm102, %v2540, 0
  %v2633 = vsel %vm102, %v2541, 0
  %v2636 = vsel %vm102, %v2542, 0
  %v2639 = vsel %vm102, %v2543, 0
  %v2642 = vsel %vm102, %v2544, 0
  %2644 = vmatprep.subr.bf16.mxu0 0
  %2645 = vmatpush1.bf16.xpose.msra.mxu0 %v2549
  %2646 = vmatprep.subr.bf16.mxu0 0
  %2647 = vmatpush1.bf16.xpose.msra.mxu0 %v2552
  %2648 = vmatprep.subr.bf16.mxu0 0
  %2649 = vmatpush1.bf16.xpose.msra.mxu0 %v2555
  %2650 = vmatprep.subr.bf16.mxu0 0
  %2651 = vmatpush1.bf16.xpose.msra.mxu0 %v2558
  %2652 = vmatprep.subr.bf16.mxu0 0
  %2653 = vmatpush1.bf16.xpose.msra.mxu0 %v2561
  %2654 = vmatprep.subr.bf16.mxu0 0
  %2655 = vmatpush1.bf16.xpose.msra.mxu0 %v2564
  %2656 = vmatprep.subr.bf16.mxu0 0
  %2657 = vmatpush1.bf16.xpose.msra.mxu0 %v2567
  %2658 = vmatprep.subr.bf16.mxu0 0
  %2659 = vmatpush1.bf16.xpose.msra.mxu0 %v2570
  %2660 = vmatprep.subr.bf16.mxu0 0
  %2661 = vmatpush1.bf16.xpose.msra.mxu0 %v2573
  %2662 = vmatprep.subr.bf16.mxu0 0
  %2663 = vmatpush1.bf16.xpose.msra.mxu0 %v2576
  %2664 = vmatprep.subr.bf16.mxu0 0
  %2665 = vmatpush1.bf16.xpose.msra.mxu0 %v2579
  %2666 = vmatprep.subr.bf16.mxu0 0
  %2667 = vmatpush1.bf16.xpose.msra.mxu0 %v2582
  %2668 = vmatprep.subr.bf16.mxu0 0
  %2669 = vmatpush1.bf16.xpose.msra.mxu0 %v2585
  %2670 = vmatprep.subr.bf16.mxu0 0
  %2671 = vmatpush1.bf16.xpose.msra.mxu0 %v2588
  %2672 = vmatprep.subr.bf16.mxu0 0
  %2673 = vmatpush1.bf16.xpose.msra.mxu0 %v2591
  %2674 = vmatprep.subr.bf16.mxu0 0
  %2675 = vmatpush1.bf16.xpose.msra.mxu0 %v2594
  %2676 = vmatprep.mubr.bf16.mxu0 0
  %2677 = vmatmul.mubr.bf16.gmra.mrb[0].mxu0 %v2546
  %v2678 = vpop.f32.mrb[0].mxu0
  %v2679 = vadd.f32 0.0, %v2678
  %v2680 = vpop.f32.mrb[0].mxu0
  %v2681 = vadd.f32 0.0, %v2680
  %v2682 = vpop.f32.mrb[0].mxu0
  %v2683 = vpop.f32.mrb[0].mxu0
  %2684 = vdwg.mxu0
  %2685 = vmatprep.subr.bf16.mxu0 0
  %2686 = vmatpush1.bf16.xpose.msra.mxu0 %v2597
  %2687 = vmatprep.subr.bf16.mxu0 0
  %2688 = vmatpush1.bf16.xpose.msra.mxu0 %v2600
  %2689 = vmatprep.subr.bf16.mxu0 0
  %2690 = vmatpush1.bf16.xpose.msra.mxu0 %v2603
  %2691 = vmatprep.subr.bf16.mxu0 0
  %2692 = vmatpush1.bf16.xpose.msra.mxu0 %v2606
  %2693 = vmatprep.subr.bf16.mxu0 0
  %2694 = vmatpush1.bf16.xpose.msra.mxu0 %v2609
  %2695 = vmatprep.subr.bf16.mxu0 0
  %2696 = vmatpush1.bf16.xpose.msra.mxu0 %v2612
  %2697 = vmatprep.subr.bf16.mxu0 0
  %2698 = vmatpush1.bf16.xpose.msra.mxu0 %v2615
  %2699 = vmatprep.subr.bf16.mxu0 0
  %2700 = vmatpush1.bf16.xpose.msra.mxu0 %v2618
  %2701 = vmatprep.subr.bf16.mxu0 0
  %2702 = vmatpush1.bf16.xpose.msra.mxu0 %v2621
  %2703 = vmatprep.subr.bf16.mxu0 0
  %2704 = vmatpush1.bf16.xpose.msra.mxu0 %v2624
  %2705 = vmatprep.subr.bf16.mxu0 0
  %2706 = vmatpush1.bf16.xpose.msra.mxu0 %v2627
  %2707 = vmatprep.subr.bf16.mxu0 0
  %2708 = vmatpush1.bf16.xpose.msra.mxu0 %v2630
  %2709 = vmatprep.subr.bf16.mxu0 0
  %2710 = vmatpush1.bf16.xpose.msra.mxu0 %v2633
  %2711 = vmatprep.subr.bf16.mxu0 0
  %2712 = vmatpush1.bf16.xpose.msra.mxu0 %v2636
  %2713 = vmatprep.subr.bf16.mxu0 0
  %2714 = vmatpush1.bf16.xpose.msra.mxu0 %v2639
  %2715 = vmatprep.subr.bf16.mxu0 0
  %2716 = vmatpush1.bf16.xpose.msra.mxu0 %v2642
  %2717 = vmatprep.mubr.bf16.mxu0 0
  %2718 = vmatmul.mubr.bf16.gmra.mrb[0].mxu0 %v2546
  %v2719 = vpop.f32.mrb[0].mxu0
  %v2720 = vadd.f32 0.0, %v2719
  %v2721 = vpop.f32.mrb[0].mxu0
  %v2722 = vadd.f32 0.0, %v2721
  %v2723 = vpop.f32.mrb[0].mxu0
  %v2724 = vpop.f32.mrb[0].mxu0
  %2725 = vdwg.mxu0
  %vm2726 = vcmask 1041408
  %v2727 = vsel %vm2726, %v2679, -inf
  %v2728 = vsel %vm2726, %v2681, -inf
  %v2729 = vsel %vm2726, %v2720, -inf
  %v2730 = vsel %vm2726, %v2722, -inf
  %v2731 = vmax.f32 %v2727, %v2728
  %v2732 = vmax.f32 %v2729, %v2730
  %v2733 = vmax.f32 %v2731, %v2732
  %2734 = vmax.xlane.f32.xlu0 %v2733
  %v2735 = vpop.xlane.xlu0 %2734
  %v2736 = vlaneseq
  %v2737 = vand.u32 %v2736, 127
  %v2738 = vadd.s32 %v2737, 128
  %v2739 = vadd.s32 %v2737, 256
  %v2740 = vadd.s32 %v2737, 384
  %vm2741 = vcmp.eq.f32.partialorder %v2679, %v2735
  %vm2742 = vcmp.eq.f32.partialorder %v2681, %v2735
  %vm2743 = vcmp.eq.f32.partialorder %v2720, %v2735
  %vm2744 = vcmp.eq.f32.partialorder %v2722, %v2735
  %v2745 = vsel %vm2741, %v2737, 2147483647
  %v2746 = vsel %vm2742, %v2738, 2147483647
  %v2747 = vsel %vm2743, %v2739, 2147483647
  %v2748 = vsel %vm2744, %v2740, 2147483647
  %v2749 = vsel %vm2726, %v2745, 2147483647
  %v2750 = vsel %vm2726, %v2746, 2147483647
  %v2751 = vsel %vm2726, %v2747, 2147483647
  %v2752 = vsel %vm2726, %v2748, 2147483647
  %vm2753 = vcmp.lt.s32.totalorder %v2749, %v2750
  %v2754 = vsel %vm2753, %v2749, %v2750
  %vm2755 = vcmp.lt.s32.totalorder %v2751, %v2752
  %v2756 = vsel %vm2755, %v2751, %v2752
  %vm2757 = vcmp.lt.s32.totalorder %v2754, %v2756
  %v2758 = vsel %vm2757, %v2754, %v2756
  %v2759 = vand.u32 %v2758, 65535
  %v2760 = vshra.s32 %v2758, 16
  %v2761 = vcvt.s32.f32 %v2759
  %v2762 = vcvt.s32.f32 %v2760
  %2763 = vmin.xlane.f32.xlu0 %v2762
  %v2764 = vpop.xlane.xlu0 %2763
  %vm2765 = vcmp.eq.f32.partialorder %v2762, %v2764
  %v2766 = vsel %vm2765, %v2761, inf
  %2767 = vmin.xlane.f32.xlu0 %v2766
  %v2768 = vpop.xlane.xlu0 %2767
  %v2769 = vcvt.f32.s32 %v2768
  %v2770 = vcvt.f32.s32 %v2764
  %v2771 = vshll.u32 %v2770, 16
  %v2772 = vadd.s32 %v2771, %v2769
  %vm2773 = vcmask 1024
  %2774 = vst.msk [vmem:[%s11] sm:$0x3] %vm2773, %v2772
  // Predicated region
  $region46: #{tpu_custom_call.1} parent=0 // pred_check
    _
  $region47: #{tpu_custom_call.1} parent=0 // pred_check_branch
    %2776 = sbr.rel (0) target = $region49
  $region48: #{tpu_custom_call.1} parent=0 // pred_region
    _
  $region49: #{tpu_custom_call.1} parent=0 // pred_fallthru
    _
  // Predicated region
  $region50: #{tpu_custom_call.1} parent=0 // pred_check
    _
  $region51: #{tpu_custom_call.1} parent=0 // pred_check_branch
    %2778 = sbr.rel (0) target = $region53
  $region52: #{tpu_custom_call.1} parent=0 // pred_region
    _
  $region53: #{tpu_custom_call.1} parent=0 // pred_fallthru
    _

</llo_original>
